<compile_context>
chip_gen: v6e
topology: v6e:2x2x1
jax: 0.10.0
libtpu: 0.0.40
codegen_flags: <defaults>
</compile_context>

<pallas_src>
import functools

import jax
import jax.numpy as jnp
from jax.experimental import pallas as pl
from jax.experimental.pallas import tpu as pltpu


def _round_up(x, m):
    return (x + m - 1) // m * m


def _pick_time_chunk(seq_len, max_steps=32):
    """Largest divisor of seq_len that is <= max_steps (time steps per grid step)."""
    for d in range(min(seq_len, max_steps), 0, -1):
        if seq_len % d == 0:
            return d
    return 1


# ---------------------------------------------------------------------------
# Fused bidirectional LSTM kernel.
#   grid = (num_time_chunks,)  -- sequential ("arbitrary") recurrence axis.
#   x is flat time-major [S*Bp, Ep]; the forward direction reads chunk c, the
#   backward direction reads chunk (C-1-c) via a reversed index_map.
#   Per chunk: one big input-projection matmul per direction, then a short
#   unrolled loop doing only the recurrent h @ W_hh (block-diag, both dirs).
# ---------------------------------------------------------------------------
def bilstm_kernel(xf_ref, xb_ref, wih_f_ref, wih_b_ref, whh_ref, b_ref,
                  h_out_ref, h_scr, c_scr, xgf_scr, xgb_scr):
    c_idx = pl.program_id(0)

    Bp = h_scr.shape[0]            # padded batch (multiple of 8)
    G4 = wih_f_ref.shape[1]        # 4 * GP  (one direction's padded gates)
    GP = G4 // 4                   # padded gate width (multiple of 128)
    TB = xf_ref.shape[0]           # T_CHUNK * Bp
    T = TB // Bp                   # time steps in this chunk

    @pl.when(c_idx == 0)
    def _():
        h_scr[...] = jnp.zeros_like(h_scr)
        c_scr[...] = jnp.zeros_like(c_scr)

    # Hoisted input projection for the whole chunk (bias folded in):
    #   [T*Bp, Ep] x [Ep, 4*GP]  per direction — instead of T tiny per-step matmuls.
    xgf_scr[...] = (
        jnp.dot(xf_ref[...], wih_f_ref[...], preferred_element_type=jnp.float32)
        + b_ref[:, :G4]
    )
    xgb_scr[...] = (
        jnp.dot(xb_ref[...], wih_b_ref[...], preferred_element_type=jnp.float32)
        + b_ref[:, G4:]
    )

    def step(t, carry):
        h, c = carry                                            # [Bp, 2*GP] each
        # One fused recurrent matmul for BOTH directions (block-diagonal W_hh):
        gh = jnp.dot(h, whh_ref[...], preferred_element_type=jnp.float32)  # [Bp, 8*GP]

        rf = pl.multiple_of(t * Bp, Bp)                # forward: chunk step t
        rb = pl.multiple_of((T - 1 - t) * Bp, Bp)      # backward: reversed in-chunk
        g_f = gh[:, :G4] + xgf_scr[pl.ds(rf, Bp), :]   # [Bp, 4*GP]
        g_b = gh[:, G4:] + xgb_scr[pl.ds(rb, Bp), :]   # [Bp, 4*GP]

        def cell(g, c_dir):
            i = jax.nn.sigmoid(g[:, 0 * GP:1 * GP])
            f = jax.nn.sigmoid(g[:, 1 * GP:2 * GP])
            gg = jnp.tanh(g[:, 2 * GP:3 * GP])
            o = jax.nn.sigmoid(g[:, 3 * GP:4 * GP])
            c_new = f * c_dir + i * gg
            return o * jnp.tanh(c_new), c_new

        h_f, c_f = cell(g_f, c[:, :GP])
        h_b, c_b = cell(g_b, c[:, GP:])
        return (jnp.concatenate([h_f, h_b], axis=-1),
                jnp.concatenate([c_f, c_b], axis=-1))

    h_fin, c_fin = jax.lax.fori_loop(
        0, T, step, (h_scr[...], c_scr[...]), unroll=True)
    h_scr[...] = h_fin
    c_scr[...] = c_fin

    @pl.when(c_idx == pl.num_programs(0) - 1)
    def _():
        h_out_ref[...] = h_fin          # lane-dense [Bp, 2*GP] store, written once


def bilstm_final_hidden(x2d, wih_f_p, wih_b_p, whh_p, b_p, *, batch_pad, time_chunk):
    """x2d: [S*Bp, Ep] flat time-major.  Returns [Bp, 2*GP] = [h_fwd | h_bwd] padded."""
    SB, Ep = x2d.shape
    Bp = batch_pad
    S = SB // Bp
    num_chunks = S // time_chunk
    tb = time_chunk * Bp
    G4 = wih_f_p.shape[1]
    GP2, GP8 = whh_p.shape

    return pl.pallas_call(
        bilstm_kernel,
        out_shape=jax.ShapeDtypeStruct((Bp, GP2), jnp.float32),
        grid_spec=pltpu.PrefetchScalarGridSpec(
            num_scalar_prefetch=0,
            grid=(num_chunks,),
            in_specs=[
                # forward chunk c
                pl.BlockSpec((tb, Ep), lambda c: (c, 0)),
                # backward direction: reversed chunk order (no jnp.flip in HBM)
                pl.BlockSpec((tb, Ep), lambda c: (num_chunks - 1 - c, 0)),
                pl.BlockSpec((Ep, G4), lambda c: (0, 0)),
                pl.BlockSpec((Ep, G4), lambda c: (0, 0)),
                pl.BlockSpec((GP2, GP8), lambda c: (0, 0)),
                pl.BlockSpec((1, GP8), lambda c: (0, 0)),
            ],
            out_specs=pl.BlockSpec((Bp, GP2), lambda c: (0, 0)),
            scratch_shapes=[
                pltpu.VMEM((Bp, GP2), jnp.float32),   # h state  (fwd | bwd)
                pltpu.VMEM((Bp, GP2), jnp.float32),   # c state
                pltpu.VMEM((tb, G4), jnp.float32),    # fwd input gates for chunk
                pltpu.VMEM((tb, G4), jnp.float32),    # bwd input gates for chunk
            ],
        ),
        compiler_params=pltpu.CompilerParams(
            dimension_semantics=("arbitrary",),       # recurrence -> sequential
        ),
    )(x2d, x2d, wih_f_p, wih_b_p, whh_p, b_p)


# ---------------------------------------------------------------------------
# Fully-connected head kernel:
#   ReLU(hidden) -> Linear(->512) -> ReLU -> Linear(->256) -> ReLU
#                -> Linear(->output_size padded to 128 lanes)
# (dropouts are identity in eval mode).  All operands fit in single VMEM blocks.
# ---------------------------------------------------------------------------
def mlp_kernel(x_ref, w1_ref, b1_ref, w2_ref, b2_ref, w3_ref, b3_ref, out_ref):
    x = jnp.maximum(x_ref[...], 0.0)   # ReLU on padded bidirectional hidden
    h1 = jnp.dot(x, w1_ref[...], preferred_element_type=jnp.float32) + b1_ref[...]
    h1 = jnp.maximum(h1, 0.0)
    h2 = jnp.dot(h1, w2_ref[...], preferred_element_type=jnp.float32) + b2_ref[...]
    h2 = jnp.maximum(h2, 0.0)
    out_ref[...] = (
        jnp.dot(h2, w3_ref[...], preferred_element_type=jnp.float32) + b3_ref[...]
    )


def mlp_head(x, w1, b1, w2, b2, w3, b3):
    Bp = x.shape[0]
    op = w3.shape[1]
    full = lambda a: pl.BlockSpec(a.shape, lambda: (0,) * a.ndim)
    return pl.pallas_call(
        mlp_kernel,
        out_shape=jax.ShapeDtypeStruct((Bp, op), jnp.float32),
        in_specs=[full(x), full(w1), full(b1), full(w2), full(b2), full(w3), full(b3)],
        out_specs=pl.BlockSpec((Bp, op), lambda: (0, 0)),
    )(x, w1, b1, w2, b2, w3, b3)


# ---------------------------------------------------------------------------
# Parameter init (PyTorch-convention shapes) + one-time packing into padded,
# tile-aligned kernel operands.
# ---------------------------------------------------------------------------
def init_params(key, *, vocab_size, embedding_dim, hidden_dim, output_size, pad_idx):
    ks = jax.random.split(key, 12)
    u = lambda k, shape, bound: jax.random.uniform(
        k, shape, jnp.float32, minval=-bound, maxval=bound)

    E, H = embedding_dim, hidden_dim
    emb = jax.random.normal(ks[0], (vocab_size, E), jnp.float32)
    emb = emb.at[pad_idx].set(0.0)             # padding_idx row is zero

    kb = 1.0 / float(H) ** 0.5
    return {
        "embedding": emb,
        # forward direction
        "w_ih_f": u(ks[1], (E, 4 * H), kb),
        "w_hh_f": u(ks[2], (H, 4 * H), kb),
        "b_f": u(ks[3], (1, 4 * H), kb),
        # backward direction
        "w_ih_b": u(ks[4], (E, 4 * H), kb),
        "w_hh_b": u(ks[5], (H, 4 * H), kb),
        "b_b": u(ks[6], (1, 4 * H), kb),
        # fully connected head
        "w1": u(ks[7], (2 * H, 512), 1.0 / float(2 * H) ** 0.5),
        "b1": u(ks[8], (1, 512), 1.0 / float(2 * H) ** 0.5),
        "w2": u(ks[9], (512, 256), 1.0 / float(512) ** 0.5),
        "b2": u(ks[10], (1, 256), 1.0 / float(512) ** 0.5),
        "w3": u(ks[11], (256, output_size), 1.0 / float(256) ** 0.5),
        "b3": jnp.zeros((1, output_size), jnp.float32),
    }


def pack_params(params):
    """Pad/fuse logical params once into tile-aligned kernel operands."""
    emb = params["embedding"]
    E = emb.shape[1]
    H = params["w_hh_f"].shape[0]
    out_dim = params["w3"].shape[1]

    Ep = _round_up(E, 128)     # padded embedding width (lanes)
    GP = _round_up(H, 128)     # padded per-gate width (lanes)
    OP = _round_up(out_dim, 128)

    # Embedding padded once -> time-major gather yields lane-padded rows for free.
    emb_p = jnp.zeros((emb.shape[0], Ep), jnp.float32).at[:, :E].set(emb)

    def pack_ih(w):            # [E, 4H] -> [Ep, 4*GP], gate k at columns k*GP..k*GP+H
        out = jnp.zeros((Ep, 4 * GP), jnp.float32)
        for k in range(4):
            out = out.at[:E, k * GP:k * GP + H].set(w[:, k * H:(k + 1) * H])
        return out

    wih_f_p = pack_ih(params["w_ih_f"])
    wih_b_p = pack_ih(params["w_ih_b"])

    # Block-diagonal fused W_hh: rows [0:H] = forward h, rows [GP:GP+H] = backward h.
    whh_p = jnp.zeros((2 * GP, 8 * GP), jnp.float32)
    b_p = jnp.zeros((1, 8 * GP), jnp.float32)
    for k in range(4):
        whh_p = whh_p.at[:H, k * GP:k * GP + H].set(
            params["w_hh_f"][:, k * H:(k + 1) * H])
        whh_p = whh_p.at[GP:GP + H, (4 + k) * GP:(4 + k) * GP + H].set(
            params["w_hh_b"][:, k * H:(k + 1) * H])
        b_p = b_p.at[:, k * GP:k * GP + H].set(params["b_f"][:, k * H:(k + 1) * H])
        b_p = b_p.at[:, (4 + k) * GP:(4 + k) * GP + H].set(
            params["b_b"][:, k * H:(k + 1) * H])

    # FC head: W1 rows remapped to the padded [h_fwd(GP) | h_bwd(GP)] layout,
    # so no concatenate / unpad is needed between kernels.
    w1 = params["w1"]
    w1_p = jnp.zeros((2 * GP, 512), jnp.float32)
    w1_p = w1_p.at[:H, :].set(w1[:H, :])
    w1_p = w1_p.at[GP:GP + H, :].set(w1[H:, :])

    w3_p = jnp.zeros((256, OP), jnp.float32).at[:, :out_dim].set(params["w3"])
    b3_p = jnp.zeros((1, OP), jnp.float32).at[:, :out_dim].set(params["b3"])

    return {
        "emb": emb_p,
        "wih_f": wih_f_p, "wih_b": wih_b_p, "whh": whh_p, "b": b_p,
        "w1": w1_p, "b1": params["b1"],
        "w2": params["w2"], "b2": params["b2"],
        "w3": w3_p, "b3": b3_p,
    }


# ---------------------------------------------------------------------------
# Forward pass (glue in plain JAX, hot paths in Pallas).
# ---------------------------------------------------------------------------
@functools.partial(jax.jit, static_argnames=("output_size",))
def lstm_model_forward(packed, text, *, output_size):
    B, S = text.shape
    Bp = _round_up(B, 8)                               # pad batch to 8 sublanes
    text_p = jnp.pad(text, ((0, Bp - B), (0, 0)))      # padded rows -> token 0

    # Time-major embedding gather straight into flat [S*Bp, Ep]:
    # no [B,S,E] -> [S,B,E] activation transpose, no HBM relayout.
    tokens_tm = text_p.T.reshape(-1)                   # [S*Bp]
    x2d = jnp.take(packed["emb"], tokens_tm, axis=0)   # [S*Bp, Ep]
    # start_dropout is identity in eval mode.

    h = bilstm_final_hidden(
        x2d, packed["wih_f"], packed["wih_b"], packed["whh"], packed["b"],
        batch_pad=Bp, time_chunk=_pick_time_chunk(S))  # [Bp, 2*GP]

    logits_p = mlp_head(
        h, packed["w1"], packed["b1"], packed["w2"], packed["b2"],
        packed["w3"], packed["b3"])                    # [Bp, OP]

    return logits_p[:B, :output_size]


if __name__ == "__main__":
    VOCAB_SIZE = 100
    EMBEDDING_DIM = 32
    HIDDEN_DIM = 32
    OUTPUT_SIZE = 4
    PAD_IDX = 0
    BATCH = 2
    SEQ = 8

    key = jax.random.PRNGKey(0)
    pkey, tkey = jax.random.split(key)
    params = init_params(
        pkey,
        vocab_size=VOCAB_SIZE,
        embedding_dim=EMBEDDING_DIM,
        hidden_dim=HIDDEN_DIM,
        output_size=OUTPUT_SIZE,
        pad_idx=PAD_IDX,
    )
    packed = pack_params(params)
    text = jax.random.randint(tkey, (BATCH, SEQ), 0, VOCAB_SIZE, dtype=jnp.int32)

    out = lstm_model_forward(packed, text, output_size=OUTPUT_SIZE)
    jax.block_until_ready(out)
    assert out.shape == (BATCH, OUTPUT_SIZE)
    print("KERNEL_OK")
</pallas_src>

<mosaic_0001>
module attributes {stable_mosaic.version = 11 : i64} {
  func.func @bilstm_kernel(%arg0: i32, %arg1: memref<64x128xf32, #tpu.memory_space<vmem>>, %arg2: memref<64x128xf32, #tpu.memory_space<vmem>>, %arg3: memref<128x512xf32, #tpu.memory_space<vmem>>, %arg4: memref<128x512xf32, #tpu.memory_space<vmem>>, %arg5: memref<256x1024xf32, #tpu.memory_space<vmem>>, %arg6: memref<1x1024xf32, #tpu.memory_space<vmem>>, %arg7: memref<8x256xf32, #tpu.memory_space<vmem>>, %arg8: memref<8x256xf32, #tpu.memory_space<vmem>>, %arg9: memref<8x256xf32, #tpu.memory_space<vmem>>, %arg10: memref<64x512xf32, #tpu.memory_space<vmem>>, %arg11: memref<64x512xf32, #tpu.memory_space<vmem>>) attributes {dimension_semantics = [#tpu.dimension_semantics<arbitrary>], iteration_bounds = array<i64: 1>, scalar_prefetch = 0 : i64, scratch_operands = 4 : i64, tpu.core_type = #tpu.core_type<tc>, window_params = [{transform_indices = @transform_0, window_bounds = array<i64: 64, 128>}, {transform_indices = @transform_1, window_bounds = array<i64: 64, 128>}, {pipeline_mode = #tpu.pipeline_mode<synchronous>, transform_indices = @transform_2, window_bounds = array<i64: 128, 512>}, {pipeline_mode = #tpu.pipeline_mode<synchronous>, transform_indices = @transform_3, window_bounds = array<i64: 128, 512>}, {pipeline_mode = #tpu.pipeline_mode<synchronous>, transform_indices = @transform_4, window_bounds = array<i64: 256, 1024>}, {pipeline_mode = #tpu.pipeline_mode<synchronous>, transform_indices = @transform_5, window_bounds = array<i64: 1, 1024>}, {pipeline_mode = #tpu.pipeline_mode<synchronous>, transform_indices = @transform_6, window_bounds = array<i64: 8, 256>}]} {
    %c0_i32 = arith.constant 0 : i32
    %0 = arith.cmpi eq, %arg0, %c0_i32 : i32
    %1 = arith.extui %0 : i1 to i32
    %c0_i32_0 = arith.constant 0 : i32
    %2 = arith.cmpi ne, %1, %c0_i32_0 : i32
    scf.if %2 {
      %cst_139 = arith.constant 0.000000e+00 : f32
      %576 = vector.broadcast %cst_139 : f32 to vector<8x256xf32>
      %c0_140 = arith.constant 0 : index
      %c0_141 = arith.constant 0 : index
      %577 = vector.load %arg8[%c0_140, %c0_141] : memref<8x256xf32, #tpu.memory_space<vmem>>, vector<8x256xf32>
      tpu.vector_store %arg8[%c0_140, %c0_141], %576 {strides = array<i32>} : memref<8x256xf32, #tpu.memory_space<vmem>>, vector<8x256xf32>,
      %cst_142 = arith.constant 0.000000e+00 : f32
      %578 = vector.broadcast %cst_142 : f32 to vector<8x256xf32>
      %c0_143 = arith.constant 0 : index
      %c0_144 = arith.constant 0 : index
      %579 = vector.load %arg9[%c0_143, %c0_144] : memref<8x256xf32, #tpu.memory_space<vmem>>, vector<8x256xf32>
      tpu.vector_store %arg9[%c0_143, %c0_144], %578 {strides = array<i32>} : memref<8x256xf32, #tpu.memory_space<vmem>>, vector<8x256xf32>,
    } else {
    }
    %c0 = arith.constant 0 : index
    %c0_1 = arith.constant 0 : index
    %3 = vector.load %arg1[%c0, %c0_1] : memref<64x128xf32, #tpu.memory_space<vmem>>, vector<64x128xf32>
    %c0_2 = arith.constant 0 : index
    %c0_3 = arith.constant 0 : index
    %4 = vector.load %arg3[%c0_2, %c0_3] : memref<128x512xf32, #tpu.memory_space<vmem>>, vector<128x512xf32>
    %cst = arith.constant dense<0.000000e+00> : vector<64x512xf32>
    %5 = tpu.matmul %3, %4, %cst {dimension_numbers = #tpu.dot_dimension_numbers<[1], [0], [0], [1], [0, 0, 1, 1], [], []>} : vector<64x128xf32>, vector<128x512xf32>, vector<64x512xf32> -> vector<64x512xf32>
    %c0_4 = arith.constant 0 : index
    %c0_5 = arith.constant 0 : index
    %6 = vector.load %arg6[%c0_4, %c0_5] : memref<1x1024xf32, #tpu.memory_space<vmem>>, vector<1x512xf32>
    %7 = vector.broadcast %6 : vector<1x512xf32> to vector<64x512xf32>
    %8 = arith.addf %5, %7 : vector<64x512xf32>
    %c0_6 = arith.constant 0 : index
    %c0_7 = arith.constant 0 : index
    %9 = vector.load %arg10[%c0_6, %c0_7] : memref<64x512xf32, #tpu.memory_space<vmem>>, vector<64x512xf32>
    tpu.vector_store %arg10[%c0_6, %c0_7], %8 {strides = array<i32>} : memref<64x512xf32, #tpu.memory_space<vmem>>, vector<64x512xf32>,
    %c0_8 = arith.constant 0 : index
    %c0_9 = arith.constant 0 : index
    %10 = vector.load %arg2[%c0_8, %c0_9] : memref<64x128xf32, #tpu.memory_space<vmem>>, vector<64x128xf32>
    %c0_10 = arith.constant 0 : index
    %c0_11 = arith.constant 0 : index
    %11 = vector.load %arg4[%c0_10, %c0_11] : memref<128x512xf32, #tpu.memory_space<vmem>>, vector<128x512xf32>
    %cst_12 = arith.constant dense<0.000000e+00> : vector<64x512xf32>
    %12 = tpu.matmul %10, %11, %cst_12 {dimension_numbers = #tpu.dot_dimension_numbers<[1], [0], [0], [1], [0, 0, 1, 1], [], []>} : vector<64x128xf32>, vector<128x512xf32>, vector<64x512xf32> -> vector<64x512xf32>
    %c0_13 = arith.constant 0 : index
    %c512 = arith.constant 512 : index
    %13 = vector.load %arg6[%c0_13, %c512] : memref<1x1024xf32, #tpu.memory_space<vmem>>, vector<1x512xf32>
    %14 = vector.broadcast %13 : vector<1x512xf32> to vector<64x512xf32>
    %15 = arith.addf %12, %14 : vector<64x512xf32>
    %c0_14 = arith.constant 0 : index
    %c0_15 = arith.constant 0 : index
    %16 = vector.load %arg11[%c0_14, %c0_15] : memref<64x512xf32, #tpu.memory_space<vmem>>, vector<64x512xf32>
    tpu.vector_store %arg11[%c0_14, %c0_15], %15 {strides = array<i32>} : memref<64x512xf32, #tpu.memory_space<vmem>>, vector<64x512xf32>,
    %c0_16 = arith.constant 0 : index
    %c0_17 = arith.constant 0 : index
    %17 = vector.load %arg8[%c0_16, %c0_17] : memref<8x256xf32, #tpu.memory_space<vmem>>, vector<8x256xf32>
    %c0_18 = arith.constant 0 : index
    %c0_19 = arith.constant 0 : index
    %18 = vector.load %arg9[%c0_18, %c0_19] : memref<8x256xf32, #tpu.memory_space<vmem>>, vector<8x256xf32>
    %c0_i32_20 = arith.constant 0 : i32
    %c0_21 = arith.constant 0 : index
    %c0_22 = arith.constant 0 : index
    %19 = vector.load %arg5[%c0_21, %c0_22] : memref<256x1024xf32, #tpu.memory_space<vmem>>, vector<256x1024xf32>
    %cst_23 = arith.constant dense<0.000000e+00> : vector<8x1024xf32>
    %20 = tpu.matmul %17, %19, %cst_23 {dimension_numbers = #tpu.dot_dimension_numbers<[1], [0], [0], [1], [0, 0, 1, 1], [], []>} : vector<8x256xf32>, vector<256x1024xf32>, vector<8x1024xf32> -> vector<8x1024xf32>
    %c8_i32 = arith.constant 8 : i32
    %21 = arith.muli %c0_i32_20, %c8_i32 : i32
    %22 = tpu.assume_multiple %21, 8 : i32
    %c7_i32 = arith.constant 7 : i32
    %23 = arith.subi %c7_i32, %c0_i32_20 : i32
    %c8_i32_24 = arith.constant 8 : i32
    %24 = arith.muli %23, %c8_i32_24 : i32
    %25 = tpu.assume_multiple %24, 8 : i32
    %26 = vector.extract_strided_slice %20 {offsets = [0, 0], sizes = [8, 512], strides = [1, 1]} : vector<8x1024xf32> to vector<8x512xf32>
    %27 = arith.index_cast %22 : i32 to index
    %c0_25 = arith.constant 0 : index
    %28 = vector.load %arg10[%27, %c0_25] : memref<64x512xf32, #tpu.memory_space<vmem>>, vector<8x512xf32>
    %29 = arith.addf %26, %28 : vector<8x512xf32>
    %30 = vector.extract_strided_slice %20 {offsets = [0, 512], sizes = [8, 512], strides = [1, 1]} : vector<8x1024xf32> to vector<8x512xf32>
    %31 = arith.index_cast %25 : i32 to index
    %c0_26 = arith.constant 0 : index
    %32 = vector.load %arg11[%31, %c0_26] : memref<64x512xf32, #tpu.memory_space<vmem>>, vector<8x512xf32>
    %33 = arith.addf %30, %32 : vector<8x512xf32>
    %34 = vector.extract_strided_slice %18 {offsets = [0, 0], sizes = [8, 128], strides = [1, 1]} : vector<8x256xf32> to vector<8x128xf32>
    %35 = vector.extract_strided_slice %29 {offsets = [0, 0], sizes = [8, 128], strides = [1, 1]} : vector<8x512xf32> to vector<8x128xf32>
    %36 = arith.negf %35 : vector<8x128xf32>
    %37 = math.exp %36 : vector<8x128xf32>
    %cst_27 = arith.constant 1.000000e+00 : f32
    %38 = vector.broadcast %cst_27 : f32 to vector<8x128xf32>
    %39 = arith.addf %38, %37 : vector<8x128xf32>
    %40 = arith.divf %38, %39 : vector<8x128xf32>
    %41 = vector.extract_strided_slice %29 {offsets = [0, 128], sizes = [8, 128], strides = [1, 1]} : vector<8x512xf32> to vector<8x128xf32>
    %42 = arith.negf %41 : vector<8x128xf32>
    %43 = math.exp %42 : vector<8x128xf32>
    %cst_28 = arith.constant 1.000000e+00 : f32
    %44 = vector.broadcast %cst_28 : f32 to vector<8x128xf32>
    %45 = arith.addf %44, %43 : vector<8x128xf32>
    %46 = arith.divf %44, %45 : vector<8x128xf32>
    %47 = vector.extract_strided_slice %29 {offsets = [0, 256], sizes = [8, 128], strides = [1, 1]} : vector<8x512xf32> to vector<8x128xf32>
    %48 = math.tanh %47 : vector<8x128xf32>
    %49 = vector.extract_strided_slice %29 {offsets = [0, 384], sizes = [8, 128], strides = [1, 1]} : vector<8x512xf32> to vector<8x128xf32>
    %50 = arith.negf %49 : vector<8x128xf32>
    %51 = math.exp %50 : vector<8x128xf32>
    %cst_29 = arith.constant 1.000000e+00 : f32
    %52 = vector.broadcast %cst_29 : f32 to vector<8x128xf32>
    %53 = arith.addf %52, %51 : vector<8x128xf32>
    %54 = arith.divf %52, %53 : vector<8x128xf32>
    %55 = arith.mulf %46, %34 : vector<8x128xf32>
    %56 = arith.mulf %40, %48 : vector<8x128xf32>
    %57 = arith.addf %55, %56 : vector<8x128xf32>
    %58 = math.tanh %57 : vector<8x128xf32>
    %59 = arith.mulf %54, %58 : vector<8x128xf32>
    %60 = vector.extract_strided_slice %18 {offsets = [0, 128], sizes = [8, 128], strides = [1, 1]} : vector<8x256xf32> to vector<8x128xf32>
    %61 = vector.extract_strided_slice %33 {offsets = [0, 0], sizes = [8, 128], strides = [1, 1]} : vector<8x512xf32> to vector<8x128xf32>
    %62 = arith.negf %61 : vector<8x128xf32>
    %63 = math.exp %62 : vector<8x128xf32>
    %cst_30 = arith.constant 1.000000e+00 : f32
    %64 = vector.broadcast %cst_30 : f32 to vector<8x128xf32>
    %65 = arith.addf %64, %63 : vector<8x128xf32>
    %66 = arith.divf %64, %65 : vector<8x128xf32>
    %67 = vector.extract_strided_slice %33 {offsets = [0, 128], sizes = [8, 128], strides = [1, 1]} : vector<8x512xf32> to vector<8x128xf32>
    %68 = arith.negf %67 : vector<8x128xf32>
    %69 = math.exp %68 : vector<8x128xf32>
    %cst_31 = arith.constant 1.000000e+00 : f32
    %70 = vector.broadcast %cst_31 : f32 to vector<8x128xf32>
    %71 = arith.addf %70, %69 : vector<8x128xf32>
    %72 = arith.divf %70, %71 : vector<8x128xf32>
    %73 = vector.extract_strided_slice %33 {offsets = [0, 256], sizes = [8, 128], strides = [1, 1]} : vector<8x512xf32> to vector<8x128xf32>
    %74 = math.tanh %73 : vector<8x128xf32>
    %75 = vector.extract_strided_slice %33 {offsets = [0, 384], sizes = [8, 128], strides = [1, 1]} : vector<8x512xf32> to vector<8x128xf32>
    %76 = arith.negf %75 : vector<8x128xf32>
    %77 = math.exp %76 : vector<8x128xf32>
    %cst_32 = arith.constant 1.000000e+00 : f32
    %78 = vector.broadcast %cst_32 : f32 to vector<8x128xf32>
    %79 = arith.addf %78, %77 : vector<8x128xf32>
    %80 = arith.divf %78, %79 : vector<8x128xf32>
    %81 = arith.mulf %72, %60 : vector<8x128xf32>
    %82 = arith.mulf %66, %74 : vector<8x128xf32>
    %83 = arith.addf %81, %82 : vector<8x128xf32>
    %84 = math.tanh %83 : vector<8x128xf32>
    %85 = arith.mulf %80, %84 : vector<8x128xf32>
    %86 = tpu.concatenate %59, %85 in 1 : vector<8x128xf32>, vector<8x128xf32> -> vector<8x256xf32>
    %87 = tpu.concatenate %57, %83 in 1 : vector<8x128xf32>, vector<8x128xf32> -> vector<8x256xf32>
    %c1_i32 = arith.constant 1 : i32
    %c0_33 = arith.constant 0 : index
    %c0_34 = arith.constant 0 : index
    %88 = vector.load %arg5[%c0_33, %c0_34] : memref<256x1024xf32, #tpu.memory_space<vmem>>, vector<256x1024xf32>
    %cst_35 = arith.constant dense<0.000000e+00> : vector<8x1024xf32>
    %89 = tpu.matmul %86, %88, %cst_35 {dimension_numbers = #tpu.dot_dimension_numbers<[1], [0], [0], [1], [0, 0, 1, 1], [], []>} : vector<8x256xf32>, vector<256x1024xf32>, vector<8x1024xf32> -> vector<8x1024xf32>
    %c8_i32_36 = arith.constant 8 : i32
    %90 = arith.muli %c1_i32, %c8_i32_36 : i32
    %91 = tpu.assume_multiple %90, 8 : i32
    %c7_i32_37 = arith.constant 7 : i32
    %92 = arith.subi %c7_i32_37, %c1_i32 : i32
    %c8_i32_38 = arith.constant 8 : i32
    %93 = arith.muli %92, %c8_i32_38 : i32
    %94 = tpu.assume_multiple %93, 8 : i32
    %95 = vector.extract_strided_slice %89 {offsets = [0, 0], sizes = [8, 512], strides = [1, 1]} : vector<8x1024xf32> to vector<8x512xf32>
    %96 = arith.index_cast %91 : i32 to index
    %c0_39 = arith.constant 0 : index
    %97 = vector.load %arg10[%96, %c0_39] : memref<64x512xf32, #tpu.memory_space<vmem>>, vector<8x512xf32>
    %98 = arith.addf %95, %97 : vector<8x512xf32>
    %99 = vector.extract_strided_slice %89 {offsets = [0, 512], sizes = [8, 512], strides = [1, 1]} : vector<8x1024xf32> to vector<8x512xf32>
    %100 = arith.index_cast %94 : i32 to index
    %c0_40 = arith.constant 0 : index
    %101 = vector.load %arg11[%100, %c0_40] : memref<64x512xf32, #tpu.memory_space<vmem>>, vector<8x512xf32>
    %102 = arith.addf %99, %101 : vector<8x512xf32>
    %103 = vector.extract_strided_slice %87 {offsets = [0, 0], sizes = [8, 128], strides = [1, 1]} : vector<8x256xf32> to vector<8x128xf32>
    %104 = vector.extract_strided_slice %98 {offsets = [0, 0], sizes = [8, 128], strides = [1, 1]} : vector<8x512xf32> to vector<8x128xf32>
    %105 = arith.negf %104 : vector<8x128xf32>
    %106 = math.exp %105 : vector<8x128xf32>
    %cst_41 = arith.constant 1.000000e+00 : f32
    %107 = vector.broadcast %cst_41 : f32 to vector<8x128xf32>
    %108 = arith.addf %107, %106 : vector<8x128xf32>
    %109 = arith.divf %107, %108 : vector<8x128xf32>
    %110 = vector.extract_strided_slice %98 {offsets = [0, 128], sizes = [8, 128], strides = [1, 1]} : vector<8x512xf32> to vector<8x128xf32>
    %111 = arith.negf %110 : vector<8x128xf32>
    %112 = math.exp %111 : vector<8x128xf32>
    %cst_42 = arith.constant 1.000000e+00 : f32
    %113 = vector.broadcast %cst_42 : f32 to vector<8x128xf32>
    %114 = arith.addf %113, %112 : vector<8x128xf32>
    %115 = arith.divf %113, %114 : vector<8x128xf32>
    %116 = vector.extract_strided_slice %98 {offsets = [0, 256], sizes = [8, 128], strides = [1, 1]} : vector<8x512xf32> to vector<8x128xf32>
    %117 = math.tanh %116 : vector<8x128xf32>
    %118 = vector.extract_strided_slice %98 {offsets = [0, 384], sizes = [8, 128], strides = [1, 1]} : vector<8x512xf32> to vector<8x128xf32>
    %119 = arith.negf %118 : vector<8x128xf32>
    %120 = math.exp %119 : vector<8x128xf32>
    %cst_43 = arith.constant 1.000000e+00 : f32
    %121 = vector.broadcast %cst_43 : f32 to vector<8x128xf32>
    %122 = arith.addf %121, %120 : vector<8x128xf32>
    %123 = arith.divf %121, %122 : vector<8x128xf32>
    %124 = arith.mulf %115, %103 : vector<8x128xf32>
    %125 = arith.mulf %109, %117 : vector<8x128xf32>
    %126 = arith.addf %124, %125 : vector<8x128xf32>
    %127 = math.tanh %126 : vector<8x128xf32>
    %128 = arith.mulf %123, %127 : vector<8x128xf32>
    %129 = vector.extract_strided_slice %87 {offsets = [0, 128], sizes = [8, 128], strides = [1, 1]} : vector<8x256xf32> to vector<8x128xf32>
    %130 = vector.extract_strided_slice %102 {offsets = [0, 0], sizes = [8, 128], strides = [1, 1]} : vector<8x512xf32> to vector<8x128xf32>
    %131 = arith.negf %130 : vector<8x128xf32>
    %132 = math.exp %131 : vector<8x128xf32>
    %cst_44 = arith.constant 1.000000e+00 : f32
    %133 = vector.broadcast %cst_44 : f32 to vector<8x128xf32>
    %134 = arith.addf %133, %132 : vector<8x128xf32>
    %135 = arith.divf %133, %134 : vector<8x128xf32>
    %136 = vector.extract_strided_slice %102 {offsets = [0, 128], sizes = [8, 128], strides = [1, 1]} : vector<8x512xf32> to vector<8x128xf32>
    %137 = arith.negf %136 : vector<8x128xf32>
    %138 = math.exp %137 : vector<8x128xf32>
    %cst_45 = arith.constant 1.000000e+00 : f32
    %139 = vector.broadcast %cst_45 : f32 to vector<8x128xf32>
    %140 = arith.addf %139, %138 : vector<8x128xf32>
    %141 = arith.divf %139, %140 : vector<8x128xf32>
    %142 = vector.extract_strided_slice %102 {offsets = [0, 256], sizes = [8, 128], strides = [1, 1]} : vector<8x512xf32> to vector<8x128xf32>
    %143 = math.tanh %142 : vector<8x128xf32>
    %144 = vector.extract_strided_slice %102 {offsets = [0, 384], sizes = [8, 128], strides = [1, 1]} : vector<8x512xf32> to vector<8x128xf32>
    %145 = arith.negf %144 : vector<8x128xf32>
    %146 = math.exp %145 : vector<8x128xf32>
    %cst_46 = arith.constant 1.000000e+00 : f32
    %147 = vector.broadcast %cst_46 : f32 to vector<8x128xf32>
    %148 = arith.addf %147, %146 : vector<8x128xf32>
    %149 = arith.divf %147, %148 : vector<8x128xf32>
    %150 = arith.mulf %141, %129 : vector<8x128xf32>
    %151 = arith.mulf %135, %143 : vector<8x128xf32>
    %152 = arith.addf %150, %151 : vector<8x128xf32>
    %153 = math.tanh %152 : vector<8x128xf32>
    %154 = arith.mulf %149, %153 : vector<8x128xf32>
    %155 = tpu.concatenate %128, %154 in 1 : vector<8x128xf32>, vector<8x128xf32> -> vector<8x256xf32>
    %156 = tpu.concatenate %126, %152 in 1 : vector<8x128xf32>, vector<8x128xf32> -> vector<8x256xf32>
    %c2_i32 = arith.constant 2 : i32
    %c0_47 = arith.constant 0 : index
    %c0_48 = arith.constant 0 : index
    %157 = vector.load %arg5[%c0_47, %c0_48] : memref<256x1024xf32, #tpu.memory_space<vmem>>, vector<256x1024xf32>
    %cst_49 = arith.constant dense<0.000000e+00> : vector<8x1024xf32>
    %158 = tpu.matmul %155, %157, %cst_49 {dimension_numbers = #tpu.dot_dimension_numbers<[1], [0], [0], [1], [0, 0, 1, 1], [], []>} : vector<8x256xf32>, vector<256x1024xf32>, vector<8x1024xf32> -> vector<8x1024xf32>
    %c8_i32_50 = arith.constant 8 : i32
    %159 = arith.muli %c2_i32, %c8_i32_50 : i32
    %160 = tpu.assume_multiple %159, 8 : i32
    %c7_i32_51 = arith.constant 7 : i32
    %161 = arith.subi %c7_i32_51, %c2_i32 : i32
    %c8_i32_52 = arith.constant 8 : i32
    %162 = arith.muli %161, %c8_i32_52 : i32
    %163 = tpu.assume_multiple %162, 8 : i32
    %164 = vector.extract_strided_slice %158 {offsets = [0, 0], sizes = [8, 512], strides = [1, 1]} : vector<8x1024xf32> to vector<8x512xf32>
    %165 = arith.index_cast %160 : i32 to index
    %c0_53 = arith.constant 0 : index
    %166 = vector.load %arg10[%165, %c0_53] : memref<64x512xf32, #tpu.memory_space<vmem>>, vector<8x512xf32>
    %167 = arith.addf %164, %166 : vector<8x512xf32>
    %168 = vector.extract_strided_slice %158 {offsets = [0, 512], sizes = [8, 512], strides = [1, 1]} : vector<8x1024xf32> to vector<8x512xf32>
    %169 = arith.index_cast %163 : i32 to index
    %c0_54 = arith.constant 0 : index
    %170 = vector.load %arg11[%169, %c0_54] : memref<64x512xf32, #tpu.memory_space<vmem>>, vector<8x512xf32>
    %171 = arith.addf %168, %170 : vector<8x512xf32>
    %172 = vector.extract_strided_slice %156 {offsets = [0, 0], sizes = [8, 128], strides = [1, 1]} : vector<8x256xf32> to vector<8x128xf32>
    %173 = vector.extract_strided_slice %167 {offsets = [0, 0], sizes = [8, 128], strides = [1, 1]} : vector<8x512xf32> to vector<8x128xf32>
    %174 = arith.negf %173 : vector<8x128xf32>
    %175 = math.exp %174 : vector<8x128xf32>
    %cst_55 = arith.constant 1.000000e+00 : f32
    %176 = vector.broadcast %cst_55 : f32 to vector<8x128xf32>
    %177 = arith.addf %176, %175 : vector<8x128xf32>
    %178 = arith.divf %176, %177 : vector<8x128xf32>
    %179 = vector.extract_strided_slice %167 {offsets = [0, 128], sizes = [8, 128], strides = [1, 1]} : vector<8x512xf32> to vector<8x128xf32>
    %180 = arith.negf %179 : vector<8x128xf32>
    %181 = math.exp %180 : vector<8x128xf32>
    %cst_56 = arith.constant 1.000000e+00 : f32
    %182 = vector.broadcast %cst_56 : f32 to vector<8x128xf32>
    %183 = arith.addf %182, %181 : vector<8x128xf32>
    %184 = arith.divf %182, %183 : vector<8x128xf32>
    %185 = vector.extract_strided_slice %167 {offsets = [0, 256], sizes = [8, 128], strides = [1, 1]} : vector<8x512xf32> to vector<8x128xf32>
    %186 = math.tanh %185 : vector<8x128xf32>
    %187 = vector.extract_strided_slice %167 {offsets = [0, 384], sizes = [8, 128], strides = [1, 1]} : vector<8x512xf32> to vector<8x128xf32>
    %188 = arith.negf %187 : vector<8x128xf32>
    %189 = math.exp %188 : vector<8x128xf32>
    %cst_57 = arith.constant 1.000000e+00 : f32
    %190 = vector.broadcast %cst_57 : f32 to vector<8x128xf32>
    %191 = arith.addf %190, %189 : vector<8x128xf32>
    %192 = arith.divf %190, %191 : vector<8x128xf32>
    %193 = arith.mulf %184, %172 : vector<8x128xf32>
    %194 = arith.mulf %178, %186 : vector<8x128xf32>
    %195 = arith.addf %193, %194 : vector<8x128xf32>
    %196 = math.tanh %195 : vector<8x128xf32>
    %197 = arith.mulf %192, %196 : vector<8x128xf32>
    %198 = vector.extract_strided_slice %156 {offsets = [0, 128], sizes = [8, 128], strides = [1, 1]} : vector<8x256xf32> to vector<8x128xf32>
    %199 = vector.extract_strided_slice %171 {offsets = [0, 0], sizes = [8, 128], strides = [1, 1]} : vector<8x512xf32> to vector<8x128xf32>
    %200 = arith.negf %199 : vector<8x128xf32>
    %201 = math.exp %200 : vector<8x128xf32>
    %cst_58 = arith.constant 1.000000e+00 : f32
    %202 = vector.broadcast %cst_58 : f32 to vector<8x128xf32>
    %203 = arith.addf %202, %201 : vector<8x128xf32>
    %204 = arith.divf %202, %203 : vector<8x128xf32>
    %205 = vector.extract_strided_slice %171 {offsets = [0, 128], sizes = [8, 128], strides = [1, 1]} : vector<8x512xf32> to vector<8x128xf32>
    %206 = arith.negf %205 : vector<8x128xf32>
    %207 = math.exp %206 : vector<8x128xf32>
    %cst_59 = arith.constant 1.000000e+00 : f32
    %208 = vector.broadcast %cst_59 : f32 to vector<8x128xf32>
    %209 = arith.addf %208, %207 : vector<8x128xf32>
    %210 = arith.divf %208, %209 : vector<8x128xf32>
    %211 = vector.extract_strided_slice %171 {offsets = [0, 256], sizes = [8, 128], strides = [1, 1]} : vector<8x512xf32> to vector<8x128xf32>
    %212 = math.tanh %211 : vector<8x128xf32>
    %213 = vector.extract_strided_slice %171 {offsets = [0, 384], sizes = [8, 128], strides = [1, 1]} : vector<8x512xf32> to vector<8x128xf32>
    %214 = arith.negf %213 : vector<8x128xf32>
    %215 = math.exp %214 : vector<8x128xf32>
    %cst_60 = arith.constant 1.000000e+00 : f32
    %216 = vector.broadcast %cst_60 : f32 to vector<8x128xf32>
    %217 = arith.addf %216, %215 : vector<8x128xf32>
    %218 = arith.divf %216, %217 : vector<8x128xf32>
    %219 = arith.mulf %210, %198 : vector<8x128xf32>
    %220 = arith.mulf %204, %212 : vector<8x128xf32>
    %221 = arith.addf %219, %220 : vector<8x128xf32>
    %222 = math.tanh %221 : vector<8x128xf32>
    %223 = arith.mulf %218, %222 : vector<8x128xf32>
    %224 = tpu.concatenate %197, %223 in 1 : vector<8x128xf32>, vector<8x128xf32> -> vector<8x256xf32>
    %225 = tpu.concatenate %195, %221 in 1 : vector<8x128xf32>, vector<8x128xf32> -> vector<8x256xf32>
    %c3_i32 = arith.constant 3 : i32
    %c0_61 = arith.constant 0 : index
    %c0_62 = arith.constant 0 : index
    %226 = vector.load %arg5[%c0_61, %c0_62] : memref<256x1024xf32, #tpu.memory_space<vmem>>, vector<256x1024xf32>
    %cst_63 = arith.constant dense<0.000000e+00> : vector<8x1024xf32>
    %227 = tpu.matmul %224, %226, %cst_63 {dimension_numbers = #tpu.dot_dimension_numbers<[1], [0], [0], [1], [0, 0, 1, 1], [], []>} : vector<8x256xf32>, vector<256x1024xf32>, vector<8x1024xf32> -> vector<8x1024xf32>
    %c8_i32_64 = arith.constant 8 : i32
    %228 = arith.muli %c3_i32, %c8_i32_64 : i32
    %229 = tpu.assume_multiple %228, 8 : i32
    %c7_i32_65 = arith.constant 7 : i32
    %230 = arith.subi %c7_i32_65, %c3_i32 : i32
    %c8_i32_66 = arith.constant 8 : i32
    %231 = arith.muli %230, %c8_i32_66 : i32
    %232 = tpu.assume_multiple %231, 8 : i32
    %233 = vector.extract_strided_slice %227 {offsets = [0, 0], sizes = [8, 512], strides = [1, 1]} : vector<8x1024xf32> to vector<8x512xf32>
    %234 = arith.index_cast %229 : i32 to index
    %c0_67 = arith.constant 0 : index
    %235 = vector.load %arg10[%234, %c0_67] : memref<64x512xf32, #tpu.memory_space<vmem>>, vector<8x512xf32>
    %236 = arith.addf %233, %235 : vector<8x512xf32>
    %237 = vector.extract_strided_slice %227 {offsets = [0, 512], sizes = [8, 512], strides = [1, 1]} : vector<8x1024xf32> to vector<8x512xf32>
    %238 = arith.index_cast %232 : i32 to index
    %c0_68 = arith.constant 0 : index
    %239 = vector.load %arg11[%238, %c0_68] : memref<64x512xf32, #tpu.memory_space<vmem>>, vector<8x512xf32>
    %240 = arith.addf %237, %239 : vector<8x512xf32>
    %241 = vector.extract_strided_slice %225 {offsets = [0, 0], sizes = [8, 128], strides = [1, 1]} : vector<8x256xf32> to vector<8x128xf32>
    %242 = vector.extract_strided_slice %236 {offsets = [0, 0], sizes = [8, 128], strides = [1, 1]} : vector<8x512xf32> to vector<8x128xf32>
    %243 = arith.negf %242 : vector<8x128xf32>
    %244 = math.exp %243 : vector<8x128xf32>
    %cst_69 = arith.constant 1.000000e+00 : f32
    %245 = vector.broadcast %cst_69 : f32 to vector<8x128xf32>
    %246 = arith.addf %245, %244 : vector<8x128xf32>
    %247 = arith.divf %245, %246 : vector<8x128xf32>
    %248 = vector.extract_strided_slice %236 {offsets = [0, 128], sizes = [8, 128], strides = [1, 1]} : vector<8x512xf32> to vector<8x128xf32>
    %249 = arith.negf %248 : vector<8x128xf32>
    %250 = math.exp %249 : vector<8x128xf32>
    %cst_70 = arith.constant 1.000000e+00 : f32
    %251 = vector.broadcast %cst_70 : f32 to vector<8x128xf32>
    %252 = arith.addf %251, %250 : vector<8x128xf32>
    %253 = arith.divf %251, %252 : vector<8x128xf32>
    %254 = vector.extract_strided_slice %236 {offsets = [0, 256], sizes = [8, 128], strides = [1, 1]} : vector<8x512xf32> to vector<8x128xf32>
    %255 = math.tanh %254 : vector<8x128xf32>
    %256 = vector.extract_strided_slice %236 {offsets = [0, 384], sizes = [8, 128], strides = [1, 1]} : vector<8x512xf32> to vector<8x128xf32>
    %257 = arith.negf %256 : vector<8x128xf32>
    %258 = math.exp %257 : vector<8x128xf32>
    %cst_71 = arith.constant 1.000000e+00 : f32
    %259 = vector.broadcast %cst_71 : f32 to vector<8x128xf32>
    %260 = arith.addf %259, %258 : vector<8x128xf32>
    %261 = arith.divf %259, %260 : vector<8x128xf32>
    %262 = arith.mulf %253, %241 : vector<8x128xf32>
    %263 = arith.mulf %247, %255 : vector<8x128xf32>
    %264 = arith.addf %262, %263 : vector<8x128xf32>
    %265 = math.tanh %264 : vector<8x128xf32>
    %266 = arith.mulf %261, %265 : vector<8x128xf32>
    %267 = vector.extract_strided_slice %225 {offsets = [0, 128], sizes = [8, 128], strides = [1, 1]} : vector<8x256xf32> to vector<8x128xf32>
    %268 = vector.extract_strided_slice %240 {offsets = [0, 0], sizes = [8, 128], strides = [1, 1]} : vector<8x512xf32> to vector<8x128xf32>
    %269 = arith.negf %268 : vector<8x128xf32>
    %270 = math.exp %269 : vector<8x128xf32>
    %cst_72 = arith.constant 1.000000e+00 : f32
    %271 = vector.broadcast %cst_72 : f32 to vector<8x128xf32>
    %272 = arith.addf %271, %270 : vector<8x128xf32>
    %273 = arith.divf %271, %272 : vector<8x128xf32>
    %274 = vector.extract_strided_slice %240 {offsets = [0, 128], sizes = [8, 128], strides = [1, 1]} : vector<8x512xf32> to vector<8x128xf32>
    %275 = arith.negf %274 : vector<8x128xf32>
    %276 = math.exp %275 : vector<8x128xf32>
    %cst_73 = arith.constant 1.000000e+00 : f32
    %277 = vector.broadcast %cst_73 : f32 to vector<8x128xf32>
    %278 = arith.addf %277, %276 : vector<8x128xf32>
    %279 = arith.divf %277, %278 : vector<8x128xf32>
    %280 = vector.extract_strided_slice %240 {offsets = [0, 256], sizes = [8, 128], strides = [1, 1]} : vector<8x512xf32> to vector<8x128xf32>
    %281 = math.tanh %280 : vector<8x128xf32>
    %282 = vector.extract_strided_slice %240 {offsets = [0, 384], sizes = [8, 128], strides = [1, 1]} : vector<8x512xf32> to vector<8x128xf32>
    %283 = arith.negf %282 : vector<8x128xf32>
    %284 = math.exp %283 : vector<8x128xf32>
    %cst_74 = arith.constant 1.000000e+00 : f32
    %285 = vector.broadcast %cst_74 : f32 to vector<8x128xf32>
    %286 = arith.addf %285, %284 : vector<8x128xf32>
    %287 = arith.divf %285, %286 : vector<8x128xf32>
    %288 = arith.mulf %279, %267 : vector<8x128xf32>
    %289 = arith.mulf %273, %281 : vector<8x128xf32>
    %290 = arith.addf %288, %289 : vector<8x128xf32>
    %291 = math.tanh %290 : vector<8x128xf32>
    %292 = arith.mulf %287, %291 : vector<8x128xf32>
    %293 = tpu.concatenate %266, %292 in 1 : vector<8x128xf32>, vector<8x128xf32> -> vector<8x256xf32>
    %294 = tpu.concatenate %264, %290 in 1 : vector<8x128xf32>, vector<8x128xf32> -> vector<8x256xf32>
    %c4_i32 = arith.constant 4 : i32
    %c0_75 = arith.constant 0 : index
    %c0_76 = arith.constant 0 : index
    %295 = vector.load %arg5[%c0_75, %c0_76] : memref<256x1024xf32, #tpu.memory_space<vmem>>, vector<256x1024xf32>
    %cst_77 = arith.constant dense<0.000000e+00> : vector<8x1024xf32>
    %296 = tpu.matmul %293, %295, %cst_77 {dimension_numbers = #tpu.dot_dimension_numbers<[1], [0], [0], [1], [0, 0, 1, 1], [], []>} : vector<8x256xf32>, vector<256x1024xf32>, vector<8x1024xf32> -> vector<8x1024xf32>
    %c8_i32_78 = arith.constant 8 : i32
    %297 = arith.muli %c4_i32, %c8_i32_78 : i32
    %298 = tpu.assume_multiple %297, 8 : i32
    %c7_i32_79 = arith.constant 7 : i32
    %299 = arith.subi %c7_i32_79, %c4_i32 : i32
    %c8_i32_80 = arith.constant 8 : i32
    %300 = arith.muli %299, %c8_i32_80 : i32
    %301 = tpu.assume_multiple %300, 8 : i32
    %302 = vector.extract_strided_slice %296 {offsets = [0, 0], sizes = [8, 512], strides = [1, 1]} : vector<8x1024xf32> to vector<8x512xf32>
    %303 = arith.index_cast %298 : i32 to index
    %c0_81 = arith.constant 0 : index
    %304 = vector.load %arg10[%303, %c0_81] : memref<64x512xf32, #tpu.memory_space<vmem>>, vector<8x512xf32>
    %305 = arith.addf %302, %304 : vector<8x512xf32>
    %306 = vector.extract_strided_slice %296 {offsets = [0, 512], sizes = [8, 512], strides = [1, 1]} : vector<8x1024xf32> to vector<8x512xf32>
    %307 = arith.index_cast %301 : i32 to index
    %c0_82 = arith.constant 0 : index
    %308 = vector.load %arg11[%307, %c0_82] : memref<64x512xf32, #tpu.memory_space<vmem>>, vector<8x512xf32>
    %309 = arith.addf %306, %308 : vector<8x512xf32>
    %310 = vector.extract_strided_slice %294 {offsets = [0, 0], sizes = [8, 128], strides = [1, 1]} : vector<8x256xf32> to vector<8x128xf32>
    %311 = vector.extract_strided_slice %305 {offsets = [0, 0], sizes = [8, 128], strides = [1, 1]} : vector<8x512xf32> to vector<8x128xf32>
    %312 = arith.negf %311 : vector<8x128xf32>
    %313 = math.exp %312 : vector<8x128xf32>
    %cst_83 = arith.constant 1.000000e+00 : f32
    %314 = vector.broadcast %cst_83 : f32 to vector<8x128xf32>
    %315 = arith.addf %314, %313 : vector<8x128xf32>
    %316 = arith.divf %314, %315 : vector<8x128xf32>
    %317 = vector.extract_strided_slice %305 {offsets = [0, 128], sizes = [8, 128], strides = [1, 1]} : vector<8x512xf32> to vector<8x128xf32>
    %318 = arith.negf %317 : vector<8x128xf32>
    %319 = math.exp %318 : vector<8x128xf32>
    %cst_84 = arith.constant 1.000000e+00 : f32
    %320 = vector.broadcast %cst_84 : f32 to vector<8x128xf32>
    %321 = arith.addf %320, %319 : vector<8x128xf32>
    %322 = arith.divf %320, %321 : vector<8x128xf32>
    %323 = vector.extract_strided_slice %305 {offsets = [0, 256], sizes = [8, 128], strides = [1, 1]} : vector<8x512xf32> to vector<8x128xf32>
    %324 = math.tanh %323 : vector<8x128xf32>
    %325 = vector.extract_strided_slice %305 {offsets = [0, 384], sizes = [8, 128], strides = [1, 1]} : vector<8x512xf32> to vector<8x128xf32>
    %326 = arith.negf %325 : vector<8x128xf32>
    %327 = math.exp %326 : vector<8x128xf32>
    %cst_85 = arith.constant 1.000000e+00 : f32
    %328 = vector.broadcast %cst_85 : f32 to vector<8x128xf32>
    %329 = arith.addf %328, %327 : vector<8x128xf32>
    %330 = arith.divf %328, %329 : vector<8x128xf32>
    %331 = arith.mulf %322, %310 : vector<8x128xf32>
    %332 = arith.mulf %316, %324 : vector<8x128xf32>
    %333 = arith.addf %331, %332 : vector<8x128xf32>
    %334 = math.tanh %333 : vector<8x128xf32>
    %335 = arith.mulf %330, %334 : vector<8x128xf32>
    %336 = vector.extract_strided_slice %294 {offsets = [0, 128], sizes = [8, 128], strides = [1, 1]} : vector<8x256xf32> to vector<8x128xf32>
    %337 = vector.extract_strided_slice %309 {offsets = [0, 0], sizes = [8, 128], strides = [1, 1]} : vector<8x512xf32> to vector<8x128xf32>
    %338 = arith.negf %337 : vector<8x128xf32>
    %339 = math.exp %338 : vector<8x128xf32>
    %cst_86 = arith.constant 1.000000e+00 : f32
    %340 = vector.broadcast %cst_86 : f32 to vector<8x128xf32>
    %341 = arith.addf %340, %339 : vector<8x128xf32>
    %342 = arith.divf %340, %341 : vector<8x128xf32>
    %343 = vector.extract_strided_slice %309 {offsets = [0, 128], sizes = [8, 128], strides = [1, 1]} : vector<8x512xf32> to vector<8x128xf32>
    %344 = arith.negf %343 : vector<8x128xf32>
    %345 = math.exp %344 : vector<8x128xf32>
    %cst_87 = arith.constant 1.000000e+00 : f32
    %346 = vector.broadcast %cst_87 : f32 to vector<8x128xf32>
    %347 = arith.addf %346, %345 : vector<8x128xf32>
    %348 = arith.divf %346, %347 : vector<8x128xf32>
    %349 = vector.extract_strided_slice %309 {offsets = [0, 256], sizes = [8, 128], strides = [1, 1]} : vector<8x512xf32> to vector<8x128xf32>
    %350 = math.tanh %349 : vector<8x128xf32>
    %351 = vector.extract_strided_slice %309 {offsets = [0, 384], sizes = [8, 128], strides = [1, 1]} : vector<8x512xf32> to vector<8x128xf32>
    %352 = arith.negf %351 : vector<8x128xf32>
    %353 = math.exp %352 : vector<8x128xf32>
    %cst_88 = arith.constant 1.000000e+00 : f32
    %354 = vector.broadcast %cst_88 : f32 to vector<8x128xf32>
    %355 = arith.addf %354, %353 : vector<8x128xf32>
    %356 = arith.divf %354, %355 : vector<8x128xf32>
    %357 = arith.mulf %348, %336 : vector<8x128xf32>
    %358 = arith.mulf %342, %350 : vector<8x128xf32>
    %359 = arith.addf %357, %358 : vector<8x128xf32>
    %360 = math.tanh %359 : vector<8x128xf32>
    %361 = arith.mulf %356, %360 : vector<8x128xf32>
    %362 = tpu.concatenate %335, %361 in 1 : vector<8x128xf32>, vector<8x128xf32> -> vector<8x256xf32>
    %363 = tpu.concatenate %333, %359 in 1 : vector<8x128xf32>, vector<8x128xf32> -> vector<8x256xf32>
    %c5_i32 = arith.constant 5 : i32
    %c0_89 = arith.constant 0 : index
    %c0_90 = arith.constant 0 : index
    %364 = vector.load %arg5[%c0_89, %c0_90] : memref<256x1024xf32, #tpu.memory_space<vmem>>, vector<256x1024xf32>
    %cst_91 = arith.constant dense<0.000000e+00> : vector<8x1024xf32>
    %365 = tpu.matmul %362, %364, %cst_91 {dimension_numbers = #tpu.dot_dimension_numbers<[1], [0], [0], [1], [0, 0, 1, 1], [], []>} : vector<8x256xf32>, vector<256x1024xf32>, vector<8x1024xf32> -> vector<8x1024xf32>
    %c8_i32_92 = arith.constant 8 : i32
    %366 = arith.muli %c5_i32, %c8_i32_92 : i32
    %367 = tpu.assume_multiple %366, 8 : i32
    %c7_i32_93 = arith.constant 7 : i32
    %368 = arith.subi %c7_i32_93, %c5_i32 : i32
    %c8_i32_94 = arith.constant 8 : i32
    %369 = arith.muli %368, %c8_i32_94 : i32
    %370 = tpu.assume_multiple %369, 8 : i32
    %371 = vector.extract_strided_slice %365 {offsets = [0, 0], sizes = [8, 512], strides = [1, 1]} : vector<8x1024xf32> to vector<8x512xf32>
    %372 = arith.index_cast %367 : i32 to index
    %c0_95 = arith.constant 0 : index
    %373 = vector.load %arg10[%372, %c0_95] : memref<64x512xf32, #tpu.memory_space<vmem>>, vector<8x512xf32>
    %374 = arith.addf %371, %373 : vector<8x512xf32>
    %375 = vector.extract_strided_slice %365 {offsets = [0, 512], sizes = [8, 512], strides = [1, 1]} : vector<8x1024xf32> to vector<8x512xf32>
    %376 = arith.index_cast %370 : i32 to index
    %c0_96 = arith.constant 0 : index
    %377 = vector.load %arg11[%376, %c0_96] : memref<64x512xf32, #tpu.memory_space<vmem>>, vector<8x512xf32>
    %378 = arith.addf %375, %377 : vector<8x512xf32>
    %379 = vector.extract_strided_slice %363 {offsets = [0, 0], sizes = [8, 128], strides = [1, 1]} : vector<8x256xf32> to vector<8x128xf32>
    %380 = vector.extract_strided_slice %374 {offsets = [0, 0], sizes = [8, 128], strides = [1, 1]} : vector<8x512xf32> to vector<8x128xf32>
    %381 = arith.negf %380 : vector<8x128xf32>
    %382 = math.exp %381 : vector<8x128xf32>
    %cst_97 = arith.constant 1.000000e+00 : f32
    %383 = vector.broadcast %cst_97 : f32 to vector<8x128xf32>
    %384 = arith.addf %383, %382 : vector<8x128xf32>
    %385 = arith.divf %383, %384 : vector<8x128xf32>
    %386 = vector.extract_strided_slice %374 {offsets = [0, 128], sizes = [8, 128], strides = [1, 1]} : vector<8x512xf32> to vector<8x128xf32>
    %387 = arith.negf %386 : vector<8x128xf32>
    %388 = math.exp %387 : vector<8x128xf32>
    %cst_98 = arith.constant 1.000000e+00 : f32
    %389 = vector.broadcast %cst_98 : f32 to vector<8x128xf32>
    %390 = arith.addf %389, %388 : vector<8x128xf32>
    %391 = arith.divf %389, %390 : vector<8x128xf32>
    %392 = vector.extract_strided_slice %374 {offsets = [0, 256], sizes = [8, 128], strides = [1, 1]} : vector<8x512xf32> to vector<8x128xf32>
    %393 = math.tanh %392 : vector<8x128xf32>
    %394 = vector.extract_strided_slice %374 {offsets = [0, 384], sizes = [8, 128], strides = [1, 1]} : vector<8x512xf32> to vector<8x128xf32>
    %395 = arith.negf %394 : vector<8x128xf32>
    %396 = math.exp %395 : vector<8x128xf32>
    %cst_99 = arith.constant 1.000000e+00 : f32
    %397 = vector.broadcast %cst_99 : f32 to vector<8x128xf32>
    %398 = arith.addf %397, %396 : vector<8x128xf32>
    %399 = arith.divf %397, %398 : vector<8x128xf32>
    %400 = arith.mulf %391, %379 : vector<8x128xf32>
    %401 = arith.mulf %385, %393 : vector<8x128xf32>
    %402 = arith.addf %400, %401 : vector<8x128xf32>
    %403 = math.tanh %402 : vector<8x128xf32>
    %404 = arith.mulf %399, %403 : vector<8x128xf32>
    %405 = vector.extract_strided_slice %363 {offsets = [0, 128], sizes = [8, 128], strides = [1, 1]} : vector<8x256xf32> to vector<8x128xf32>
    %406 = vector.extract_strided_slice %378 {offsets = [0, 0], sizes = [8, 128], strides = [1, 1]} : vector<8x512xf32> to vector<8x128xf32>
    %407 = arith.negf %406 : vector<8x128xf32>
    %408 = math.exp %407 : vector<8x128xf32>
    %cst_100 = arith.constant 1.000000e+00 : f32
    %409 = vector.broadcast %cst_100 : f32 to vector<8x128xf32>
    %410 = arith.addf %409, %408 : vector<8x128xf32>
    %411 = arith.divf %409, %410 : vector<8x128xf32>
    %412 = vector.extract_strided_slice %378 {offsets = [0, 128], sizes = [8, 128], strides = [1, 1]} : vector<8x512xf32> to vector<8x128xf32>
    %413 = arith.negf %412 : vector<8x128xf32>
    %414 = math.exp %413 : vector<8x128xf32>
    %cst_101 = arith.constant 1.000000e+00 : f32
    %415 = vector.broadcast %cst_101 : f32 to vector<8x128xf32>
    %416 = arith.addf %415, %414 : vector<8x128xf32>
    %417 = arith.divf %415, %416 : vector<8x128xf32>
    %418 = vector.extract_strided_slice %378 {offsets = [0, 256], sizes = [8, 128], strides = [1, 1]} : vector<8x512xf32> to vector<8x128xf32>
    %419 = math.tanh %418 : vector<8x128xf32>
    %420 = vector.extract_strided_slice %378 {offsets = [0, 384], sizes = [8, 128], strides = [1, 1]} : vector<8x512xf32> to vector<8x128xf32>
    %421 = arith.negf %420 : vector<8x128xf32>
    %422 = math.exp %421 : vector<8x128xf32>
    %cst_102 = arith.constant 1.000000e+00 : f32
    %423 = vector.broadcast %cst_102 : f32 to vector<8x128xf32>
    %424 = arith.addf %423, %422 : vector<8x128xf32>
    %425 = arith.divf %423, %424 : vector<8x128xf32>
    %426 = arith.mulf %417, %405 : vector<8x128xf32>
    %427 = arith.mulf %411, %419 : vector<8x128xf32>
    %428 = arith.addf %426, %427 : vector<8x128xf32>
    %429 = math.tanh %428 : vector<8x128xf32>
    %430 = arith.mulf %425, %429 : vector<8x128xf32>
    %431 = tpu.concatenate %404, %430 in 1 : vector<8x128xf32>, vector<8x128xf32> -> vector<8x256xf32>
    %432 = tpu.concatenate %402, %428 in 1 : vector<8x128xf32>, vector<8x128xf32> -> vector<8x256xf32>
    %c6_i32 = arith.constant 6 : i32
    %c0_103 = arith.constant 0 : index
    %c0_104 = arith.constant 0 : index
    %433 = vector.load %arg5[%c0_103, %c0_104] : memref<256x1024xf32, #tpu.memory_space<vmem>>, vector<256x1024xf32>
    %cst_105 = arith.constant dense<0.000000e+00> : vector<8x1024xf32>
    %434 = tpu.matmul %431, %433, %cst_105 {dimension_numbers = #tpu.dot_dimension_numbers<[1], [0], [0], [1], [0, 0, 1, 1], [], []>} : vector<8x256xf32>, vector<256x1024xf32>, vector<8x1024xf32> -> vector<8x1024xf32>
    %c8_i32_106 = arith.constant 8 : i32
    %435 = arith.muli %c6_i32, %c8_i32_106 : i32
    %436 = tpu.assume_multiple %435, 8 : i32
    %c7_i32_107 = arith.constant 7 : i32
    %437 = arith.subi %c7_i32_107, %c6_i32 : i32
    %c8_i32_108 = arith.constant 8 : i32
    %438 = arith.muli %437, %c8_i32_108 : i32
    %439 = tpu.assume_multiple %438, 8 : i32
    %440 = vector.extract_strided_slice %434 {offsets = [0, 0], sizes = [8, 512], strides = [1, 1]} : vector<8x1024xf32> to vector<8x512xf32>
    %441 = arith.index_cast %436 : i32 to index
    %c0_109 = arith.constant 0 : index
    %442 = vector.load %arg10[%441, %c0_109] : memref<64x512xf32, #tpu.memory_space<vmem>>, vector<8x512xf32>
    %443 = arith.addf %440, %442 : vector<8x512xf32>
    %444 = vector.extract_strided_slice %434 {offsets = [0, 512], sizes = [8, 512], strides = [1, 1]} : vector<8x1024xf32> to vector<8x512xf32>
    %445 = arith.index_cast %439 : i32 to index
    %c0_110 = arith.constant 0 : index
    %446 = vector.load %arg11[%445, %c0_110] : memref<64x512xf32, #tpu.memory_space<vmem>>, vector<8x512xf32>
    %447 = arith.addf %444, %446 : vector<8x512xf32>
    %448 = vector.extract_strided_slice %432 {offsets = [0, 0], sizes = [8, 128], strides = [1, 1]} : vector<8x256xf32> to vector<8x128xf32>
    %449 = vector.extract_strided_slice %443 {offsets = [0, 0], sizes = [8, 128], strides = [1, 1]} : vector<8x512xf32> to vector<8x128xf32>
    %450 = arith.negf %449 : vector<8x128xf32>
    %451 = math.exp %450 : vector<8x128xf32>
    %cst_111 = arith.constant 1.000000e+00 : f32
    %452 = vector.broadcast %cst_111 : f32 to vector<8x128xf32>
    %453 = arith.addf %452, %451 : vector<8x128xf32>
    %454 = arith.divf %452, %453 : vector<8x128xf32>
    %455 = vector.extract_strided_slice %443 {offsets = [0, 128], sizes = [8, 128], strides = [1, 1]} : vector<8x512xf32> to vector<8x128xf32>
    %456 = arith.negf %455 : vector<8x128xf32>
    %457 = math.exp %456 : vector<8x128xf32>
    %cst_112 = arith.constant 1.000000e+00 : f32
    %458 = vector.broadcast %cst_112 : f32 to vector<8x128xf32>
    %459 = arith.addf %458, %457 : vector<8x128xf32>
    %460 = arith.divf %458, %459 : vector<8x128xf32>
    %461 = vector.extract_strided_slice %443 {offsets = [0, 256], sizes = [8, 128], strides = [1, 1]} : vector<8x512xf32> to vector<8x128xf32>
    %462 = math.tanh %461 : vector<8x128xf32>
    %463 = vector.extract_strided_slice %443 {offsets = [0, 384], sizes = [8, 128], strides = [1, 1]} : vector<8x512xf32> to vector<8x128xf32>
    %464 = arith.negf %463 : vector<8x128xf32>
    %465 = math.exp %464 : vector<8x128xf32>
    %cst_113 = arith.constant 1.000000e+00 : f32
    %466 = vector.broadcast %cst_113 : f32 to vector<8x128xf32>
    %467 = arith.addf %466, %465 : vector<8x128xf32>
    %468 = arith.divf %466, %467 : vector<8x128xf32>
    %469 = arith.mulf %460, %448 : vector<8x128xf32>
    %470 = arith.mulf %454, %462 : vector<8x128xf32>
    %471 = arith.addf %469, %470 : vector<8x128xf32>
    %472 = math.tanh %471 : vector<8x128xf32>
    %473 = arith.mulf %468, %472 : vector<8x128xf32>
    %474 = vector.extract_strided_slice %432 {offsets = [0, 128], sizes = [8, 128], strides = [1, 1]} : vector<8x256xf32> to vector<8x128xf32>
    %475 = vector.extract_strided_slice %447 {offsets = [0, 0], sizes = [8, 128], strides = [1, 1]} : vector<8x512xf32> to vector<8x128xf32>
    %476 = arith.negf %475 : vector<8x128xf32>
    %477 = math.exp %476 : vector<8x128xf32>
    %cst_114 = arith.constant 1.000000e+00 : f32
    %478 = vector.broadcast %cst_114 : f32 to vector<8x128xf32>
    %479 = arith.addf %478, %477 : vector<8x128xf32>
    %480 = arith.divf %478, %479 : vector<8x128xf32>
    %481 = vector.extract_strided_slice %447 {offsets = [0, 128], sizes = [8, 128], strides = [1, 1]} : vector<8x512xf32> to vector<8x128xf32>
    %482 = arith.negf %481 : vector<8x128xf32>
    %483 = math.exp %482 : vector<8x128xf32>
    %cst_115 = arith.constant 1.000000e+00 : f32
    %484 = vector.broadcast %cst_115 : f32 to vector<8x128xf32>
    %485 = arith.addf %484, %483 : vector<8x128xf32>
    %486 = arith.divf %484, %485 : vector<8x128xf32>
    %487 = vector.extract_strided_slice %447 {offsets = [0, 256], sizes = [8, 128], strides = [1, 1]} : vector<8x512xf32> to vector<8x128xf32>
    %488 = math.tanh %487 : vector<8x128xf32>
    %489 = vector.extract_strided_slice %447 {offsets = [0, 384], sizes = [8, 128], strides = [1, 1]} : vector<8x512xf32> to vector<8x128xf32>
    %490 = arith.negf %489 : vector<8x128xf32>
    %491 = math.exp %490 : vector<8x128xf32>
    %cst_116 = arith.constant 1.000000e+00 : f32
    %492 = vector.broadcast %cst_116 : f32 to vector<8x128xf32>
    %493 = arith.addf %492, %491 : vector<8x128xf32>
    %494 = arith.divf %492, %493 : vector<8x128xf32>
    %495 = arith.mulf %486, %474 : vector<8x128xf32>
    %496 = arith.mulf %480, %488 : vector<8x128xf32>
    %497 = arith.addf %495, %496 : vector<8x128xf32>
    %498 = math.tanh %497 : vector<8x128xf32>
    %499 = arith.mulf %494, %498 : vector<8x128xf32>
    %500 = tpu.concatenate %473, %499 in 1 : vector<8x128xf32>, vector<8x128xf32> -> vector<8x256xf32>
    %501 = tpu.concatenate %471, %497 in 1 : vector<8x128xf32>, vector<8x128xf32> -> vector<8x256xf32>
    %c7_i32_117 = arith.constant 7 : i32
    %c0_118 = arith.constant 0 : index
    %c0_119 = arith.constant 0 : index
    %502 = vector.load %arg5[%c0_118, %c0_119] : memref<256x1024xf32, #tpu.memory_space<vmem>>, vector<256x1024xf32>
    %cst_120 = arith.constant dense<0.000000e+00> : vector<8x1024xf32>
    %503 = tpu.matmul %500, %502, %cst_120 {dimension_numbers = #tpu.dot_dimension_numbers<[1], [0], [0], [1], [0, 0, 1, 1], [], []>} : vector<8x256xf32>, vector<256x1024xf32>, vector<8x1024xf32> -> vector<8x1024xf32>
    %c8_i32_121 = arith.constant 8 : i32
    %504 = arith.muli %c7_i32_117, %c8_i32_121 : i32
    %505 = tpu.assume_multiple %504, 8 : i32
    %c7_i32_122 = arith.constant 7 : i32
    %506 = arith.subi %c7_i32_122, %c7_i32_117 : i32
    %c8_i32_123 = arith.constant 8 : i32
    %507 = arith.muli %506, %c8_i32_123 : i32
    %508 = tpu.assume_multiple %507, 8 : i32
    %509 = vector.extract_strided_slice %503 {offsets = [0, 0], sizes = [8, 512], strides = [1, 1]} : vector<8x1024xf32> to vector<8x512xf32>
    %510 = arith.index_cast %505 : i32 to index
    %c0_124 = arith.constant 0 : index
    %511 = vector.load %arg10[%510, %c0_124] : memref<64x512xf32, #tpu.memory_space<vmem>>, vector<8x512xf32>
    %512 = arith.addf %509, %511 : vector<8x512xf32>
    %513 = vector.extract_strided_slice %503 {offsets = [0, 512], sizes = [8, 512], strides = [1, 1]} : vector<8x1024xf32> to vector<8x512xf32>
    %514 = arith.index_cast %508 : i32 to index
    %c0_125 = arith.constant 0 : index
    %515 = vector.load %arg11[%514, %c0_125] : memref<64x512xf32, #tpu.memory_space<vmem>>, vector<8x512xf32>
    %516 = arith.addf %513, %515 : vector<8x512xf32>
    %517 = vector.extract_strided_slice %501 {offsets = [0, 0], sizes = [8, 128], strides = [1, 1]} : vector<8x256xf32> to vector<8x128xf32>
    %518 = vector.extract_strided_slice %512 {offsets = [0, 0], sizes = [8, 128], strides = [1, 1]} : vector<8x512xf32> to vector<8x128xf32>
    %519 = arith.negf %518 : vector<8x128xf32>
    %520 = math.exp %519 : vector<8x128xf32>
    %cst_126 = arith.constant 1.000000e+00 : f32
    %521 = vector.broadcast %cst_126 : f32 to vector<8x128xf32>
    %522 = arith.addf %521, %520 : vector<8x128xf32>
    %523 = arith.divf %521, %522 : vector<8x128xf32>
    %524 = vector.extract_strided_slice %512 {offsets = [0, 128], sizes = [8, 128], strides = [1, 1]} : vector<8x512xf32> to vector<8x128xf32>
    %525 = arith.negf %524 : vector<8x128xf32>
    %526 = math.exp %525 : vector<8x128xf32>
    %cst_127 = arith.constant 1.000000e+00 : f32
    %527 = vector.broadcast %cst_127 : f32 to vector<8x128xf32>
    %528 = arith.addf %527, %526 : vector<8x128xf32>
    %529 = arith.divf %527, %528 : vector<8x128xf32>
    %530 = vector.extract_strided_slice %512 {offsets = [0, 256], sizes = [8, 128], strides = [1, 1]} : vector<8x512xf32> to vector<8x128xf32>
    %531 = math.tanh %530 : vector<8x128xf32>
    %532 = vector.extract_strided_slice %512 {offsets = [0, 384], sizes = [8, 128], strides = [1, 1]} : vector<8x512xf32> to vector<8x128xf32>
    %533 = arith.negf %532 : vector<8x128xf32>
    %534 = math.exp %533 : vector<8x128xf32>
    %cst_128 = arith.constant 1.000000e+00 : f32
    %535 = vector.broadcast %cst_128 : f32 to vector<8x128xf32>
    %536 = arith.addf %535, %534 : vector<8x128xf32>
    %537 = arith.divf %535, %536 : vector<8x128xf32>
    %538 = arith.mulf %529, %517 : vector<8x128xf32>
    %539 = arith.mulf %523, %531 : vector<8x128xf32>
    %540 = arith.addf %538, %539 : vector<8x128xf32>
    %541 = math.tanh %540 : vector<8x128xf32>
    %542 = arith.mulf %537, %541 : vector<8x128xf32>
    %543 = vector.extract_strided_slice %501 {offsets = [0, 128], sizes = [8, 128], strides = [1, 1]} : vector<8x256xf32> to vector<8x128xf32>
    %544 = vector.extract_strided_slice %516 {offsets = [0, 0], sizes = [8, 128], strides = [1, 1]} : vector<8x512xf32> to vector<8x128xf32>
    %545 = arith.negf %544 : vector<8x128xf32>
    %546 = math.exp %545 : vector<8x128xf32>
    %cst_129 = arith.constant 1.000000e+00 : f32
    %547 = vector.broadcast %cst_129 : f32 to vector<8x128xf32>
    %548 = arith.addf %547, %546 : vector<8x128xf32>
    %549 = arith.divf %547, %548 : vector<8x128xf32>
    %550 = vector.extract_strided_slice %516 {offsets = [0, 128], sizes = [8, 128], strides = [1, 1]} : vector<8x512xf32> to vector<8x128xf32>
    %551 = arith.negf %550 : vector<8x128xf32>
    %552 = math.exp %551 : vector<8x128xf32>
    %cst_130 = arith.constant 1.000000e+00 : f32
    %553 = vector.broadcast %cst_130 : f32 to vector<8x128xf32>
    %554 = arith.addf %553, %552 : vector<8x128xf32>
    %555 = arith.divf %553, %554 : vector<8x128xf32>
    %556 = vector.extract_strided_slice %516 {offsets = [0, 256], sizes = [8, 128], strides = [1, 1]} : vector<8x512xf32> to vector<8x128xf32>
    %557 = math.tanh %556 : vector<8x128xf32>
    %558 = vector.extract_strided_slice %516 {offsets = [0, 384], sizes = [8, 128], strides = [1, 1]} : vector<8x512xf32> to vector<8x128xf32>
    %559 = arith.negf %558 : vector<8x128xf32>
    %560 = math.exp %559 : vector<8x128xf32>
    %cst_131 = arith.constant 1.000000e+00 : f32
    %561 = vector.broadcast %cst_131 : f32 to vector<8x128xf32>
    %562 = arith.addf %561, %560 : vector<8x128xf32>
    %563 = arith.divf %561, %562 : vector<8x128xf32>
    %564 = arith.mulf %555, %543 : vector<8x128xf32>
    %565 = arith.mulf %549, %557 : vector<8x128xf32>
    %566 = arith.addf %564, %565 : vector<8x128xf32>
    %567 = math.tanh %566 : vector<8x128xf32>
    %568 = arith.mulf %563, %567 : vector<8x128xf32>
    %569 = tpu.concatenate %542, %568 in 1 : vector<8x128xf32>, vector<8x128xf32> -> vector<8x256xf32>
    %570 = tpu.concatenate %540, %566 in 1 : vector<8x128xf32>, vector<8x128xf32> -> vector<8x256xf32>
    %c8_i32_132 = arith.constant 8 : i32
    %c0_133 = arith.constant 0 : index
    %c0_134 = arith.constant 0 : index
    %571 = vector.load %arg8[%c0_133, %c0_134] : memref<8x256xf32, #tpu.memory_space<vmem>>, vector<8x256xf32>
    tpu.vector_store %arg8[%c0_133, %c0_134], %569 {strides = array<i32>} : memref<8x256xf32, #tpu.memory_space<vmem>>, vector<8x256xf32>,
    %c0_135 = arith.constant 0 : index
    %c0_136 = arith.constant 0 : index
    %572 = vector.load %arg9[%c0_135, %c0_136] : memref<8x256xf32, #tpu.memory_space<vmem>>, vector<8x256xf32>
    tpu.vector_store %arg9[%c0_135, %c0_136], %570 {strides = array<i32>} : memref<8x256xf32, #tpu.memory_space<vmem>>, vector<8x256xf32>,
    %c0_i32_137 = arith.constant 0 : i32
    %573 = arith.cmpi eq, %arg0, %c0_i32_137 : i32
    %574 = arith.extui %573 : i1 to i32
    %c0_i32_138 = arith.constant 0 : i32
    %575 = arith.cmpi ne, %574, %c0_i32_138 : i32
    scf.if %575 {
      %c0_139 = arith.constant 0 : index
      %c0_140 = arith.constant 0 : index
      %576 = vector.load %arg7[%c0_139, %c0_140] : memref<8x256xf32, #tpu.memory_space<vmem>>, vector<8x256xf32>
      tpu.vector_store %arg7[%c0_139, %c0_140], %569 {strides = array<i32>} : memref<8x256xf32, #tpu.memory_space<vmem>>, vector<8x256xf32>,
    } else {
    }
    return
  }
  func.func @transform_0(%arg0: i32) -> (i32, i32) {
    %c0_i32 = arith.constant 0 : i32
    %c0_i32_0 = arith.constant 0 : i32
    return %arg0, %c0_i32 : i32, i32
  }
  func.func @transform_1(%arg0: i32) -> (i32, i32) {
    %c0_i32 = arith.constant 0 : i32
    %0 = arith.subi %c0_i32, %arg0 : i32
    %c0_i32_0 = arith.constant 0 : i32
    %c0_i32_1 = arith.constant 0 : i32
    return %0, %c0_i32_0 : i32, i32
  }
  func.func @transform_2(%arg0: i32) -> (i32, i32) {
    %c0_i32 = arith.constant 0 : i32
    %c0_i32_0 = arith.constant 0 : i32
    %c0_i32_1 = arith.constant 0 : i32
    return %c0_i32, %c0_i32_0 : i32, i32
  }
  func.func @transform_3(%arg0: i32) -> (i32, i32) {
    %c0_i32 = arith.constant 0 : i32
    %c0_i32_0 = arith.constant 0 : i32
    %c0_i32_1 = arith.constant 0 : i32
    return %c0_i32, %c0_i32_0 : i32, i32
  }
  func.func @transform_4(%arg0: i32) -> (i32, i32) {
    %c0_i32 = arith.constant 0 : i32
    %c0_i32_0 = arith.constant 0 : i32
    %c0_i32_1 = arith.constant 0 : i32
    return %c0_i32, %c0_i32_0 : i32, i32
  }
  func.func @transform_5(%arg0: i32) -> (i32, i32) {
    %c0_i32 = arith.constant 0 : i32
    %c0_i32_0 = arith.constant 0 : i32
    %c0_i32_1 = arith.constant 0 : i32
    return %c0_i32, %c0_i32_0 : i32, i32
  }
  func.func @transform_6(%arg0: i32) -> (i32, i32) {
    %c0_i32 = arith.constant 0 : i32
    %c0_i32_0 = arith.constant 0 : i32
    %c0_i32_1 = arith.constant 0 : i32
    return %c0_i32, %c0_i32_0 : i32, i32
  }
}

module attributes {stable_mosaic.version = 11 : i64} {
  func.func @mlp_kernel(%arg0: memref<8x256xf32, #tpu.memory_space<vmem>>, %arg1: memref<256x512xf32, #tpu.memory_space<vmem>>, %arg2: memref<1x512xf32, #tpu.memory_space<vmem>>, %arg3: memref<512x256xf32, #tpu.memory_space<vmem>>, %arg4: memref<1x256xf32, #tpu.memory_space<vmem>>, %arg5: memref<256x128xf32, #tpu.memory_space<vmem>>, %arg6: memref<1x128xf32, #tpu.memory_space<vmem>>, %arg7: memref<8x128xf32, #tpu.memory_space<vmem>>) attributes {dimension_semantics = [], scalar_prefetch = 0 : i64, scratch_operands = 0 : i64, tpu.core_type = #tpu.core_type<tc>} {
    %c0 = arith.constant 0 : index
    %c0_0 = arith.constant 0 : index
    %0 = vector.load %arg0[%c0, %c0_0] : memref<8x256xf32, #tpu.memory_space<vmem>>, vector<8x256xf32>
    %cst = arith.constant 0.000000e+00 : f32
    %1 = vector.broadcast %cst : f32 to vector<8x256xf32>
    %2 = arith.maximumf %0, %1 : vector<8x256xf32>
    %c0_1 = arith.constant 0 : index
    %c0_2 = arith.constant 0 : index
    %3 = vector.load %arg1[%c0_1, %c0_2] : memref<256x512xf32, #tpu.memory_space<vmem>>, vector<256x512xf32>
    %cst_3 = arith.constant dense<0.000000e+00> : vector<8x512xf32>
    %4 = tpu.matmul %2, %3, %cst_3 {dimension_numbers = #tpu.dot_dimension_numbers<[1], [0], [0], [1], [0, 0, 1, 1], [], []>} : vector<8x256xf32>, vector<256x512xf32>, vector<8x512xf32> -> vector<8x512xf32>
    %c0_4 = arith.constant 0 : index
    %c0_5 = arith.constant 0 : index
    %5 = vector.load %arg2[%c0_4, %c0_5] : memref<1x512xf32, #tpu.memory_space<vmem>>, vector<1x512xf32>
    %6 = vector.broadcast %5 : vector<1x512xf32> to vector<8x512xf32>
    %7 = arith.addf %4, %6 : vector<8x512xf32>
    %cst_6 = arith.constant 0.000000e+00 : f32
    %8 = vector.broadcast %cst_6 : f32 to vector<8x512xf32>
    %9 = arith.maximumf %7, %8 : vector<8x512xf32>
    %c0_7 = arith.constant 0 : index
    %c0_8 = arith.constant 0 : index
    %10 = vector.load %arg3[%c0_7, %c0_8] : memref<512x256xf32, #tpu.memory_space<vmem>>, vector<512x256xf32>
    %cst_9 = arith.constant dense<0.000000e+00> : vector<8x256xf32>
    %11 = tpu.matmul %9, %10, %cst_9 {dimension_numbers = #tpu.dot_dimension_numbers<[1], [0], [0], [1], [0, 0, 1, 1], [], []>} : vector<8x512xf32>, vector<512x256xf32>, vector<8x256xf32> -> vector<8x256xf32>
    %c0_10 = arith.constant 0 : index
    %c0_11 = arith.constant 0 : index
    %12 = vector.load %arg4[%c0_10, %c0_11] : memref<1x256xf32, #tpu.memory_space<vmem>>, vector<1x256xf32>
    %13 = vector.broadcast %12 : vector<1x256xf32> to vector<8x256xf32>
    %14 = arith.addf %11, %13 : vector<8x256xf32>
    %cst_12 = arith.constant 0.000000e+00 : f32
    %15 = vector.broadcast %cst_12 : f32 to vector<8x256xf32>
    %16 = arith.maximumf %14, %15 : vector<8x256xf32>
    %c0_13 = arith.constant 0 : index
    %c0_14 = arith.constant 0 : index
    %17 = vector.load %arg5[%c0_13, %c0_14] : memref<256x128xf32, #tpu.memory_space<vmem>>, vector<256x128xf32>
    %cst_15 = arith.constant dense<0.000000e+00> : vector<8x128xf32>
    %18 = tpu.matmul %16, %17, %cst_15 {dimension_numbers = #tpu.dot_dimension_numbers<[1], [0], [0], [1], [0, 0, 1, 1], [], []>} : vector<8x256xf32>, vector<256x128xf32>, vector<8x128xf32> -> vector<8x128xf32>
    %c0_16 = arith.constant 0 : index
    %c0_17 = arith.constant 0 : index
    %19 = vector.load %arg6[%c0_16, %c0_17] : memref<1x128xf32, #tpu.memory_space<vmem>>, vector<1x128xf32>
    %20 = vector.broadcast %19 : vector<1x128xf32> to vector<8x128xf32>
    %21 = arith.addf %18, %20 : vector<8x128xf32>
    %c0_18 = arith.constant 0 : index
    %c0_19 = arith.constant 0 : index
    %22 = vector.load %arg7[%c0_18, %c0_19] : memref<8x128xf32, #tpu.memory_space<vmem>>, vector<8x128xf32>
    tpu.vector_store %arg7[%c0_18, %c0_19], %21 {strides = array<i32>} : memref<8x128xf32, #tpu.memory_space<vmem>>, vector<8x128xf32>,
    return
  }
}

</mosaic_0001>

<llo_original>
// kernel: lstm_model_forward.3
$region0: #{lstm_model_forward.3}
  #allocation0 [shape = 'u32[]', space=smem, size = 0x4, offset = 0x4, fixed_abs, tag = 'smem constant byte address 0x4 - core index']
  #allocation1 [shape = 'u32[144,128]{1,0:T(1,128)}', space=vmem, size = 0x12000, scoped, tag = 'internal scratch']
  %s0 = inlined_call_operand.vmem [shape: f32[8,256], index: 0, kind: input, shape index: {}]
  %s1 = inlined_call_operand.vmem [shape: f32[256,512], index: 1, kind: input, shape index: {}]
  %s2 = inlined_call_operand.vmem [shape: f32[1,512], index: 2, kind: input, shape index: {}]
  %s3 = inlined_call_operand.vmem [shape: f32[512,256], index: 3, kind: input, shape index: {}]
  %s4 = inlined_call_operand.vmem [shape: f32[1,256], index: 4, kind: input, shape index: {}]
  %s5 = inlined_call_operand.vmem [shape: f32[256,128], index: 5, kind: input, shape index: {}]
  %s6 = inlined_call_operand.vmem [shape: f32[1,128], index: 6, kind: input, shape index: {}]
  %s7 = inlined_call_operand.vmem [shape: f32[8,128], index: 7, kind: output, shape index: {}]
  %s8 = sld [smem:[#allocation0]]
  $region38: #{lstm_model_forward.3} parent=0
    _
  %s10 = ssub.s32 1, %s8
  %s11 = scalar_select 0, %s10, %s8
  // Predicated region
  $region2: #{lstm_model_forward.3} parent=0 // pred_check
    _
  $region3: #{lstm_model_forward.3} parent=0 // pred_check_branch
    %13 = sbr.rel (0) target = $region5
  $region4: #{lstm_model_forward.3} parent=0 // pred_region
    _
  $region5: #{lstm_model_forward.3} parent=0 // pred_fallthru
    _
  // Predicated region
  $region6: #{lstm_model_forward.3} parent=0 // pred_check
    _
  $region7: #{lstm_model_forward.3} parent=0 // pred_check_branch
    %15 = sbr.rel (0) target = $region9
  $region8: #{lstm_model_forward.3} parent=0 // pred_region
    _
  $region9: #{lstm_model_forward.3} parent=0 // pred_fallthru
    _
  // Predicated region
  $region10: #{lstm_model_forward.3} parent=0 // pred_check
    _
  $region11: #{lstm_model_forward.3} parent=0 // pred_check_branch
    %17 = sbr.rel (0) target = $region13
  $region12: #{lstm_model_forward.3} parent=0 // pred_region
    _
  $region13: #{lstm_model_forward.3} parent=0 // pred_fallthru
    _
  // Predicated region
  $region14: #{lstm_model_forward.3} parent=0 // pred_check
    _
  $region15: #{lstm_model_forward.3} parent=0 // pred_check_branch
    %19 = sbr.rel (0) target = $region17
  $region16: #{lstm_model_forward.3} parent=0 // pred_region
    _
  $region17: #{lstm_model_forward.3} parent=0 // pred_fallthru
    _
  // Predicated region
  $region18: #{lstm_model_forward.3} parent=0 // pred_check
    _
  $region19: #{lstm_model_forward.3} parent=0 // pred_check_branch
    %21 = sbr.rel (0) target = $region21
  $region20: #{lstm_model_forward.3} parent=0 // pred_region
    _
  $region21: #{lstm_model_forward.3} parent=0 // pred_fallthru
    _
  // Predicated region
  $region22: #{lstm_model_forward.3} parent=0 // pred_check
    _
  $region23: #{lstm_model_forward.3} parent=0 // pred_check_branch
    %23 = sbr.rel (0) target = $region25
  $region24: #{lstm_model_forward.3} parent=0 // pred_region
    _
  $region25: #{lstm_model_forward.3} parent=0 // pred_fallthru
    _
  // Predicated region
  $region26: #{lstm_model_forward.3} parent=0 // pred_check
    _
  $region27: #{lstm_model_forward.3} parent=0 // pred_check_branch
    %25 = sbr.rel (0) target = $region29
  $region28: #{lstm_model_forward.3} parent=0 // pred_region
    _
  $region29: #{lstm_model_forward.3} parent=0 // pred_fallthru
    _
  %v26 = vld [vmem:[%s0] sm:$0xff]
  %v27 = vld [vmem:[%s0 + $0x8] sm:$0xff]
  %v28 = vmax.f32 %v26, 0.0
  %v29 = vmax.f32 %v27, 0.0
  %v30 = vld [vmem:[%s1] sm:$0xff]
  %v31 = vld [vmem:[%s1 + $0x8] sm:$0xff]
  %v32 = vld [vmem:[%s1 + $0x10] sm:$0xff]
  %v33 = vld [vmem:[%s1 + $0x18] sm:$0xff]
  %v34 = vld [vmem:[%s1 + $0x20] sm:$0xff]
  %v35 = vld [vmem:[%s1 + $0x28] sm:$0xff]
  %v36 = vld [vmem:[%s1 + $0x30] sm:$0xff]
  %v37 = vld [vmem:[%s1 + $0x38] sm:$0xff]
  %v38 = vld [vmem:[%s1 + $0x40] sm:$0xff]
  %v39 = vld [vmem:[%s1 + $0x48] sm:$0xff]
  %v40 = vld [vmem:[%s1 + $0x50] sm:$0xff]
  %v41 = vld [vmem:[%s1 + $0x58] sm:$0xff]
  %v42 = vld [vmem:[%s1 + $0x60] sm:$0xff]
  %v43 = vld [vmem:[%s1 + $0x68] sm:$0xff]
  %v44 = vld [vmem:[%s1 + $0x70] sm:$0xff]
  %v45 = vld [vmem:[%s1 + $0x78] sm:$0xff]
  %v46 = vld [vmem:[%s1 + $0x80] sm:$0xff]
  %v47 = vld [vmem:[%s1 + $0x88] sm:$0xff]
  %v48 = vld [vmem:[%s1 + $0x90] sm:$0xff]
  %v49 = vld [vmem:[%s1 + $0x98] sm:$0xff]
  %v50 = vld [vmem:[%s1 + $0xa0] sm:$0xff]
  %v51 = vld [vmem:[%s1 + $0xa8] sm:$0xff]
  %v52 = vld [vmem:[%s1 + $0xb0] sm:$0xff]
  %v53 = vld [vmem:[%s1 + $0xb8] sm:$0xff]
  %v54 = vld [vmem:[%s1 + $0xc0] sm:$0xff]
  %v55 = vld [vmem:[%s1 + $0xc8] sm:$0xff]
  %v56 = vld [vmem:[%s1 + $0xd0] sm:$0xff]
  %v57 = vld [vmem:[%s1 + $0xd8] sm:$0xff]
  %v58 = vld [vmem:[%s1 + $0xe0] sm:$0xff]
  %v59 = vld [vmem:[%s1 + $0xe8] sm:$0xff]
  %v60 = vld [vmem:[%s1 + $0xf0] sm:$0xff]
  %v61 = vld [vmem:[%s1 + $0xf8] sm:$0xff]
  %v62 = vld [vmem:[%s1 + $0x100] sm:$0xff]
  %v63 = vld [vmem:[%s1 + $0x108] sm:$0xff]
  %v64 = vld [vmem:[%s1 + $0x110] sm:$0xff]
  %v65 = vld [vmem:[%s1 + $0x118] sm:$0xff]
  %v66 = vld [vmem:[%s1 + $0x120] sm:$0xff]
  %v67 = vld [vmem:[%s1 + $0x128] sm:$0xff]
  %v68 = vld [vmem:[%s1 + $0x130] sm:$0xff]
  %v69 = vld [vmem:[%s1 + $0x138] sm:$0xff]
  %v70 = vld [vmem:[%s1 + $0x140] sm:$0xff]
  %v71 = vld [vmem:[%s1 + $0x148] sm:$0xff]
  %v72 = vld [vmem:[%s1 + $0x150] sm:$0xff]
  %v73 = vld [vmem:[%s1 + $0x158] sm:$0xff]
  %v74 = vld [vmem:[%s1 + $0x160] sm:$0xff]
  %v75 = vld [vmem:[%s1 + $0x168] sm:$0xff]
  %v76 = vld [vmem:[%s1 + $0x170] sm:$0xff]
  %v77 = vld [vmem:[%s1 + $0x178] sm:$0xff]
  %v78 = vld [vmem:[%s1 + $0x180] sm:$0xff]
  %v79 = vld [vmem:[%s1 + $0x188] sm:$0xff]
  %v80 = vld [vmem:[%s1 + $0x190] sm:$0xff]
  %v81 = vld [vmem:[%s1 + $0x198] sm:$0xff]
  %v82 = vld [vmem:[%s1 + $0x1a0] sm:$0xff]
  %v83 = vld [vmem:[%s1 + $0x1a8] sm:$0xff]
  %v84 = vld [vmem:[%s1 + $0x1b0] sm:$0xff]
  %v85 = vld [vmem:[%s1 + $0x1b8] sm:$0xff]
  %v86 = vld [vmem:[%s1 + $0x1c0] sm:$0xff]
  %v87 = vld [vmem:[%s1 + $0x1c8] sm:$0xff]
  %v88 = vld [vmem:[%s1 + $0x1d0] sm:$0xff]
  %v89 = vld [vmem:[%s1 + $0x1d8] sm:$0xff]
  %v90 = vld [vmem:[%s1 + $0x1e0] sm:$0xff]
  %v91 = vld [vmem:[%s1 + $0x1e8] sm:$0xff]
  %v92 = vld [vmem:[%s1 + $0x1f0] sm:$0xff]
  %v93 = vld [vmem:[%s1 + $0x1f8] sm:$0xff]
  %v94 = vld [vmem:[%s1 + $0x200] sm:$0xff]
  %v95 = vld [vmem:[%s1 + $0x208] sm:$0xff]
  %v96 = vld [vmem:[%s1 + $0x210] sm:$0xff]
  %v97 = vld [vmem:[%s1 + $0x218] sm:$0xff]
  %v98 = vld [vmem:[%s1 + $0x220] sm:$0xff]
  %v99 = vld [vmem:[%s1 + $0x228] sm:$0xff]
  %v100 = vld [vmem:[%s1 + $0x230] sm:$0xff]
  %v101 = vld [vmem:[%s1 + $0x238] sm:$0xff]
  %v102 = vld [vmem:[%s1 + $0x240] sm:$0xff]
  %v103 = vld [vmem:[%s1 + $0x248] sm:$0xff]
  %v104 = vld [vmem:[%s1 + $0x250] sm:$0xff]
  %v105 = vld [vmem:[%s1 + $0x258] sm:$0xff]
  %v106 = vld [vmem:[%s1 + $0x260] sm:$0xff]
  %v107 = vld [vmem:[%s1 + $0x268] sm:$0xff]
  %v108 = vld [vmem:[%s1 + $0x270] sm:$0xff]
  %v109 = vld [vmem:[%s1 + $0x278] sm:$0xff]
  %v110 = vld [vmem:[%s1 + $0x280] sm:$0xff]
  %v111 = vld [vmem:[%s1 + $0x288] sm:$0xff]
  %v112 = vld [vmem:[%s1 + $0x290] sm:$0xff]
  %v113 = vld [vmem:[%s1 + $0x298] sm:$0xff]
  %v114 = vld [vmem:[%s1 + $0x2a0] sm:$0xff]
  %v115 = vld [vmem:[%s1 + $0x2a8] sm:$0xff]
  %v116 = vld [vmem:[%s1 + $0x2b0] sm:$0xff]
  %v117 = vld [vmem:[%s1 + $0x2b8] sm:$0xff]
  %v118 = vld [vmem:[%s1 + $0x2c0] sm:$0xff]
  %v119 = vld [vmem:[%s1 + $0x2c8] sm:$0xff]
  %v120 = vld [vmem:[%s1 + $0x2d0] sm:$0xff]
  %v121 = vld [vmem:[%s1 + $0x2d8] sm:$0xff]
  %v122 = vld [vmem:[%s1 + $0x2e0] sm:$0xff]
  %v123 = vld [vmem:[%s1 + $0x2e8] sm:$0xff]
  %v124 = vld [vmem:[%s1 + $0x2f0] sm:$0xff]
  %v125 = vld [vmem:[%s1 + $0x2f8] sm:$0xff]
  %v126 = vld [vmem:[%s1 + $0x300] sm:$0xff]
  %v127 = vld [vmem:[%s1 + $0x308] sm:$0xff]
  %v128 = vld [vmem:[%s1 + $0x310] sm:$0xff]
  %v129 = vld [vmem:[%s1 + $0x318] sm:$0xff]
  %v130 = vld [vmem:[%s1 + $0x320] sm:$0xff]
  %v131 = vld [vmem:[%s1 + $0x328] sm:$0xff]
  %v132 = vld [vmem:[%s1 + $0x330] sm:$0xff]
  %v133 = vld [vmem:[%s1 + $0x338] sm:$0xff]
  %v134 = vld [vmem:[%s1 + $0x340] sm:$0xff]
  %v135 = vld [vmem:[%s1 + $0x348] sm:$0xff]
  %v136 = vld [vmem:[%s1 + $0x350] sm:$0xff]
  %v137 = vld [vmem:[%s1 + $0x358] sm:$0xff]
  %v138 = vld [vmem:[%s1 + $0x360] sm:$0xff]
  %v139 = vld [vmem:[%s1 + $0x368] sm:$0xff]
  %v140 = vld [vmem:[%s1 + $0x370] sm:$0xff]
  %v141 = vld [vmem:[%s1 + $0x378] sm:$0xff]
  %v142 = vld [vmem:[%s1 + $0x380] sm:$0xff]
  %v143 = vld [vmem:[%s1 + $0x388] sm:$0xff]
  %v144 = vld [vmem:[%s1 + $0x390] sm:$0xff]
  %v145 = vld [vmem:[%s1 + $0x398] sm:$0xff]
  %v146 = vld [vmem:[%s1 + $0x3a0] sm:$0xff]
  %v147 = vld [vmem:[%s1 + $0x3a8] sm:$0xff]
  %v148 = vld [vmem:[%s1 + $0x3b0] sm:$0xff]
  %v149 = vld [vmem:[%s1 + $0x3b8] sm:$0xff]
  %v150 = vld [vmem:[%s1 + $0x3c0] sm:$0xff]
  %v151 = vld [vmem:[%s1 + $0x3c8] sm:$0xff]
  %v152 = vld [vmem:[%s1 + $0x3d0] sm:$0xff]
  %v153 = vld [vmem:[%s1 + $0x3d8] sm:$0xff]
  %v154 = vld [vmem:[%s1 + $0x3e0] sm:$0xff]
  %v155 = vld [vmem:[%s1 + $0x3e8] sm:$0xff]
  %v156 = vld [vmem:[%s1 + $0x3f0] sm:$0xff]
  %v157 = vld [vmem:[%s1 + $0x3f8] sm:$0xff]
  %v158 = vld [vmem:[%s2] sm:$0xf]
  %v160 = vlaneseq
  %v161 = vshrl.u32 %v160, 7
  %v162 = vsub.s32 0, %v161
  %v163 = vrot.slane %v158, %v162
  %v164 = vlaneseq
  %v165 = vshrl.u32 %v164, 7
  %v166 = vsub.s32 1, %v165
  %v167 = vrot.slane %v158, %v166
  %v168 = vlaneseq
  %v169 = vshrl.u32 %v168, 7
  %v170 = vsub.s32 2, %v169
  %v171 = vrot.slane %v158, %v170
  %v172 = vlaneseq
  %v173 = vshrl.u32 %v172, 7
  %v174 = vsub.s32 3, %v173
  %v175 = vrot.slane %v158, %v174
  %180 = vmatprep.subr.mxu0 %v91
  %181 = vmatpush1.msra.mxu0 %v90
  %182 = vmatprep.subr.mxu0 %v87
  %183 = vmatpush1.msra.mxu0 %v86
  %184 = vmatprep.subr.mxu0 %v83
  %185 = vmatpush1.msra.mxu0 %v82
  %186 = vmatprep.subr.mxu0 %v79
  %187 = vmatpush1.msra.mxu0 %v78
  %188 = vmatprep.subr.mxu0 %v75
  %189 = vmatpush1.msra.mxu0 %v74
  %190 = vmatprep.subr.mxu0 %v71
  %191 = vmatpush1.msra.mxu0 %v70
  %192 = vmatprep.subr.mxu0 %v67
  %193 = vmatpush1.msra.mxu0 %v66
  %194 = vmatprep.subr.mxu0 %v63
  %195 = vmatpush1.msra.mxu0 %v62
  %196 = vmatprep.subr.mxu0 %v59
  %197 = vmatpush1.msra.mxu0 %v58
  %198 = vmatprep.subr.mxu0 %v55
  %199 = vmatpush1.msra.mxu0 %v54
  %200 = vmatprep.subr.mxu0 %v51
  %201 = vmatpush1.msra.mxu0 %v50
  %202 = vmatprep.subr.mxu0 %v47
  %203 = vmatpush1.msra.mxu0 %v46
  %204 = vmatprep.subr.mxu0 %v43
  %205 = vmatpush1.msra.mxu0 %v42
  %206 = vmatprep.subr.mxu0 %v39
  %207 = vmatpush1.msra.mxu0 %v38
  %208 = vmatprep.subr.mxu0 %v35
  %209 = vmatpush1.msra.mxu0 %v34
  %210 = vmatprep.subr.mxu0 %v31
  %211 = vmatpush1.msra.mxu0 %v30
  %212 = vmatprep.subr.mxu0 %v155
  %213 = vmatpush2.msra.mxu0 %v154
  %214 = vmatprep.subr.mxu0 %v151
  %215 = vmatpush2.msra.mxu0 %v150
  %216 = vmatprep.subr.mxu0 %v147
  %217 = vmatpush2.msra.mxu0 %v146
  %218 = vmatprep.subr.mxu0 %v143
  %219 = vmatpush2.msra.mxu0 %v142
  %220 = vmatprep.subr.mxu0 %v139
  %221 = vmatpush2.msra.mxu0 %v138
  %222 = vmatprep.subr.mxu0 %v135
  %223 = vmatpush2.msra.mxu0 %v134
  %224 = vmatprep.subr.mxu0 %v131
  %225 = vmatpush2.msra.mxu0 %v130
  %226 = vmatprep.subr.mxu0 %v127
  %227 = vmatpush2.msra.mxu0 %v126
  %228 = vmatprep.subr.mxu0 %v123
  %229 = vmatpush2.msra.mxu0 %v122
  %230 = vmatprep.subr.mxu0 %v119
  %231 = vmatpush2.msra.mxu0 %v118
  %232 = vmatprep.subr.mxu0 %v115
  %233 = vmatpush2.msra.mxu0 %v114
  %234 = vmatprep.subr.mxu0 %v111
  %235 = vmatpush2.msra.mxu0 %v110
  %236 = vmatprep.subr.mxu0 %v107
  %237 = vmatpush2.msra.mxu0 %v106
  %238 = vmatprep.subr.mxu0 %v103
  %239 = vmatpush2.msra.mxu0 %v102
  %240 = vmatprep.subr.mxu0 %v99
  %241 = vmatpush2.msra.mxu0 %v98
  %242 = vmatprep.subr.mxu0 %v95
  %243 = vmatpush2.msra.mxu0 %v94
  %244 = vmatprep.mubr.f32.mxu0 %v29
  %245 = vmatmul.mubr.f32.gmra.mxu0 %v28
  %v246 = vpop.f32.mrf.mxu0
  %v247 = vadd.f32 %v163, %v246
  %v248 = vpop.f32.mrf.mxu0
  %v249 = vadd.f32 %v167, %v248
  %250 = vdwg.mxu0
  %251 = vmatprep.subr.mxu0 %v93
  %252 = vmatpush1.msra.mxu0 %v92
  %253 = vmatprep.subr.mxu0 %v89
  %254 = vmatpush1.msra.mxu0 %v88
  %255 = vmatprep.subr.mxu0 %v85
  %256 = vmatpush1.msra.mxu0 %v84
  %257 = vmatprep.subr.mxu0 %v81
  %258 = vmatpush1.msra.mxu0 %v80
  %259 = vmatprep.subr.mxu0 %v77
  %260 = vmatpush1.msra.mxu0 %v76
  %261 = vmatprep.subr.mxu0 %v73
  %262 = vmatpush1.msra.mxu0 %v72
  %263 = vmatprep.subr.mxu0 %v69
  %264 = vmatpush1.msra.mxu0 %v68
  %265 = vmatprep.subr.mxu0 %v65
  %266 = vmatpush1.msra.mxu0 %v64
  %267 = vmatprep.subr.mxu0 %v61
  %268 = vmatpush1.msra.mxu0 %v60
  %269 = vmatprep.subr.mxu0 %v57
  %270 = vmatpush1.msra.mxu0 %v56
  %271 = vmatprep.subr.mxu0 %v53
  %272 = vmatpush1.msra.mxu0 %v52
  %273 = vmatprep.subr.mxu0 %v49
  %274 = vmatpush1.msra.mxu0 %v48
  %275 = vmatprep.subr.mxu0 %v45
  %276 = vmatpush1.msra.mxu0 %v44
  %277 = vmatprep.subr.mxu0 %v41
  %278 = vmatpush1.msra.mxu0 %v40
  %279 = vmatprep.subr.mxu0 %v37
  %280 = vmatpush1.msra.mxu0 %v36
  %281 = vmatprep.subr.mxu0 %v33
  %282 = vmatpush1.msra.mxu0 %v32
  %283 = vmatprep.subr.mxu0 %v157
  %284 = vmatpush2.msra.mxu0 %v156
  %285 = vmatprep.subr.mxu0 %v153
  %286 = vmatpush2.msra.mxu0 %v152
  %287 = vmatprep.subr.mxu0 %v149
  %288 = vmatpush2.msra.mxu0 %v148
  %289 = vmatprep.subr.mxu0 %v145
  %290 = vmatpush2.msra.mxu0 %v144
  %291 = vmatprep.subr.mxu0 %v141
  %292 = vmatpush2.msra.mxu0 %v140
  %293 = vmatprep.subr.mxu0 %v137
  %294 = vmatpush2.msra.mxu0 %v136
  %295 = vmatprep.subr.mxu0 %v133
  %296 = vmatpush2.msra.mxu0 %v132
  %297 = vmatprep.subr.mxu0 %v129
  %298 = vmatpush2.msra.mxu0 %v128
  %299 = vmatprep.subr.mxu0 %v125
  %300 = vmatpush2.msra.mxu0 %v124
  %301 = vmatprep.subr.mxu0 %v121
  %302 = vmatpush2.msra.mxu0 %v120
  %303 = vmatprep.subr.mxu0 %v117
  %304 = vmatpush2.msra.mxu0 %v116
  %305 = vmatprep.subr.mxu0 %v113
  %306 = vmatpush2.msra.mxu0 %v112
  %307 = vmatprep.subr.mxu0 %v109
  %308 = vmatpush2.msra.mxu0 %v108
  %309 = vmatprep.subr.mxu0 %v105
  %310 = vmatpush2.msra.mxu0 %v104
  %311 = vmatprep.subr.mxu0 %v101
  %312 = vmatpush2.msra.mxu0 %v100
  %313 = vmatprep.subr.mxu0 %v97
  %314 = vmatpush2.msra.mxu0 %v96
  %315 = vmatprep.mubr.f32.mxu0 %v29
  %316 = vmatmul.mubr.f32.gmra.mxu0 %v28
  %v317 = vpop.f32.mrf.mxu0
  %v318 = vadd.f32 %v171, %v317
  %v319 = vpop.f32.mrf.mxu0
  %v320 = vadd.f32 %v175, %v319
  %321 = vdwg.mxu0
  %v322 = vmax.f32 %v247, 0.0
  %v323 = vmax.f32 %v249, 0.0
  %v324 = vmax.f32 %v318, 0.0
  %v325 = vmax.f32 %v320, 0.0
  %v326 = vld [vmem:[%s3] sm:$0xff]
  %v327 = vld [vmem:[%s3 + $0x8] sm:$0xff]
  %v328 = vld [vmem:[%s3 + $0x10] sm:$0xff]
  %v329 = vld [vmem:[%s3 + $0x18] sm:$0xff]
  %v330 = vld [vmem:[%s3 + $0x20] sm:$0xff]
  %v331 = vld [vmem:[%s3 + $0x28] sm:$0xff]
  %v332 = vld [vmem:[%s3 + $0x30] sm:$0xff]
  %v333 = vld [vmem:[%s3 + $0x38] sm:$0xff]
  %v334 = vld [vmem:[%s3 + $0x40] sm:$0xff]
  %v335 = vld [vmem:[%s3 + $0x48] sm:$0xff]
  %v336 = vld [vmem:[%s3 + $0x50] sm:$0xff]
  %v337 = vld [vmem:[%s3 + $0x58] sm:$0xff]
  %v338 = vld [vmem:[%s3 + $0x60] sm:$0xff]
  %v339 = vld [vmem:[%s3 + $0x68] sm:$0xff]
  %v340 = vld [vmem:[%s3 + $0x70] sm:$0xff]
  %v341 = vld [vmem:[%s3 + $0x78] sm:$0xff]
  %v342 = vld [vmem:[%s3 + $0x80] sm:$0xff]
  %v343 = vld [vmem:[%s3 + $0x88] sm:$0xff]
  %v344 = vld [vmem:[%s3 + $0x90] sm:$0xff]
  %v345 = vld [vmem:[%s3 + $0x98] sm:$0xff]
  %v346 = vld [vmem:[%s3 + $0xa0] sm:$0xff]
  %v347 = vld [vmem:[%s3 + $0xa8] sm:$0xff]
  %v348 = vld [vmem:[%s3 + $0xb0] sm:$0xff]
  %v349 = vld [vmem:[%s3 + $0xb8] sm:$0xff]
  %v350 = vld [vmem:[%s3 + $0xc0] sm:$0xff]
  %v351 = vld [vmem:[%s3 + $0xc8] sm:$0xff]
  %v352 = vld [vmem:[%s3 + $0xd0] sm:$0xff]
  %v353 = vld [vmem:[%s3 + $0xd8] sm:$0xff]
  %v354 = vld [vmem:[%s3 + $0xe0] sm:$0xff]
  %v355 = vld [vmem:[%s3 + $0xe8] sm:$0xff]
  %v356 = vld [vmem:[%s3 + $0xf0] sm:$0xff]
  %v357 = vld [vmem:[%s3 + $0xf8] sm:$0xff]
  %v358 = vld [vmem:[%s3 + $0x100] sm:$0xff]
  %v359 = vld [vmem:[%s3 + $0x108] sm:$0xff]
  %v360 = vld [vmem:[%s3 + $0x110] sm:$0xff]
  %v361 = vld [vmem:[%s3 + $0x118] sm:$0xff]
  %v362 = vld [vmem:[%s3 + $0x120] sm:$0xff]
  %v363 = vld [vmem:[%s3 + $0x128] sm:$0xff]
  %v364 = vld [vmem:[%s3 + $0x130] sm:$0xff]
  %v365 = vld [vmem:[%s3 + $0x138] sm:$0xff]
  %v366 = vld [vmem:[%s3 + $0x140] sm:$0xff]
  %v367 = vld [vmem:[%s3 + $0x148] sm:$0xff]
  %v368 = vld [vmem:[%s3 + $0x150] sm:$0xff]
  %v369 = vld [vmem:[%s3 + $0x158] sm:$0xff]
  %v370 = vld [vmem:[%s3 + $0x160] sm:$0xff]
  %v371 = vld [vmem:[%s3 + $0x168] sm:$0xff]
  %v372 = vld [vmem:[%s3 + $0x170] sm:$0xff]
  %v373 = vld [vmem:[%s3 + $0x178] sm:$0xff]
  %v374 = vld [vmem:[%s3 + $0x180] sm:$0xff]
  %v375 = vld [vmem:[%s3 + $0x188] sm:$0xff]
  %v376 = vld [vmem:[%s3 + $0x190] sm:$0xff]
  %v377 = vld [vmem:[%s3 + $0x198] sm:$0xff]
  %v378 = vld [vmem:[%s3 + $0x1a0] sm:$0xff]
  %v379 = vld [vmem:[%s3 + $0x1a8] sm:$0xff]
  %v380 = vld [vmem:[%s3 + $0x1b0] sm:$0xff]
  %v381 = vld [vmem:[%s3 + $0x1b8] sm:$0xff]
  %v382 = vld [vmem:[%s3 + $0x1c0] sm:$0xff]
  %v383 = vld [vmem:[%s3 + $0x1c8] sm:$0xff]
  %v384 = vld [vmem:[%s3 + $0x1d0] sm:$0xff]
  %v385 = vld [vmem:[%s3 + $0x1d8] sm:$0xff]
  %v386 = vld [vmem:[%s3 + $0x1e0] sm:$0xff]
  %v387 = vld [vmem:[%s3 + $0x1e8] sm:$0xff]
  %v388 = vld [vmem:[%s3 + $0x1f0] sm:$0xff]
  %v389 = vld [vmem:[%s3 + $0x1f8] sm:$0xff]
  %v390 = vld [vmem:[%s3 + $0x200] sm:$0xff]
  %v391 = vld [vmem:[%s3 + $0x208] sm:$0xff]
  %v392 = vld [vmem:[%s3 + $0x210] sm:$0xff]
  %v393 = vld [vmem:[%s3 + $0x218] sm:$0xff]
  %v394 = vld [vmem:[%s3 + $0x220] sm:$0xff]
  %v395 = vld [vmem:[%s3 + $0x228] sm:$0xff]
  %v396 = vld [vmem:[%s3 + $0x230] sm:$0xff]
  %v397 = vld [vmem:[%s3 + $0x238] sm:$0xff]
  %v398 = vld [vmem:[%s3 + $0x240] sm:$0xff]
  %v399 = vld [vmem:[%s3 + $0x248] sm:$0xff]
  %v400 = vld [vmem:[%s3 + $0x250] sm:$0xff]
  %v401 = vld [vmem:[%s3 + $0x258] sm:$0xff]
  %v402 = vld [vmem:[%s3 + $0x260] sm:$0xff]
  %v403 = vld [vmem:[%s3 + $0x268] sm:$0xff]
  %v404 = vld [vmem:[%s3 + $0x270] sm:$0xff]
  %v405 = vld [vmem:[%s3 + $0x278] sm:$0xff]
  %v406 = vld [vmem:[%s3 + $0x280] sm:$0xff]
  %v407 = vld [vmem:[%s3 + $0x288] sm:$0xff]
  %v408 = vld [vmem:[%s3 + $0x290] sm:$0xff]
  %v409 = vld [vmem:[%s3 + $0x298] sm:$0xff]
  %v410 = vld [vmem:[%s3 + $0x2a0] sm:$0xff]
  %v411 = vld [vmem:[%s3 + $0x2a8] sm:$0xff]
  %v412 = vld [vmem:[%s3 + $0x2b0] sm:$0xff]
  %v413 = vld [vmem:[%s3 + $0x2b8] sm:$0xff]
  %v414 = vld [vmem:[%s3 + $0x2c0] sm:$0xff]
  %v415 = vld [vmem:[%s3 + $0x2c8] sm:$0xff]
  %v416 = vld [vmem:[%s3 + $0x2d0] sm:$0xff]
  %v417 = vld [vmem:[%s3 + $0x2d8] sm:$0xff]
  %v418 = vld [vmem:[%s3 + $0x2e0] sm:$0xff]
  %v419 = vld [vmem:[%s3 + $0x2e8] sm:$0xff]
  %v420 = vld [vmem:[%s3 + $0x2f0] sm:$0xff]
  %v421 = vld [vmem:[%s3 + $0x2f8] sm:$0xff]
  %v422 = vld [vmem:[%s3 + $0x300] sm:$0xff]
  %v423 = vld [vmem:[%s3 + $0x308] sm:$0xff]
  %v424 = vld [vmem:[%s3 + $0x310] sm:$0xff]
  %v425 = vld [vmem:[%s3 + $0x318] sm:$0xff]
  %v426 = vld [vmem:[%s3 + $0x320] sm:$0xff]
  %v427 = vld [vmem:[%s3 + $0x328] sm:$0xff]
  %v428 = vld [vmem:[%s3 + $0x330] sm:$0xff]
  %v429 = vld [vmem:[%s3 + $0x338] sm:$0xff]
  %v430 = vld [vmem:[%s3 + $0x340] sm:$0xff]
  %v431 = vld [vmem:[%s3 + $0x348] sm:$0xff]
  %v432 = vld [vmem:[%s3 + $0x350] sm:$0xff]
  %v433 = vld [vmem:[%s3 + $0x358] sm:$0xff]
  %v434 = vld [vmem:[%s3 + $0x360] sm:$0xff]
  %v435 = vld [vmem:[%s3 + $0x368] sm:$0xff]
  %v436 = vld [vmem:[%s3 + $0x370] sm:$0xff]
  %v437 = vld [vmem:[%s3 + $0x378] sm:$0xff]
  %v438 = vld [vmem:[%s3 + $0x380] sm:$0xff]
  %v439 = vld [vmem:[%s3 + $0x388] sm:$0xff]
  %v440 = vld [vmem:[%s3 + $0x390] sm:$0xff]
  %v441 = vld [vmem:[%s3 + $0x398] sm:$0xff]
  %v442 = vld [vmem:[%s3 + $0x3a0] sm:$0xff]
  %v443 = vld [vmem:[%s3 + $0x3a8] sm:$0xff]
  %v444 = vld [vmem:[%s3 + $0x3b0] sm:$0xff]
  %v445 = vld [vmem:[%s3 + $0x3b8] sm:$0xff]
  %v446 = vld [vmem:[%s3 + $0x3c0] sm:$0xff]
  %v447 = vld [vmem:[%s3 + $0x3c8] sm:$0xff]
  %v448 = vld [vmem:[%s3 + $0x3d0] sm:$0xff]
  %v449 = vld [vmem:[%s3 + $0x3d8] sm:$0xff]
  %v450 = vld [vmem:[%s3 + $0x3e0] sm:$0xff]
  %v451 = vld [vmem:[%s3 + $0x3e8] sm:$0xff]
  %v452 = vld [vmem:[%s3 + $0x3f0] sm:$0xff]
  %v453 = vld [vmem:[%s3 + $0x3f8] sm:$0xff]
  %v454 = vld [vmem:[%s4] sm:$0x3]
  %v456 = vlaneseq
  %v457 = vshrl.u32 %v456, 7
  %v458 = vsub.s32 0, %v457
  %v459 = vrot.slane %v454, %v458
  %v460 = vlaneseq
  %v461 = vshrl.u32 %v460, 7
  %v462 = vsub.s32 1, %v461
  %v463 = vrot.slane %v454, %v462
  %466 = vmatprep.subr.mxu0 %v357
  %467 = vmatpush1.msra.mxu0 %v356
  %468 = vmatprep.subr.mxu0 %v355
  %469 = vmatpush1.msra.mxu0 %v354
  %470 = vmatprep.subr.mxu0 %v353
  %471 = vmatpush1.msra.mxu0 %v352
  %472 = vmatprep.subr.mxu0 %v351
  %473 = vmatpush1.msra.mxu0 %v350
  %474 = vmatprep.subr.mxu0 %v349
  %475 = vmatpush1.msra.mxu0 %v348
  %476 = vmatprep.subr.mxu0 %v347
  %477 = vmatpush1.msra.mxu0 %v346
  %478 = vmatprep.subr.mxu0 %v345
  %479 = vmatpush1.msra.mxu0 %v344
  %480 = vmatprep.subr.mxu0 %v343
  %481 = vmatpush1.msra.mxu0 %v342
  %482 = vmatprep.subr.mxu0 %v341
  %483 = vmatpush1.msra.mxu0 %v340
  %484 = vmatprep.subr.mxu0 %v339
  %485 = vmatpush1.msra.mxu0 %v338
  %486 = vmatprep.subr.mxu0 %v337
  %487 = vmatpush1.msra.mxu0 %v336
  %488 = vmatprep.subr.mxu0 %v335
  %489 = vmatpush1.msra.mxu0 %v334
  %490 = vmatprep.subr.mxu0 %v333
  %491 = vmatpush1.msra.mxu0 %v332
  %492 = vmatprep.subr.mxu0 %v331
  %493 = vmatpush1.msra.mxu0 %v330
  %494 = vmatprep.subr.mxu0 %v329
  %495 = vmatpush1.msra.mxu0 %v328
  %496 = vmatprep.subr.mxu0 %v327
  %497 = vmatpush1.msra.mxu0 %v326
  %498 = vmatprep.subr.mxu0 %v389
  %499 = vmatpush2.msra.mxu0 %v388
  %500 = vmatprep.subr.mxu0 %v387
  %501 = vmatpush2.msra.mxu0 %v386
  %502 = vmatprep.subr.mxu0 %v385
  %503 = vmatpush2.msra.mxu0 %v384
  %504 = vmatprep.subr.mxu0 %v383
  %505 = vmatpush2.msra.mxu0 %v382
  %506 = vmatprep.subr.mxu0 %v381
  %507 = vmatpush2.msra.mxu0 %v380
  %508 = vmatprep.subr.mxu0 %v379
  %509 = vmatpush2.msra.mxu0 %v378
  %510 = vmatprep.subr.mxu0 %v377
  %511 = vmatpush2.msra.mxu0 %v376
  %512 = vmatprep.subr.mxu0 %v375
  %513 = vmatpush2.msra.mxu0 %v374
  %514 = vmatprep.subr.mxu0 %v373
  %515 = vmatpush2.msra.mxu0 %v372
  %516 = vmatprep.subr.mxu0 %v371
  %517 = vmatpush2.msra.mxu0 %v370
  %518 = vmatprep.subr.mxu0 %v369
  %519 = vmatpush2.msra.mxu0 %v368
  %520 = vmatprep.subr.mxu0 %v367
  %521 = vmatpush2.msra.mxu0 %v366
  %522 = vmatprep.subr.mxu0 %v365
  %523 = vmatpush2.msra.mxu0 %v364
  %524 = vmatprep.subr.mxu0 %v363
  %525 = vmatpush2.msra.mxu0 %v362
  %526 = vmatprep.subr.mxu0 %v361
  %527 = vmatpush2.msra.mxu0 %v360
  %528 = vmatprep.subr.mxu0 %v359
  %529 = vmatpush2.msra.mxu0 %v358
  %530 = vmatprep.mubr.f32.mxu0 %v323
  %531 = vmatmul.mubr.f32.gmra.mxu0 %v322
  %v532 = vpop.f32.mrf.mxu0
  %v533 = vadd.f32 %v459, %v532
  %v534 = vpop.f32.mrf.mxu0
  %v535 = vadd.f32 %v463, %v534
  %536 = vdwg.mxu0
  %537 = vmatprep.subr.mxu0 %v421
  %538 = vmatpush1.msra.mxu0 %v420
  %539 = vmatprep.subr.mxu0 %v419
  %540 = vmatpush1.msra.mxu0 %v418
  %541 = vmatprep.subr.mxu0 %v417
  %542 = vmatpush1.msra.mxu0 %v416
  %543 = vmatprep.subr.mxu0 %v415
  %544 = vmatpush1.msra.mxu0 %v414
  %545 = vmatprep.subr.mxu0 %v413
  %546 = vmatpush1.msra.mxu0 %v412
  %547 = vmatprep.subr.mxu0 %v411
  %548 = vmatpush1.msra.mxu0 %v410
  %549 = vmatprep.subr.mxu0 %v409
  %550 = vmatpush1.msra.mxu0 %v408
  %551 = vmatprep.subr.mxu0 %v407
  %552 = vmatpush1.msra.mxu0 %v406
  %553 = vmatprep.subr.mxu0 %v405
  %554 = vmatpush1.msra.mxu0 %v404
  %555 = vmatprep.subr.mxu0 %v403
  %556 = vmatpush1.msra.mxu0 %v402
  %557 = vmatprep.subr.mxu0 %v401
  %558 = vmatpush1.msra.mxu0 %v400
  %559 = vmatprep.subr.mxu0 %v399
  %560 = vmatpush1.msra.mxu0 %v398
  %561 = vmatprep.subr.mxu0 %v397
  %562 = vmatpush1.msra.mxu0 %v396
  %563 = vmatprep.subr.mxu0 %v395
  %564 = vmatpush1.msra.mxu0 %v394
  %565 = vmatprep.subr.mxu0 %v393
  %566 = vmatpush1.msra.mxu0 %v392
  %567 = vmatprep.subr.mxu0 %v391
  %568 = vmatpush1.msra.mxu0 %v390
  %569 = vmatprep.subr.mxu0 %v453
  %570 = vmatpush2.msra.mxu0 %v452
  %571 = vmatprep.subr.mxu0 %v451
  %572 = vmatpush2.msra.mxu0 %v450
  %573 = vmatprep.subr.mxu0 %v449
  %574 = vmatpush2.msra.mxu0 %v448
  %575 = vmatprep.subr.mxu0 %v447
  %576 = vmatpush2.msra.mxu0 %v446
  %577 = vmatprep.subr.mxu0 %v445
  %578 = vmatpush2.msra.mxu0 %v444
  %579 = vmatprep.subr.mxu0 %v443
  %580 = vmatpush2.msra.mxu0 %v442
  %581 = vmatprep.subr.mxu0 %v441
  %582 = vmatpush2.msra.mxu0 %v440
  %583 = vmatprep.subr.mxu0 %v439
  %584 = vmatpush2.msra.mxu0 %v438
  %585 = vmatprep.subr.mxu0 %v437
  %586 = vmatpush2.msra.mxu0 %v436
  %587 = vmatprep.subr.mxu0 %v435
  %588 = vmatpush2.msra.mxu0 %v434
  %589 = vmatprep.subr.mxu0 %v433
  %590 = vmatpush2.msra.mxu0 %v432
  %591 = vmatprep.subr.mxu0 %v431
  %592 = vmatpush2.msra.mxu0 %v430
  %593 = vmatprep.subr.mxu0 %v429
  %594 = vmatpush2.msra.mxu0 %v428
  %595 = vmatprep.subr.mxu0 %v427
  %596 = vmatpush2.msra.mxu0 %v426
  %597 = vmatprep.subr.mxu0 %v425
  %598 = vmatpush2.msra.mxu0 %v424
  %599 = vmatprep.subr.mxu0 %v423
  %600 = vmatpush2.msra.mxu0 %v422
  %601 = vmatprep.mubr.f32.mxu0 %v325
  %602 = vmatmul.mubr.f32.gmra.mxu0 %v324
  %v603 = vpop.f32.mrf.mxu0
  %v604 = vadd.f32 %v533, %v603
  %v605 = vpop.f32.mrf.mxu0
  %v606 = vadd.f32 %v535, %v605
  %607 = vdwg.mxu0
  %v608 = vmax.f32 %v604, 0.0
  %v609 = vmax.f32 %v606, 0.0
  %v610 = vld [vmem:[%s5] sm:$0xff]
  %v611 = vld [vmem:[%s5 + $0x8] sm:$0xff]
  %v612 = vld [vmem:[%s5 + $0x10] sm:$0xff]
  %v613 = vld [vmem:[%s5 + $0x18] sm:$0xff]
  %v614 = vld [vmem:[%s5 + $0x20] sm:$0xff]
  %v615 = vld [vmem:[%s5 + $0x28] sm:$0xff]
  %v616 = vld [vmem:[%s5 + $0x30] sm:$0xff]
  %v617 = vld [vmem:[%s5 + $0x38] sm:$0xff]
  %v618 = vld [vmem:[%s5 + $0x40] sm:$0xff]
  %v619 = vld [vmem:[%s5 + $0x48] sm:$0xff]
  %v620 = vld [vmem:[%s5 + $0x50] sm:$0xff]
  %v621 = vld [vmem:[%s5 + $0x58] sm:$0xff]
  %v622 = vld [vmem:[%s5 + $0x60] sm:$0xff]
  %v623 = vld [vmem:[%s5 + $0x68] sm:$0xff]
  %v624 = vld [vmem:[%s5 + $0x70] sm:$0xff]
  %v625 = vld [vmem:[%s5 + $0x78] sm:$0xff]
  %v626 = vld [vmem:[%s5 + $0x80] sm:$0xff]
  %v627 = vld [vmem:[%s5 + $0x88] sm:$0xff]
  %v628 = vld [vmem:[%s5 + $0x90] sm:$0xff]
  %v629 = vld [vmem:[%s5 + $0x98] sm:$0xff]
  %v630 = vld [vmem:[%s5 + $0xa0] sm:$0xff]
  %v631 = vld [vmem:[%s5 + $0xa8] sm:$0xff]
  %v632 = vld [vmem:[%s5 + $0xb0] sm:$0xff]
  %v633 = vld [vmem:[%s5 + $0xb8] sm:$0xff]
  %v634 = vld [vmem:[%s5 + $0xc0] sm:$0xff]
  %v635 = vld [vmem:[%s5 + $0xc8] sm:$0xff]
  %v636 = vld [vmem:[%s5 + $0xd0] sm:$0xff]
  %v637 = vld [vmem:[%s5 + $0xd8] sm:$0xff]
  %v638 = vld [vmem:[%s5 + $0xe0] sm:$0xff]
  %v639 = vld [vmem:[%s5 + $0xe8] sm:$0xff]
  %v640 = vld [vmem:[%s5 + $0xf0] sm:$0xff]
  %v641 = vld [vmem:[%s5 + $0xf8] sm:$0xff]
  %v642 = vld [vmem:[%s6] sm:$0x1]
  %v644 = vlaneseq
  %v645 = vshrl.u32 %v644, 7
  %v646 = vsub.s32 0, %v645
  %v647 = vrot.slane %v642, %v646
  %649 = vmatprep.subr.mxu0 0.0
  %650 = vmatpush1.msra.mxu0 %v625
  %651 = vmatprep.subr.mxu0 0.0
  %652 = vmatpush1.msra.mxu0 %v624
  %653 = vmatprep.subr.mxu0 0.0
  %654 = vmatpush1.msra.mxu0 %v623
  %655 = vmatprep.subr.mxu0 0.0
  %656 = vmatpush1.msra.mxu0 %v622
  %657 = vmatprep.subr.mxu0 0.0
  %658 = vmatpush1.msra.mxu0 %v621
  %659 = vmatprep.subr.mxu0 0.0
  %660 = vmatpush1.msra.mxu0 %v620
  %661 = vmatprep.subr.mxu0 0.0
  %662 = vmatpush1.msra.mxu0 %v619
  %663 = vmatprep.subr.mxu0 0.0
  %664 = vmatpush1.msra.mxu0 %v618
  %665 = vmatprep.subr.mxu0 0.0
  %666 = vmatpush1.msra.mxu0 %v617
  %667 = vmatprep.subr.mxu0 0.0
  %668 = vmatpush1.msra.mxu0 %v616
  %669 = vmatprep.subr.mxu0 0.0
  %670 = vmatpush1.msra.mxu0 %v615
  %671 = vmatprep.subr.mxu0 0.0
  %672 = vmatpush1.msra.mxu0 %v614
  %673 = vmatprep.subr.mxu0 0.0
  %674 = vmatpush1.msra.mxu0 %v613
  %675 = vmatprep.subr.mxu0 0.0
  %676 = vmatpush1.msra.mxu0 %v612
  %677 = vmatprep.subr.mxu0 0.0
  %678 = vmatpush1.msra.mxu0 %v611
  %679 = vmatprep.subr.mxu0 0.0
  %680 = vmatpush1.msra.mxu0 %v610
  %681 = vmatprep.subr.mxu0 0.0
  %682 = vmatpush2.msra.mxu0 %v641
  %683 = vmatprep.subr.mxu0 0.0
  %684 = vmatpush2.msra.mxu0 %v640
  %685 = vmatprep.subr.mxu0 0.0
  %686 = vmatpush2.msra.mxu0 %v639
  %687 = vmatprep.subr.mxu0 0.0
  %688 = vmatpush2.msra.mxu0 %v638
  %689 = vmatprep.subr.mxu0 0.0
  %690 = vmatpush2.msra.mxu0 %v637
  %691 = vmatprep.subr.mxu0 0.0
  %692 = vmatpush2.msra.mxu0 %v636
  %693 = vmatprep.subr.mxu0 0.0
  %694 = vmatpush2.msra.mxu0 %v635
  %695 = vmatprep.subr.mxu0 0.0
  %696 = vmatpush2.msra.mxu0 %v634
  %697 = vmatprep.subr.mxu0 0.0
  %698 = vmatpush2.msra.mxu0 %v633
  %699 = vmatprep.subr.mxu0 0.0
  %700 = vmatpush2.msra.mxu0 %v632
  %701 = vmatprep.subr.mxu0 0.0
  %702 = vmatpush2.msra.mxu0 %v631
  %703 = vmatprep.subr.mxu0 0.0
  %704 = vmatpush2.msra.mxu0 %v630
  %705 = vmatprep.subr.mxu0 0.0
  %706 = vmatpush2.msra.mxu0 %v629
  %707 = vmatprep.subr.mxu0 0.0
  %708 = vmatpush2.msra.mxu0 %v628
  %709 = vmatprep.subr.mxu0 0.0
  %710 = vmatpush2.msra.mxu0 %v627
  %711 = vmatprep.subr.mxu0 0.0
  %712 = vmatpush2.msra.mxu0 %v626
  %713 = vmatprep.mubr.f32.mxu0 %v609
  %714 = vmatmul.mubr.f32.gmra.mxu0 %v608
  %v715 = vpop.f32.mrf.mxu0
  %v716 = vadd.f32 %v647, %v715
  %v717 = vpop.f32.mrf.mxu0
  %718 = vdwg.mxu0
  %719 = vst [vmem:[%s7] sm:$0xff] %v716
  // Predicated region
  $region30: #{lstm_model_forward.3} parent=0 // pred_check
    _
  $region31: #{lstm_model_forward.3} parent=0 // pred_check_branch
    %721 = sbr.rel (0) target = $region33
  $region32: #{lstm_model_forward.3} parent=0 // pred_region
    _
  $region33: #{lstm_model_forward.3} parent=0 // pred_fallthru
    _
  // Predicated region
  $region34: #{lstm_model_forward.3} parent=0 // pred_check
    _
  $region35: #{lstm_model_forward.3} parent=0 // pred_check_branch
    %723 = sbr.rel (0) target = $region37
  $region36: #{lstm_model_forward.3} parent=0 // pred_region
    _
  $region37: #{lstm_model_forward.3} parent=0 // pred_fallthru
    _

// kernel: lstm_model_forward.2
$region0: #{lstm_model_forward.2}
  #allocation0 [shape = 'u32[]', space=smem, size = 0x4, offset = 0x4, fixed_abs, tag = 'smem constant byte address 0x4 - core index']
  #allocation1 [shape = 'u32[144,128]{1,0:T(1,128)}', space=vmem, size = 0x12000, scoped, tag = 'internal scratch']
  #allocation2 [shape = 'f32[8,256]{1,0:T(8,128)}', space=vmem, size = 0x2000, scoped, tag = 'scratch operand']
  #allocation3 [shape = 'f32[8,256]{1,0:T(8,128)}', space=vmem, size = 0x2000, scoped, tag = 'scratch operand']
  #allocation4 [shape = 'f32[64,512]{1,0:T(8,128)}', space=vmem, size = 0x20000, scoped, tag = 'scratch operand']
  #allocation5 [shape = 'f32[64,512]{1,0:T(8,128)}', space=vmem, size = 0x20000, scoped, tag = 'scratch operand']
  %s0 = inlined_call_operand.vmem [shape: f32[64,128], index: 0, kind: input, shape index: {}, may-alias: {0,1}]
  %s1 = inlined_call_operand.vmem [shape: f32[64,128], index: 1, kind: input, shape index: {}, may-alias: {0,1}]
  %s2 = inlined_call_operand.vmem [shape: f32[128,512], index: 2, kind: input, shape index: {}]
  %s3 = inlined_call_operand.hbm [shape: f32[128,512], index: 3, kind: input, shape index: {}]
  %s4 = inlined_call_operand.hbm [shape: f32[256,1024], index: 4, kind: input, shape index: {}]
  %s5 = inlined_call_operand.vmem [shape: f32[1,1024], index: 5, kind: input, shape index: {}]
  %s6 = inlined_call_operand.vmem [shape: f32[8,256], index: 6, kind: output, shape index: {}]
  %s7 = sld [smem:[#allocation0]]
  $region50: #{lstm_model_forward.2} parent=0
    _
  %s9 = ssub.s32 1, %s7
  %s10 = scalar_select 0, %s9, %s7
  $region1: #{lstm_model_forward.2} parent=0
    #allocation6 [shape = 'u8[262144]{0}', space=vmem, size = 0x40000, scoped, tag = 'input window, operand 3, single buffered']
    #allocation7 [shape = 's32[1]{0}', space=sflag, size = 0x4, scoped, tag = 'scoped memory for lstm_model_forward.2']
    #allocation8 [shape = 'u8[1048576]{0}', space=vmem, size = 0x100000, scoped, tag = 'input window, operand 4, single buffered']
    #allocation9 [shape = 's32[1]{0}', space=sflag, size = 0x4, scoped, tag = 'scoped memory for lstm_model_forward.2']
    %11 = vsyncpa [#allocation7], 0
    %12 = vsyncpa [#allocation9], 0
    // Predicated region
    $region2: #{lstm_model_forward.2} parent=1 // pred_check
      _
    $region3: #{lstm_model_forward.2} parent=1 // pred_check_branch
      %14 = sbr.rel (0) target = $region5
    $region4: #{lstm_model_forward.2} parent=1 // pred_region
      _
    $region5: #{lstm_model_forward.2} parent=1 // pred_fallthru
      _
    // Predicated region
    $region6: #{lstm_model_forward.2} parent=1 // pred_check
      _
    $region7: #{lstm_model_forward.2} parent=1 // pred_check_branch
      %16 = sbr.rel (0) target = $region9
    $region8: #{lstm_model_forward.2} parent=1 // pred_region
      %s17 = ssub.s32 0, 0
      %s18 = smul.u32 8, %s17
      %p19 = scmp.lt.s32.totalorder %s18, 7
      %s20 = scalar_select %p19, %s18, 7
      %s21 = smul.addr %s20, 8
      %s22 = scalar_lea.vmem %s1, %s21
      %s23 = ssub.s32 0, 0
      %s24 = smul.u32 8, %s23
    $region9: #{lstm_model_forward.2} parent=1 // pred_fallthru
      _
    // Predicated region
    $region10: #{lstm_model_forward.2} parent=1 // pred_check
      _
    $region11: #{lstm_model_forward.2} parent=1 // pred_check_branch
      %26 = sbr.rel (0) target = $region13
    $region12: #{lstm_model_forward.2} parent=1 // pred_region
      _
    $region13: #{lstm_model_forward.2} parent=1 // pred_fallthru
      _
    // Predicated region
    $region14: #{lstm_model_forward.2} parent=1 // pred_check
      _
    $region15: #{lstm_model_forward.2} parent=1 // pred_check_branch
      %28 = sbr.rel (0) target = $region17
    $region16: #{lstm_model_forward.2} parent=1 // pred_region
      %s30 = ssub.s32 8192, 8192
      %31 = vsyncadd [#allocation7], %s30
      %s32 = sshll.u32 [#allocation6], 4
      %s33 = int_to_ptr.vmem [resolvable:$true] %s32
      %38 = dma.hbm_to_vmem [thread:$0]  %s3, 8192, %s33, [#allocation7], 512, 512, 32
    $region17: #{lstm_model_forward.2} parent=1 // pred_fallthru
      _
    // Predicated region
    $region18: #{lstm_model_forward.2} parent=1 // pred_check
      _
    $region19: #{lstm_model_forward.2} parent=1 // pred_check_branch
      %40 = sbr.rel (0) target = $region21
    $region20: #{lstm_model_forward.2} parent=1 // pred_region
      %s42 = ssub.s32 32768, 32768
      %43 = vsyncadd [#allocation9], %s42
      %s44 = sshll.u32 [#allocation8], 4
      %s45 = int_to_ptr.vmem [resolvable:$true] %s44
      %50 = dma.hbm_to_vmem [thread:$0]  %s4, 32768, %s45, [#allocation9], 1024, 1024, 64
    $region21: #{lstm_model_forward.2} parent=1 // pred_fallthru
      _
    // Predicated region
    $region22: #{lstm_model_forward.2} parent=1 // pred_check
      _
    $region23: #{lstm_model_forward.2} parent=1 // pred_check_branch
      %52 = sbr.rel (0) target = $region25
    $region24: #{lstm_model_forward.2} parent=1 // pred_region
      _
    $region25: #{lstm_model_forward.2} parent=1 // pred_fallthru
      _
    // Predicated region
    $region26: #{lstm_model_forward.2} parent=1 // pred_check
      _
    $region27: #{lstm_model_forward.2} parent=1 // pred_check_branch
      %54 = sbr.rel (0) target = $region29
    $region28: #{lstm_model_forward.2} parent=1 // pred_region
      %55 = dma.done [#allocation7], 8192
    $region29: #{lstm_model_forward.2} parent=1 // pred_fallthru
      _
    // Predicated region
    $region30: #{lstm_model_forward.2} parent=1 // pred_check
      _
    $region31: #{lstm_model_forward.2} parent=1 // pred_check_branch
      %57 = sbr.rel (0) target = $region33
    $region32: #{lstm_model_forward.2} parent=1 // pred_region
      %58 = dma.done [#allocation9], 32768
    $region33: #{lstm_model_forward.2} parent=1 // pred_fallthru
      _
    %s59 = ssub.s32 0, 0
    %s60 = smul.u32 8, %s59
    %p61 = scmp.lt.s32.totalorder %s60, 7
    %s62 = scalar_select %p61, %s60, 7
    %s63 = smul.addr %s62, 8
    %s64 = scalar_lea.vmem %s1, %s63
    %s65 = ssub.s32 0, 0
    %s66 = smul.u32 8, %s65
    %p67 = scmp.lt.s32.totalorder %s66, 7
    %s68 = scalar_select %p67, %s66, 7
    %s69 = smul.addr %s68, 8
    %s70 = scalar_lea.vmem %s1, %s69
    %s71 = ssub.s32 0, 0
    %s72 = smul.u32 8, %s71
    %p73 = scmp.eq.s32.totalorder 0, 0
    // Predicated region
    $region34: #{lstm_model_forward.2} parent=1 // pred_check
      %p74 = pneg %p73
    $region35: #{lstm_model_forward.2} parent=1 // pred_check_branch
      %76 = sbr.rel (%p74) target = $region37
    $region36: #{lstm_model_forward.2} parent=1 // pred_region
      %77 = vst [vmem:[#allocation2] sm:$0xff] 0.0
      %78 = vst [vmem:[#allocation2 + $0x8] sm:$0xff] 0.0
      %79 = vst [vmem:[#allocation3] sm:$0xff] 0.0
      %80 = vst [vmem:[#allocation3 + $0x8] sm:$0xff] 0.0
    $region37: #{lstm_model_forward.2} parent=1 // pred_fallthru
      _
    %v81 = vld [vmem:[%s0] sm:$0xff]
    %v82 = vld [vmem:[%s0 + $0x8] sm:$0xff]
    %v83 = vld [vmem:[%s0 + $0x10] sm:$0xff]
    %v84 = vld [vmem:[%s0 + $0x18] sm:$0xff]
    %v85 = vld [vmem:[%s0 + $0x20] sm:$0xff]
    %v86 = vld [vmem:[%s0 + $0x28] sm:$0xff]
    %v87 = vld [vmem:[%s0 + $0x30] sm:$0xff]
    %v88 = vld [vmem:[%s0 + $0x38] sm:$0xff]
    %v89 = vld [vmem:[%s2] sm:$0xff]
    %v90 = vld [vmem:[%s2 + $0x8] sm:$0xff]
    %v91 = vld [vmem:[%s2 + $0x10] sm:$0xff]
    %v92 = vld [vmem:[%s2 + $0x18] sm:$0xff]
    %v93 = vld [vmem:[%s2 + $0x20] sm:$0xff]
    %v94 = vld [vmem:[%s2 + $0x28] sm:$0xff]
    %v95 = vld [vmem:[%s2 + $0x30] sm:$0xff]
    %v96 = vld [vmem:[%s2 + $0x38] sm:$0xff]
    %v97 = vld [vmem:[%s2 + $0x40] sm:$0xff]
    %v98 = vld [vmem:[%s2 + $0x48] sm:$0xff]
    %v99 = vld [vmem:[%s2 + $0x50] sm:$0xff]
    %v100 = vld [vmem:[%s2 + $0x58] sm:$0xff]
    %v101 = vld [vmem:[%s2 + $0x60] sm:$0xff]
    %v102 = vld [vmem:[%s2 + $0x68] sm:$0xff]
    %v103 = vld [vmem:[%s2 + $0x70] sm:$0xff]
    %v104 = vld [vmem:[%s2 + $0x78] sm:$0xff]
    %v105 = vld [vmem:[%s2 + $0x80] sm:$0xff]
    %v106 = vld [vmem:[%s2 + $0x88] sm:$0xff]
    %v107 = vld [vmem:[%s2 + $0x90] sm:$0xff]
    %v108 = vld [vmem:[%s2 + $0x98] sm:$0xff]
    %v109 = vld [vmem:[%s2 + $0xa0] sm:$0xff]
    %v110 = vld [vmem:[%s2 + $0xa8] sm:$0xff]
    %v111 = vld [vmem:[%s2 + $0xb0] sm:$0xff]
    %v112 = vld [vmem:[%s2 + $0xb8] sm:$0xff]
    %v113 = vld [vmem:[%s2 + $0xc0] sm:$0xff]
    %v114 = vld [vmem:[%s2 + $0xc8] sm:$0xff]
    %v115 = vld [vmem:[%s2 + $0xd0] sm:$0xff]
    %v116 = vld [vmem:[%s2 + $0xd8] sm:$0xff]
    %v117 = vld [vmem:[%s2 + $0xe0] sm:$0xff]
    %v118 = vld [vmem:[%s2 + $0xe8] sm:$0xff]
    %v119 = vld [vmem:[%s2 + $0xf0] sm:$0xff]
    %v120 = vld [vmem:[%s2 + $0xf8] sm:$0xff]
    %v121 = vld [vmem:[%s2 + $0x100] sm:$0xff]
    %v122 = vld [vmem:[%s2 + $0x108] sm:$0xff]
    %v123 = vld [vmem:[%s2 + $0x110] sm:$0xff]
    %v124 = vld [vmem:[%s2 + $0x118] sm:$0xff]
    %v125 = vld [vmem:[%s2 + $0x120] sm:$0xff]
    %v126 = vld [vmem:[%s2 + $0x128] sm:$0xff]
    %v127 = vld [vmem:[%s2 + $0x130] sm:$0xff]
    %v128 = vld [vmem:[%s2 + $0x138] sm:$0xff]
    %v129 = vld [vmem:[%s2 + $0x140] sm:$0xff]
    %v130 = vld [vmem:[%s2 + $0x148] sm:$0xff]
    %v131 = vld [vmem:[%s2 + $0x150] sm:$0xff]
    %v132 = vld [vmem:[%s2 + $0x158] sm:$0xff]
    %v133 = vld [vmem:[%s2 + $0x160] sm:$0xff]
    %v134 = vld [vmem:[%s2 + $0x168] sm:$0xff]
    %v135 = vld [vmem:[%s2 + $0x170] sm:$0xff]
    %v136 = vld [vmem:[%s2 + $0x178] sm:$0xff]
    %v137 = vld [vmem:[%s2 + $0x180] sm:$0xff]
    %v138 = vld [vmem:[%s2 + $0x188] sm:$0xff]
    %v139 = vld [vmem:[%s2 + $0x190] sm:$0xff]
    %v140 = vld [vmem:[%s2 + $0x198] sm:$0xff]
    %v141 = vld [vmem:[%s2 + $0x1a0] sm:$0xff]
    %v142 = vld [vmem:[%s2 + $0x1a8] sm:$0xff]
    %v143 = vld [vmem:[%s2 + $0x1b0] sm:$0xff]
    %v144 = vld [vmem:[%s2 + $0x1b8] sm:$0xff]
    %v145 = vld [vmem:[%s2 + $0x1c0] sm:$0xff]
    %v146 = vld [vmem:[%s2 + $0x1c8] sm:$0xff]
    %v147 = vld [vmem:[%s2 + $0x1d0] sm:$0xff]
    %v148 = vld [vmem:[%s2 + $0x1d8] sm:$0xff]
    %v149 = vld [vmem:[%s2 + $0x1e0] sm:$0xff]
    %v150 = vld [vmem:[%s2 + $0x1e8] sm:$0xff]
    %v151 = vld [vmem:[%s2 + $0x1f0] sm:$0xff]
    %v152 = vld [vmem:[%s2 + $0x1f8] sm:$0xff]
    %v153 = vld [vmem:[%s5] sm:$0xf]
    %v155 = vlaneseq
    %v156 = vshrl.u32 %v155, 7
    %v157 = vsub.s32 0, %v156
    %v158 = vrot.slane %v153, %v157
    %v159 = vlaneseq
    %v160 = vshrl.u32 %v159, 7
    %v161 = vsub.s32 1, %v160
    %v162 = vrot.slane %v153, %v161
    %v163 = vlaneseq
    %v164 = vshrl.u32 %v163, 7
    %v165 = vsub.s32 2, %v164
    %v166 = vrot.slane %v153, %v165
    %v167 = vlaneseq
    %v168 = vshrl.u32 %v167, 7
    %v169 = vsub.s32 3, %v168
    %v170 = vrot.slane %v153, %v169
    %175 = vmatprep.subr.mxu0 %v150
    %176 = vmatpush1.msra.mxu0 %v149
    %177 = vmatprep.subr.mxu0 %v146
    %178 = vmatpush1.msra.mxu0 %v145
    %179 = vmatprep.subr.mxu0 %v142
    %180 = vmatpush1.msra.mxu0 %v141
    %181 = vmatprep.subr.mxu0 %v138
    %182 = vmatpush1.msra.mxu0 %v137
    %183 = vmatprep.subr.mxu0 %v134
    %184 = vmatpush1.msra.mxu0 %v133
    %185 = vmatprep.subr.mxu0 %v130
    %186 = vmatpush1.msra.mxu0 %v129
    %187 = vmatprep.subr.mxu0 %v126
    %188 = vmatpush1.msra.mxu0 %v125
    %189 = vmatprep.subr.mxu0 %v122
    %190 = vmatpush1.msra.mxu0 %v121
    %191 = vmatprep.subr.mxu0 %v118
    %192 = vmatpush1.msra.mxu0 %v117
    %193 = vmatprep.subr.mxu0 %v114
    %194 = vmatpush1.msra.mxu0 %v113
    %195 = vmatprep.subr.mxu0 %v110
    %196 = vmatpush1.msra.mxu0 %v109
    %197 = vmatprep.subr.mxu0 %v106
    %198 = vmatpush1.msra.mxu0 %v105
    %199 = vmatprep.subr.mxu0 %v102
    %200 = vmatpush1.msra.mxu0 %v101
    %201 = vmatprep.subr.mxu0 %v98
    %202 = vmatpush1.msra.mxu0 %v97
    %203 = vmatprep.subr.mxu0 %v94
    %204 = vmatpush1.msra.mxu0 %v93
    %205 = vmatprep.subr.mxu0 %v90
    %206 = vmatpush1.msra.mxu0 %v89
    %207 = vmatprep.subr.mxu0 0.0
    %208 = vmatpush2.msra.mxu0 0.0
    %209 = vmatprep.subr.mxu0 0.0
    %210 = vmatpush2.msra.mxu0 0.0
    %211 = vmatprep.subr.mxu0 0.0
    %212 = vmatpush2.msra.mxu0 0.0
    %213 = vmatprep.subr.mxu0 0.0
    %214 = vmatpush2.msra.mxu0 0.0
    %215 = vmatprep.subr.mxu0 0.0
    %216 = vmatpush2.msra.mxu0 0.0
    %217 = vmatprep.subr.mxu0 0.0
    %218 = vmatpush2.msra.mxu0 0.0
    %219 = vmatprep.subr.mxu0 0.0
    %220 = vmatpush2.msra.mxu0 0.0
    %221 = vmatprep.subr.mxu0 0.0
    %222 = vmatpush2.msra.mxu0 0.0
    %223 = vmatprep.subr.mxu0 0.0
    %224 = vmatpush2.msra.mxu0 0.0
    %225 = vmatprep.subr.mxu0 0.0
    %226 = vmatpush2.msra.mxu0 0.0
    %227 = vmatprep.subr.mxu0 0.0
    %228 = vmatpush2.msra.mxu0 0.0
    %229 = vmatprep.subr.mxu0 0.0
    %230 = vmatpush2.msra.mxu0 0.0
    %231 = vmatprep.subr.mxu0 0.0
    %232 = vmatpush2.msra.mxu0 0.0
    %233 = vmatprep.subr.mxu0 0.0
    %234 = vmatpush2.msra.mxu0 0.0
    %235 = vmatprep.subr.mxu0 0.0
    %236 = vmatpush2.msra.mxu0 0.0
    %237 = vmatprep.subr.mxu0 0.0
    %238 = vmatpush2.msra.mxu0 0.0
    %239 = vmatprep.mubr.f32.mxu0 0.0
    %240 = vmatmul.mubr.f32.gmra.mxu0 %v81
    %v241 = vpop.f32.mrf.mxu0
    %v242 = vadd.f32 %v158, %v241
    %v243 = vpop.f32.mrf.mxu0
    %v244 = vadd.f32 %v162, %v243
    %245 = vmatprep.mubr.f32.mxu0 0.0
    %246 = vmatmul.mubr.f32.gmra.mxu0 %v82
    %v247 = vpop.f32.mrf.mxu0
    %v248 = vadd.f32 %v158, %v247
    %v249 = vpop.f32.mrf.mxu0
    %v250 = vadd.f32 %v162, %v249
    %251 = vmatprep.mubr.f32.mxu0 0.0
    %252 = vmatmul.mubr.f32.gmra.mxu0 %v83
    %v253 = vpop.f32.mrf.mxu0
    %v254 = vadd.f32 %v158, %v253
    %v255 = vpop.f32.mrf.mxu0
    %v256 = vadd.f32 %v162, %v255
    %257 = vmatprep.mubr.f32.mxu0 0.0
    %258 = vmatmul.mubr.f32.gmra.mxu0 %v84
    %v259 = vpop.f32.mrf.mxu0
    %v260 = vadd.f32 %v158, %v259
    %v261 = vpop.f32.mrf.mxu0
    %v262 = vadd.f32 %v162, %v261
    %263 = vmatprep.mubr.f32.mxu0 0.0
    %264 = vmatmul.mubr.f32.gmra.mxu0 %v85
    %v265 = vpop.f32.mrf.mxu0
    %v266 = vadd.f32 %v158, %v265
    %v267 = vpop.f32.mrf.mxu0
    %v268 = vadd.f32 %v162, %v267
    %269 = vmatprep.mubr.f32.mxu0 0.0
    %270 = vmatmul.mubr.f32.gmra.mxu0 %v86
    %v271 = vpop.f32.mrf.mxu0
    %v272 = vadd.f32 %v158, %v271
    %v273 = vpop.f32.mrf.mxu0
    %v274 = vadd.f32 %v162, %v273
    %275 = vmatprep.mubr.f32.mxu0 0.0
    %276 = vmatmul.mubr.f32.gmra.mxu0 %v87
    %v277 = vpop.f32.mrf.mxu0
    %v278 = vadd.f32 %v158, %v277
    %v279 = vpop.f32.mrf.mxu0
    %v280 = vadd.f32 %v162, %v279
    %281 = vmatprep.mubr.f32.mxu0 0.0
    %282 = vmatmul.mubr.f32.gmra.mxu0 %v88
    %v283 = vpop.f32.mrf.mxu0
    %v284 = vadd.f32 %v158, %v283
    %v285 = vpop.f32.mrf.mxu0
    %v286 = vadd.f32 %v162, %v285
    %287 = vdwg.mxu0
    %288 = vmatprep.subr.mxu0 %v152
    %289 = vmatpush1.msra.mxu0 %v151
    %290 = vmatprep.subr.mxu0 %v148
    %291 = vmatpush1.msra.mxu0 %v147
    %292 = vmatprep.subr.mxu0 %v144
    %293 = vmatpush1.msra.mxu0 %v143
    %294 = vmatprep.subr.mxu0 %v140
    %295 = vmatpush1.msra.mxu0 %v139
    %296 = vmatprep.subr.mxu0 %v136
    %297 = vmatpush1.msra.mxu0 %v135
    %298 = vmatprep.subr.mxu0 %v132
    %299 = vmatpush1.msra.mxu0 %v131
    %300 = vmatprep.subr.mxu0 %v128
    %301 = vmatpush1.msra.mxu0 %v127
    %302 = vmatprep.subr.mxu0 %v124
    %303 = vmatpush1.msra.mxu0 %v123
    %304 = vmatprep.subr.mxu0 %v120
    %305 = vmatpush1.msra.mxu0 %v119
    %306 = vmatprep.subr.mxu0 %v116
    %307 = vmatpush1.msra.mxu0 %v115
    %308 = vmatprep.subr.mxu0 %v112
    %309 = vmatpush1.msra.mxu0 %v111
    %310 = vmatprep.subr.mxu0 %v108
    %311 = vmatpush1.msra.mxu0 %v107
    %312 = vmatprep.subr.mxu0 %v104
    %313 = vmatpush1.msra.mxu0 %v103
    %314 = vmatprep.subr.mxu0 %v100
    %315 = vmatpush1.msra.mxu0 %v99
    %316 = vmatprep.subr.mxu0 %v96
    %317 = vmatpush1.msra.mxu0 %v95
    %318 = vmatprep.subr.mxu0 %v92
    %319 = vmatpush1.msra.mxu0 %v91
    %320 = vmatprep.subr.mxu0 0.0
    %321 = vmatpush2.msra.mxu0 0.0
    %322 = vmatprep.subr.mxu0 0.0
    %323 = vmatpush2.msra.mxu0 0.0
    %324 = vmatprep.subr.mxu0 0.0
    %325 = vmatpush2.msra.mxu0 0.0
    %326 = vmatprep.subr.mxu0 0.0
    %327 = vmatpush2.msra.mxu0 0.0
    %328 = vmatprep.subr.mxu0 0.0
    %329 = vmatpush2.msra.mxu0 0.0
    %330 = vmatprep.subr.mxu0 0.0
    %331 = vmatpush2.msra.mxu0 0.0
    %332 = vmatprep.subr.mxu0 0.0
    %333 = vmatpush2.msra.mxu0 0.0
    %334 = vmatprep.subr.mxu0 0.0
    %335 = vmatpush2.msra.mxu0 0.0
    %336 = vmatprep.subr.mxu0 0.0
    %337 = vmatpush2.msra.mxu0 0.0
    %338 = vmatprep.subr.mxu0 0.0
    %339 = vmatpush2.msra.mxu0 0.0
    %340 = vmatprep.subr.mxu0 0.0
    %341 = vmatpush2.msra.mxu0 0.0
    %342 = vmatprep.subr.mxu0 0.0
    %343 = vmatpush2.msra.mxu0 0.0
    %344 = vmatprep.subr.mxu0 0.0
    %345 = vmatpush2.msra.mxu0 0.0
    %346 = vmatprep.subr.mxu0 0.0
    %347 = vmatpush2.msra.mxu0 0.0
    %348 = vmatprep.subr.mxu0 0.0
    %349 = vmatpush2.msra.mxu0 0.0
    %350 = vmatprep.subr.mxu0 0.0
    %351 = vmatpush2.msra.mxu0 0.0
    %352 = vmatprep.mubr.f32.mxu0 0.0
    %353 = vmatmul.mubr.f32.gmra.mxu0 %v81
    %v354 = vpop.f32.mrf.mxu0
    %v355 = vadd.f32 %v166, %v354
    %v356 = vpop.f32.mrf.mxu0
    %v357 = vadd.f32 %v170, %v356
    %358 = vmatprep.mubr.f32.mxu0 0.0
    %359 = vmatmul.mubr.f32.gmra.mxu0 %v82
    %v360 = vpop.f32.mrf.mxu0
    %v361 = vadd.f32 %v166, %v360
    %v362 = vpop.f32.mrf.mxu0
    %v363 = vadd.f32 %v170, %v362
    %364 = vmatprep.mubr.f32.mxu0 0.0
    %365 = vmatmul.mubr.f32.gmra.mxu0 %v83
    %v366 = vpop.f32.mrf.mxu0
    %v367 = vadd.f32 %v166, %v366
    %v368 = vpop.f32.mrf.mxu0
    %v369 = vadd.f32 %v170, %v368
    %370 = vmatprep.mubr.f32.mxu0 0.0
    %371 = vmatmul.mubr.f32.gmra.mxu0 %v84
    %v372 = vpop.f32.mrf.mxu0
    %v373 = vadd.f32 %v166, %v372
    %v374 = vpop.f32.mrf.mxu0
    %v375 = vadd.f32 %v170, %v374
    %376 = vmatprep.mubr.f32.mxu0 0.0
    %377 = vmatmul.mubr.f32.gmra.mxu0 %v85
    %v378 = vpop.f32.mrf.mxu0
    %v379 = vadd.f32 %v166, %v378
    %v380 = vpop.f32.mrf.mxu0
    %v381 = vadd.f32 %v170, %v380
    %382 = vmatprep.mubr.f32.mxu0 0.0
    %383 = vmatmul.mubr.f32.gmra.mxu0 %v86
    %v384 = vpop.f32.mrf.mxu0
    %v385 = vadd.f32 %v166, %v384
    %v386 = vpop.f32.mrf.mxu0
    %v387 = vadd.f32 %v170, %v386
    %388 = vmatprep.mubr.f32.mxu0 0.0
    %389 = vmatmul.mubr.f32.gmra.mxu0 %v87
    %v390 = vpop.f32.mrf.mxu0
    %v391 = vadd.f32 %v166, %v390
    %v392 = vpop.f32.mrf.mxu0
    %v393 = vadd.f32 %v170, %v392
    %394 = vmatprep.mubr.f32.mxu0 0.0
    %395 = vmatmul.mubr.f32.gmra.mxu0 %v88
    %v396 = vpop.f32.mrf.mxu0
    %v397 = vadd.f32 %v166, %v396
    %v398 = vpop.f32.mrf.mxu0
    %v399 = vadd.f32 %v170, %v398
    %400 = vdwg.mxu0
    %401 = vst [vmem:[#allocation4] sm:$0xff] %v242
    %402 = vst [vmem:[#allocation4 + $0x8] sm:$0xff] %v244
    %403 = vst [vmem:[#allocation4 + $0x10] sm:$0xff] %v355
    %404 = vst [vmem:[#allocation4 + $0x18] sm:$0xff] %v357
    %405 = vst [vmem:[#allocation4 + $0x20] sm:$0xff] %v248
    %406 = vst [vmem:[#allocation4 + $0x28] sm:$0xff] %v250
    %407 = vst [vmem:[#allocation4 + $0x30] sm:$0xff] %v361
    %408 = vst [vmem:[#allocation4 + $0x38] sm:$0xff] %v363
    %409 = vst [vmem:[#allocation4 + $0x40] sm:$0xff] %v254
    %410 = vst [vmem:[#allocation4 + $0x48] sm:$0xff] %v256
    %411 = vst [vmem:[#allocation4 + $0x50] sm:$0xff] %v367
    %412 = vst [vmem:[#allocation4 + $0x58] sm:$0xff] %v369
    %413 = vst [vmem:[#allocation4 + $0x60] sm:$0xff] %v260
    %414 = vst [vmem:[#allocation4 + $0x68] sm:$0xff] %v262
    %415 = vst [vmem:[#allocation4 + $0x70] sm:$0xff] %v373
    %416 = vst [vmem:[#allocation4 + $0x78] sm:$0xff] %v375
    %417 = vst [vmem:[#allocation4 + $0x80] sm:$0xff] %v266
    %418 = vst [vmem:[#allocation4 + $0x88] sm:$0xff] %v268
    %419 = vst [vmem:[#allocation4 + $0x90] sm:$0xff] %v379
    %420 = vst [vmem:[#allocation4 + $0x98] sm:$0xff] %v381
    %421 = vst [vmem:[#allocation4 + $0xa0] sm:$0xff] %v272
    %422 = vst [vmem:[#allocation4 + $0xa8] sm:$0xff] %v274
    %423 = vst [vmem:[#allocation4 + $0xb0] sm:$0xff] %v385
    %424 = vst [vmem:[#allocation4 + $0xb8] sm:$0xff] %v387
    %425 = vst [vmem:[#allocation4 + $0xc0] sm:$0xff] %v278
    %426 = vst [vmem:[#allocation4 + $0xc8] sm:$0xff] %v280
    %427 = vst [vmem:[#allocation4 + $0xd0] sm:$0xff] %v391
    %428 = vst [vmem:[#allocation4 + $0xd8] sm:$0xff] %v393
    %429 = vst [vmem:[#allocation4 + $0xe0] sm:$0xff] %v284
    %430 = vst [vmem:[#allocation4 + $0xe8] sm:$0xff] %v286
    %431 = vst [vmem:[#allocation4 + $0xf0] sm:$0xff] %v397
    %432 = vst [vmem:[#allocation4 + $0xf8] sm:$0xff] %v399
    %v433 = vld [vmem:[%s70] sm:$0xff]
    %v434 = vld [vmem:[%s70 + $0x8] sm:$0xff]
    %v435 = vld [vmem:[%s70 + $0x10] sm:$0xff]
    %v436 = vld [vmem:[%s70 + $0x18] sm:$0xff]
    %v437 = vld [vmem:[%s70 + $0x20] sm:$0xff]
    %v438 = vld [vmem:[%s70 + $0x28] sm:$0xff]
    %v439 = vld [vmem:[%s70 + $0x30] sm:$0xff]
    %v440 = vld [vmem:[%s70 + $0x38] sm:$0xff]
    %v441 = vld [vmem:[#allocation6] sm:$0xff]
    %v442 = vld [vmem:[#allocation6 + $0x8] sm:$0xff]
    %v443 = vld [vmem:[#allocation6 + $0x10] sm:$0xff]
    %v444 = vld [vmem:[#allocation6 + $0x18] sm:$0xff]
    %v445 = vld [vmem:[#allocation6 + $0x20] sm:$0xff]
    %v446 = vld [vmem:[#allocation6 + $0x28] sm:$0xff]
    %v447 = vld [vmem:[#allocation6 + $0x30] sm:$0xff]
    %v448 = vld [vmem:[#allocation6 + $0x38] sm:$0xff]
    %v449 = vld [vmem:[#allocation6 + $0x40] sm:$0xff]
    %v450 = vld [vmem:[#allocation6 + $0x48] sm:$0xff]
    %v451 = vld [vmem:[#allocation6 + $0x50] sm:$0xff]
    %v452 = vld [vmem:[#allocation6 + $0x58] sm:$0xff]
    %v453 = vld [vmem:[#allocation6 + $0x60] sm:$0xff]
    %v454 = vld [vmem:[#allocation6 + $0x68] sm:$0xff]
    %v455 = vld [vmem:[#allocation6 + $0x70] sm:$0xff]
    %v456 = vld [vmem:[#allocation6 + $0x78] sm:$0xff]
    %v457 = vld [vmem:[#allocation6 + $0x80] sm:$0xff]
    %v458 = vld [vmem:[#allocation6 + $0x88] sm:$0xff]
    %v459 = vld [vmem:[#allocation6 + $0x90] sm:$0xff]
    %v460 = vld [vmem:[#allocation6 + $0x98] sm:$0xff]
    %v461 = vld [vmem:[#allocation6 + $0xa0] sm:$0xff]
    %v462 = vld [vmem:[#allocation6 + $0xa8] sm:$0xff]
    %v463 = vld [vmem:[#allocation6 + $0xb0] sm:$0xff]
    %v464 = vld [vmem:[#allocation6 + $0xb8] sm:$0xff]
    %v465 = vld [vmem:[#allocation6 + $0xc0] sm:$0xff]
    %v466 = vld [vmem:[#allocation6 + $0xc8] sm:$0xff]
    %v467 = vld [vmem:[#allocation6 + $0xd0] sm:$0xff]
    %v468 = vld [vmem:[#allocation6 + $0xd8] sm:$0xff]
    %v469 = vld [vmem:[#allocation6 + $0xe0] sm:$0xff]
    %v470 = vld [vmem:[#allocation6 + $0xe8] sm:$0xff]
    %v471 = vld [vmem:[#allocation6 + $0xf0] sm:$0xff]
    %v472 = vld [vmem:[#allocation6 + $0xf8] sm:$0xff]
    %v473 = vld [vmem:[#allocation6 + $0x100] sm:$0xff]
    %v474 = vld [vmem:[#allocation6 + $0x108] sm:$0xff]
    %v475 = vld [vmem:[#allocation6 + $0x110] sm:$0xff]
    %v476 = vld [vmem:[#allocation6 + $0x118] sm:$0xff]
    %v477 = vld [vmem:[#allocation6 + $0x120] sm:$0xff]
    %v478 = vld [vmem:[#allocation6 + $0x128] sm:$0xff]
    %v479 = vld [vmem:[#allocation6 + $0x130] sm:$0xff]
    %v480 = vld [vmem:[#allocation6 + $0x138] sm:$0xff]
    %v481 = vld [vmem:[#allocation6 + $0x140] sm:$0xff]
    %v482 = vld [vmem:[#allocation6 + $0x148] sm:$0xff]
    %v483 = vld [vmem:[#allocation6 + $0x150] sm:$0xff]
    %v484 = vld [vmem:[#allocation6 + $0x158] sm:$0xff]
    %v485 = vld [vmem:[#allocation6 + $0x160] sm:$0xff]
    %v486 = vld [vmem:[#allocation6 + $0x168] sm:$0xff]
    %v487 = vld [vmem:[#allocation6 + $0x170] sm:$0xff]
    %v488 = vld [vmem:[#allocation6 + $0x178] sm:$0xff]
    %v489 = vld [vmem:[#allocation6 + $0x180] sm:$0xff]
    %v490 = vld [vmem:[#allocation6 + $0x188] sm:$0xff]
    %v491 = vld [vmem:[#allocation6 + $0x190] sm:$0xff]
    %v492 = vld [vmem:[#allocation6 + $0x198] sm:$0xff]
    %v493 = vld [vmem:[#allocation6 + $0x1a0] sm:$0xff]
    %v494 = vld [vmem:[#allocation6 + $0x1a8] sm:$0xff]
    %v495 = vld [vmem:[#allocation6 + $0x1b0] sm:$0xff]
    %v496 = vld [vmem:[#allocation6 + $0x1b8] sm:$0xff]
    %v497 = vld [vmem:[#allocation6 + $0x1c0] sm:$0xff]
    %v498 = vld [vmem:[#allocation6 + $0x1c8] sm:$0xff]
    %v499 = vld [vmem:[#allocation6 + $0x1d0] sm:$0xff]
    %v500 = vld [vmem:[#allocation6 + $0x1d8] sm:$0xff]
    %v501 = vld [vmem:[#allocation6 + $0x1e0] sm:$0xff]
    %v502 = vld [vmem:[#allocation6 + $0x1e8] sm:$0xff]
    %v503 = vld [vmem:[#allocation6 + $0x1f0] sm:$0xff]
    %v504 = vld [vmem:[#allocation6 + $0x1f8] sm:$0xff]
    %v505 = vld [vmem:[%s5 + $0x4] sm:$0xf]
    %v507 = vlaneseq
    %v508 = vshrl.u32 %v507, 7
    %v509 = vsub.s32 0, %v508
    %v510 = vrot.slane %v505, %v509
    %v511 = vlaneseq
    %v512 = vshrl.u32 %v511, 7
    %v513 = vsub.s32 1, %v512
    %v514 = vrot.slane %v505, %v513
    %v515 = vlaneseq
    %v516 = vshrl.u32 %v515, 7
    %v517 = vsub.s32 2, %v516
    %v518 = vrot.slane %v505, %v517
    %v519 = vlaneseq
    %v520 = vshrl.u32 %v519, 7
    %v521 = vsub.s32 3, %v520
    %v522 = vrot.slane %v505, %v521
    %527 = vmatprep.subr.mxu0 %v502
    %528 = vmatpush1.msra.mxu0 %v501
    %529 = vmatprep.subr.mxu0 %v498
    %530 = vmatpush1.msra.mxu0 %v497
    %531 = vmatprep.subr.mxu0 %v494
    %532 = vmatpush1.msra.mxu0 %v493
    %533 = vmatprep.subr.mxu0 %v490
    %534 = vmatpush1.msra.mxu0 %v489
    %535 = vmatprep.subr.mxu0 %v486
    %536 = vmatpush1.msra.mxu0 %v485
    %537 = vmatprep.subr.mxu0 %v482
    %538 = vmatpush1.msra.mxu0 %v481
    %539 = vmatprep.subr.mxu0 %v478
    %540 = vmatpush1.msra.mxu0 %v477
    %541 = vmatprep.subr.mxu0 %v474
    %542 = vmatpush1.msra.mxu0 %v473
    %543 = vmatprep.subr.mxu0 %v470
    %544 = vmatpush1.msra.mxu0 %v469
    %545 = vmatprep.subr.mxu0 %v466
    %546 = vmatpush1.msra.mxu0 %v465
    %547 = vmatprep.subr.mxu0 %v462
    %548 = vmatpush1.msra.mxu0 %v461
    %549 = vmatprep.subr.mxu0 %v458
    %550 = vmatpush1.msra.mxu0 %v457
    %551 = vmatprep.subr.mxu0 %v454
    %552 = vmatpush1.msra.mxu0 %v453
    %553 = vmatprep.subr.mxu0 %v450
    %554 = vmatpush1.msra.mxu0 %v449
    %555 = vmatprep.subr.mxu0 %v446
    %556 = vmatpush1.msra.mxu0 %v445
    %557 = vmatprep.subr.mxu0 %v442
    %558 = vmatpush1.msra.mxu0 %v441
    %559 = vmatprep.subr.mxu0 0.0
    %560 = vmatpush2.msra.mxu0 0.0
    %561 = vmatprep.subr.mxu0 0.0
    %562 = vmatpush2.msra.mxu0 0.0
    %563 = vmatprep.subr.mxu0 0.0
    %564 = vmatpush2.msra.mxu0 0.0
    %565 = vmatprep.subr.mxu0 0.0
    %566 = vmatpush2.msra.mxu0 0.0
    %567 = vmatprep.subr.mxu0 0.0
    %568 = vmatpush2.msra.mxu0 0.0
    %569 = vmatprep.subr.mxu0 0.0
    %570 = vmatpush2.msra.mxu0 0.0
    %571 = vmatprep.subr.mxu0 0.0
    %572 = vmatpush2.msra.mxu0 0.0
    %573 = vmatprep.subr.mxu0 0.0
    %574 = vmatpush2.msra.mxu0 0.0
    %575 = vmatprep.subr.mxu0 0.0
    %576 = vmatpush2.msra.mxu0 0.0
    %577 = vmatprep.subr.mxu0 0.0
    %578 = vmatpush2.msra.mxu0 0.0
    %579 = vmatprep.subr.mxu0 0.0
    %580 = vmatpush2.msra.mxu0 0.0
    %581 = vmatprep.subr.mxu0 0.0
    %582 = vmatpush2.msra.mxu0 0.0
    %583 = vmatprep.subr.mxu0 0.0
    %584 = vmatpush2.msra.mxu0 0.0
    %585 = vmatprep.subr.mxu0 0.0
    %586 = vmatpush2.msra.mxu0 0.0
    %587 = vmatprep.subr.mxu0 0.0
    %588 = vmatpush2.msra.mxu0 0.0
    %589 = vmatprep.subr.mxu0 0.0
    %590 = vmatpush2.msra.mxu0 0.0
    %591 = vmatprep.mubr.f32.mxu0 0.0
    %592 = vmatmul.mubr.f32.gmra.mxu0 %v433
    %v593 = vpop.f32.mrf.mxu0
    %v594 = vadd.f32 %v510, %v593
    %v595 = vpop.f32.mrf.mxu0
    %v596 = vadd.f32 %v514, %v595
    %597 = vmatprep.mubr.f32.mxu0 0.0
    %598 = vmatmul.mubr.f32.gmra.mxu0 %v434
    %v599 = vpop.f32.mrf.mxu0
    %v600 = vadd.f32 %v510, %v599
    %v601 = vpop.f32.mrf.mxu0
    %v602 = vadd.f32 %v514, %v601
    %603 = vmatprep.mubr.f32.mxu0 0.0
    %604 = vmatmul.mubr.f32.gmra.mxu0 %v435
    %v605 = vpop.f32.mrf.mxu0
    %v606 = vadd.f32 %v510, %v605
    %v607 = vpop.f32.mrf.mxu0
    %v608 = vadd.f32 %v514, %v607
    %609 = vmatprep.mubr.f32.mxu0 0.0
    %610 = vmatmul.mubr.f32.gmra.mxu0 %v436
    %v611 = vpop.f32.mrf.mxu0
    %v612 = vadd.f32 %v510, %v611
    %v613 = vpop.f32.mrf.mxu0
    %v614 = vadd.f32 %v514, %v613
    %615 = vmatprep.mubr.f32.mxu0 0.0
    %616 = vmatmul.mubr.f32.gmra.mxu0 %v437
    %v617 = vpop.f32.mrf.mxu0
    %v618 = vadd.f32 %v510, %v617
    %v619 = vpop.f32.mrf.mxu0
    %v620 = vadd.f32 %v514, %v619
    %621 = vmatprep.mubr.f32.mxu0 0.0
    %622 = vmatmul.mubr.f32.gmra.mxu0 %v438
    %v623 = vpop.f32.mrf.mxu0
    %v624 = vadd.f32 %v510, %v623
    %v625 = vpop.f32.mrf.mxu0
    %v626 = vadd.f32 %v514, %v625
    %627 = vmatprep.mubr.f32.mxu0 0.0
    %628 = vmatmul.mubr.f32.gmra.mxu0 %v439
    %v629 = vpop.f32.mrf.mxu0
    %v630 = vadd.f32 %v510, %v629
    %v631 = vpop.f32.mrf.mxu0
    %v632 = vadd.f32 %v514, %v631
    %633 = vmatprep.mubr.f32.mxu0 0.0
    %634 = vmatmul.mubr.f32.gmra.mxu0 %v440
    %v635 = vpop.f32.mrf.mxu0
    %v636 = vadd.f32 %v510, %v635
    %v637 = vpop.f32.mrf.mxu0
    %v638 = vadd.f32 %v514, %v637
    %639 = vdwg.mxu0
    %640 = vmatprep.subr.mxu0 %v504
    %641 = vmatpush1.msra.mxu0 %v503
    %642 = vmatprep.subr.mxu0 %v500
    %643 = vmatpush1.msra.mxu0 %v499
    %644 = vmatprep.subr.mxu0 %v496
    %645 = vmatpush1.msra.mxu0 %v495
    %646 = vmatprep.subr.mxu0 %v492
    %647 = vmatpush1.msra.mxu0 %v491
    %648 = vmatprep.subr.mxu0 %v488
    %649 = vmatpush1.msra.mxu0 %v487
    %650 = vmatprep.subr.mxu0 %v484
    %651 = vmatpush1.msra.mxu0 %v483
    %652 = vmatprep.subr.mxu0 %v480
    %653 = vmatpush1.msra.mxu0 %v479
    %654 = vmatprep.subr.mxu0 %v476
    %655 = vmatpush1.msra.mxu0 %v475
    %656 = vmatprep.subr.mxu0 %v472
    %657 = vmatpush1.msra.mxu0 %v471
    %658 = vmatprep.subr.mxu0 %v468
    %659 = vmatpush1.msra.mxu0 %v467
    %660 = vmatprep.subr.mxu0 %v464
    %661 = vmatpush1.msra.mxu0 %v463
    %662 = vmatprep.subr.mxu0 %v460
    %663 = vmatpush1.msra.mxu0 %v459
    %664 = vmatprep.subr.mxu0 %v456
    %665 = vmatpush1.msra.mxu0 %v455
    %666 = vmatprep.subr.mxu0 %v452
    %667 = vmatpush1.msra.mxu0 %v451
    %668 = vmatprep.subr.mxu0 %v448
    %669 = vmatpush1.msra.mxu0 %v447
    %670 = vmatprep.subr.mxu0 %v444
    %671 = vmatpush1.msra.mxu0 %v443
    %672 = vmatprep.subr.mxu0 0.0
    %673 = vmatpush2.msra.mxu0 0.0
    %674 = vmatprep.subr.mxu0 0.0
    %675 = vmatpush2.msra.mxu0 0.0
    %676 = vmatprep.subr.mxu0 0.0
    %677 = vmatpush2.msra.mxu0 0.0
    %678 = vmatprep.subr.mxu0 0.0
    %679 = vmatpush2.msra.mxu0 0.0
    %680 = vmatprep.subr.mxu0 0.0
    %681 = vmatpush2.msra.mxu0 0.0
    %682 = vmatprep.subr.mxu0 0.0
    %683 = vmatpush2.msra.mxu0 0.0
    %684 = vmatprep.subr.mxu0 0.0
    %685 = vmatpush2.msra.mxu0 0.0
    %686 = vmatprep.subr.mxu0 0.0
    %687 = vmatpush2.msra.mxu0 0.0
    %688 = vmatprep.subr.mxu0 0.0
    %689 = vmatpush2.msra.mxu0 0.0
    %690 = vmatprep.subr.mxu0 0.0
    %691 = vmatpush2.msra.mxu0 0.0
    %692 = vmatprep.subr.mxu0 0.0
    %693 = vmatpush2.msra.mxu0 0.0
    %694 = vmatprep.subr.mxu0 0.0
    %695 = vmatpush2.msra.mxu0 0.0
    %696 = vmatprep.subr.mxu0 0.0
    %697 = vmatpush2.msra.mxu0 0.0
    %698 = vmatprep.subr.mxu0 0.0
    %699 = vmatpush2.msra.mxu0 0.0
    %700 = vmatprep.subr.mxu0 0.0
    %701 = vmatpush2.msra.mxu0 0.0
    %702 = vmatprep.subr.mxu0 0.0
    %703 = vmatpush2.msra.mxu0 0.0
    %704 = vmatprep.mubr.f32.mxu0 0.0
    %705 = vmatmul.mubr.f32.gmra.mxu0 %v433
    %v706 = vpop.f32.mrf.mxu0
    %v707 = vadd.f32 %v518, %v706
    %v708 = vpop.f32.mrf.mxu0
    %v709 = vadd.f32 %v522, %v708
    %710 = vmatprep.mubr.f32.mxu0 0.0
    %711 = vmatmul.mubr.f32.gmra.mxu0 %v434
    %v712 = vpop.f32.mrf.mxu0
    %v713 = vadd.f32 %v518, %v712
    %v714 = vpop.f32.mrf.mxu0
    %v715 = vadd.f32 %v522, %v714
    %716 = vmatprep.mubr.f32.mxu0 0.0
    %717 = vmatmul.mubr.f32.gmra.mxu0 %v435
    %v718 = vpop.f32.mrf.mxu0
    %v719 = vadd.f32 %v518, %v718
    %v720 = vpop.f32.mrf.mxu0
    %v721 = vadd.f32 %v522, %v720
    %722 = vmatprep.mubr.f32.mxu0 0.0
    %723 = vmatmul.mubr.f32.gmra.mxu0 %v436
    %v724 = vpop.f32.mrf.mxu0
    %v725 = vadd.f32 %v518, %v724
    %v726 = vpop.f32.mrf.mxu0
    %v727 = vadd.f32 %v522, %v726
    %728 = vmatprep.mubr.f32.mxu0 0.0
    %729 = vmatmul.mubr.f32.gmra.mxu0 %v437
    %v730 = vpop.f32.mrf.mxu0
    %v731 = vadd.f32 %v518, %v730
    %v732 = vpop.f32.mrf.mxu0
    %v733 = vadd.f32 %v522, %v732
    %734 = vmatprep.mubr.f32.mxu0 0.0
    %735 = vmatmul.mubr.f32.gmra.mxu0 %v438
    %v736 = vpop.f32.mrf.mxu0
    %v737 = vadd.f32 %v518, %v736
    %v738 = vpop.f32.mrf.mxu0
    %v739 = vadd.f32 %v522, %v738
    %740 = vmatprep.mubr.f32.mxu0 0.0
    %741 = vmatmul.mubr.f32.gmra.mxu0 %v439
    %v742 = vpop.f32.mrf.mxu0
    %v743 = vadd.f32 %v518, %v742
    %v744 = vpop.f32.mrf.mxu0
    %v745 = vadd.f32 %v522, %v744
    %746 = vmatprep.mubr.f32.mxu0 0.0
    %747 = vmatmul.mubr.f32.gmra.mxu0 %v440
    %v748 = vpop.f32.mrf.mxu0
    %v749 = vadd.f32 %v518, %v748
    %v750 = vpop.f32.mrf.mxu0
    %v751 = vadd.f32 %v522, %v750
    %752 = vdwg.mxu0
    %753 = vst [vmem:[#allocation5] sm:$0xff] %v594
    %754 = vst [vmem:[#allocation5 + $0x8] sm:$0xff] %v596
    %755 = vst [vmem:[#allocation5 + $0x10] sm:$0xff] %v707
    %756 = vst [vmem:[#allocation5 + $0x18] sm:$0xff] %v709
    %757 = vst [vmem:[#allocation5 + $0x20] sm:$0xff] %v600
    %758 = vst [vmem:[#allocation5 + $0x28] sm:$0xff] %v602
    %759 = vst [vmem:[#allocation5 + $0x30] sm:$0xff] %v713
    %760 = vst [vmem:[#allocation5 + $0x38] sm:$0xff] %v715
    %761 = vst [vmem:[#allocation5 + $0x40] sm:$0xff] %v606
    %762 = vst [vmem:[#allocation5 + $0x48] sm:$0xff] %v608
    %763 = vst [vmem:[#allocation5 + $0x50] sm:$0xff] %v719
    %764 = vst [vmem:[#allocation5 + $0x58] sm:$0xff] %v721
    %765 = vst [vmem:[#allocation5 + $0x60] sm:$0xff] %v612
    %766 = vst [vmem:[#allocation5 + $0x68] sm:$0xff] %v614
    %767 = vst [vmem:[#allocation5 + $0x70] sm:$0xff] %v725
    %768 = vst [vmem:[#allocation5 + $0x78] sm:$0xff] %v727
    %769 = vst [vmem:[#allocation5 + $0x80] sm:$0xff] %v618
    %770 = vst [vmem:[#allocation5 + $0x88] sm:$0xff] %v620
    %771 = vst [vmem:[#allocation5 + $0x90] sm:$0xff] %v731
    %772 = vst [vmem:[#allocation5 + $0x98] sm:$0xff] %v733
    %773 = vst [vmem:[#allocation5 + $0xa0] sm:$0xff] %v624
    %774 = vst [vmem:[#allocation5 + $0xa8] sm:$0xff] %v626
    %775 = vst [vmem:[#allocation5 + $0xb0] sm:$0xff] %v737
    %776 = vst [vmem:[#allocation5 + $0xb8] sm:$0xff] %v739
    %777 = vst [vmem:[#allocation5 + $0xc0] sm:$0xff] %v630
    %778 = vst [vmem:[#allocation5 + $0xc8] sm:$0xff] %v632
    %779 = vst [vmem:[#allocation5 + $0xd0] sm:$0xff] %v743
    %780 = vst [vmem:[#allocation5 + $0xd8] sm:$0xff] %v745
    %781 = vst [vmem:[#allocation5 + $0xe0] sm:$0xff] %v636
    %782 = vst [vmem:[#allocation5 + $0xe8] sm:$0xff] %v638
    %783 = vst [vmem:[#allocation5 + $0xf0] sm:$0xff] %v749
    %784 = vst [vmem:[#allocation5 + $0xf8] sm:$0xff] %v751
    %v785 = vld [vmem:[#allocation2] sm:$0xff]
    %v786 = vld [vmem:[#allocation2 + $0x8] sm:$0xff]
    %v787 = vld [vmem:[#allocation3] sm:$0xff]
    %v788 = vld [vmem:[#allocation3 + $0x8] sm:$0xff]
    %v789 = vld [vmem:[#allocation8] sm:$0xff]
    %v790 = vld [vmem:[#allocation8 + $0x8] sm:$0xff]
    %v791 = vld [vmem:[#allocation8 + $0x10] sm:$0xff]
    %v792 = vld [vmem:[#allocation8 + $0x18] sm:$0xff]
    %v793 = vld [vmem:[#allocation8 + $0x20] sm:$0xff]
    %v794 = vld [vmem:[#allocation8 + $0x28] sm:$0xff]
    %v795 = vld [vmem:[#allocation8 + $0x30] sm:$0xff]
    %v796 = vld [vmem:[#allocation8 + $0x38] sm:$0xff]
    %v797 = vld [vmem:[#allocation8 + $0x40] sm:$0xff]
    %v798 = vld [vmem:[#allocation8 + $0x48] sm:$0xff]
    %v799 = vld [vmem:[#allocation8 + $0x50] sm:$0xff]
    %v800 = vld [vmem:[#allocation8 + $0x58] sm:$0xff]
    %v801 = vld [vmem:[#allocation8 + $0x60] sm:$0xff]
    %v802 = vld [vmem:[#allocation8 + $0x68] sm:$0xff]
    %v803 = vld [vmem:[#allocation8 + $0x70] sm:$0xff]
    %v804 = vld [vmem:[#allocation8 + $0x78] sm:$0xff]
    %v805 = vld [vmem:[#allocation8 + $0x80] sm:$0xff]
    %v806 = vld [vmem:[#allocation8 + $0x88] sm:$0xff]
    %v807 = vld [vmem:[#allocation8 + $0x90] sm:$0xff]
    %v808 = vld [vmem:[#allocation8 + $0x98] sm:$0xff]
    %v809 = vld [vmem:[#allocation8 + $0xa0] sm:$0xff]
    %v810 = vld [vmem:[#allocation8 + $0xa8] sm:$0xff]
    %v811 = vld [vmem:[#allocation8 + $0xb0] sm:$0xff]
    %v812 = vld [vmem:[#allocation8 + $0xb8] sm:$0xff]
    %v813 = vld [vmem:[#allocation8 + $0xc0] sm:$0xff]
    %v814 = vld [vmem:[#allocation8 + $0xc8] sm:$0xff]
    %v815 = vld [vmem:[#allocation8 + $0xd0] sm:$0xff]
    %v816 = vld [vmem:[#allocation8 + $0xd8] sm:$0xff]
    %v817 = vld [vmem:[#allocation8 + $0xe0] sm:$0xff]
    %v818 = vld [vmem:[#allocation8 + $0xe8] sm:$0xff]
    %v819 = vld [vmem:[#allocation8 + $0xf0] sm:$0xff]
    %v820 = vld [vmem:[#allocation8 + $0xf8] sm:$0xff]
    %v821 = vld [vmem:[#allocation8 + $0x100] sm:$0xff]
    %v822 = vld [vmem:[#allocation8 + $0x108] sm:$0xff]
    %v823 = vld [vmem:[#allocation8 + $0x110] sm:$0xff]
    %v824 = vld [vmem:[#allocation8 + $0x118] sm:$0xff]
    %v825 = vld [vmem:[#allocation8 + $0x120] sm:$0xff]
    %v826 = vld [vmem:[#allocation8 + $0x128] sm:$0xff]
    %v827 = vld [vmem:[#allocation8 + $0x130] sm:$0xff]
    %v828 = vld [vmem:[#allocation8 + $0x138] sm:$0xff]
    %v829 = vld [vmem:[#allocation8 + $0x140] sm:$0xff]
    %v830 = vld [vmem:[#allocation8 + $0x148] sm:$0xff]
    %v831 = vld [vmem:[#allocation8 + $0x150] sm:$0xff]
    %v832 = vld [vmem:[#allocation8 + $0x158] sm:$0xff]
    %v833 = vld [vmem:[#allocation8 + $0x160] sm:$0xff]
    %v834 = vld [vmem:[#allocation8 + $0x168] sm:$0xff]
    %v835 = vld [vmem:[#allocation8 + $0x170] sm:$0xff]
    %v836 = vld [vmem:[#allocation8 + $0x178] sm:$0xff]
    %v837 = vld [vmem:[#allocation8 + $0x180] sm:$0xff]
    %v838 = vld [vmem:[#allocation8 + $0x188] sm:$0xff]
    %v839 = vld [vmem:[#allocation8 + $0x190] sm:$0xff]
    %v840 = vld [vmem:[#allocation8 + $0x198] sm:$0xff]
    %v841 = vld [vmem:[#allocation8 + $0x1a0] sm:$0xff]
    %v842 = vld [vmem:[#allocation8 + $0x1a8] sm:$0xff]
    %v843 = vld [vmem:[#allocation8 + $0x1b0] sm:$0xff]
    %v844 = vld [vmem:[#allocation8 + $0x1b8] sm:$0xff]
    %v845 = vld [vmem:[#allocation8 + $0x1c0] sm:$0xff]
    %v846 = vld [vmem:[#allocation8 + $0x1c8] sm:$0xff]
    %v847 = vld [vmem:[#allocation8 + $0x1d0] sm:$0xff]
    %v848 = vld [vmem:[#allocation8 + $0x1d8] sm:$0xff]
    %v849 = vld [vmem:[#allocation8 + $0x1e0] sm:$0xff]
    %v850 = vld [vmem:[#allocation8 + $0x1e8] sm:$0xff]
    %v851 = vld [vmem:[#allocation8 + $0x1f0] sm:$0xff]
    %v852 = vld [vmem:[#allocation8 + $0x1f8] sm:$0xff]
    %v853 = vld [vmem:[#allocation8 + $0x200] sm:$0xff]
    %v854 = vld [vmem:[#allocation8 + $0x208] sm:$0xff]
    %v855 = vld [vmem:[#allocation8 + $0x210] sm:$0xff]
    %v856 = vld [vmem:[#allocation8 + $0x218] sm:$0xff]
    %v857 = vld [vmem:[#allocation8 + $0x220] sm:$0xff]
    %v858 = vld [vmem:[#allocation8 + $0x228] sm:$0xff]
    %v859 = vld [vmem:[#allocation8 + $0x230] sm:$0xff]
    %v860 = vld [vmem:[#allocation8 + $0x238] sm:$0xff]
    %v861 = vld [vmem:[#allocation8 + $0x240] sm:$0xff]
    %v862 = vld [vmem:[#allocation8 + $0x248] sm:$0xff]
    %v863 = vld [vmem:[#allocation8 + $0x250] sm:$0xff]
    %v864 = vld [vmem:[#allocation8 + $0x258] sm:$0xff]
    %v865 = vld [vmem:[#allocation8 + $0x260] sm:$0xff]
    %v866 = vld [vmem:[#allocation8 + $0x268] sm:$0xff]
    %v867 = vld [vmem:[#allocation8 + $0x270] sm:$0xff]
    %v868 = vld [vmem:[#allocation8 + $0x278] sm:$0xff]
    %v869 = vld [vmem:[#allocation8 + $0x280] sm:$0xff]
    %v870 = vld [vmem:[#allocation8 + $0x288] sm:$0xff]
    %v871 = vld [vmem:[#allocation8 + $0x290] sm:$0xff]
    %v872 = vld [vmem:[#allocation8 + $0x298] sm:$0xff]
    %v873 = vld [vmem:[#allocation8 + $0x2a0] sm:$0xff]
    %v874 = vld [vmem:[#allocation8 + $0x2a8] sm:$0xff]
    %v875 = vld [vmem:[#allocation8 + $0x2b0] sm:$0xff]
    %v876 = vld [vmem:[#allocation8 + $0x2b8] sm:$0xff]
    %v877 = vld [vmem:[#allocation8 + $0x2c0] sm:$0xff]
    %v878 = vld [vmem:[#allocation8 + $0x2c8] sm:$0xff]
    %v879 = vld [vmem:[#allocation8 + $0x2d0] sm:$0xff]
    %v880 = vld [vmem:[#allocation8 + $0x2d8] sm:$0xff]
    %v881 = vld [vmem:[#allocation8 + $0x2e0] sm:$0xff]
    %v882 = vld [vmem:[#allocation8 + $0x2e8] sm:$0xff]
    %v883 = vld [vmem:[#allocation8 + $0x2f0] sm:$0xff]
    %v884 = vld [vmem:[#allocation8 + $0x2f8] sm:$0xff]
    %v885 = vld [vmem:[#allocation8 + $0x300] sm:$0xff]
    %v886 = vld [vmem:[#allocation8 + $0x308] sm:$0xff]
    %v887 = vld [vmem:[#allocation8 + $0x310] sm:$0xff]
    %v888 = vld [vmem:[#allocation8 + $0x318] sm:$0xff]
    %v889 = vld [vmem:[#allocation8 + $0x320] sm:$0xff]
    %v890 = vld [vmem:[#allocation8 + $0x328] sm:$0xff]
    %v891 = vld [vmem:[#allocation8 + $0x330] sm:$0xff]
    %v892 = vld [vmem:[#allocation8 + $0x338] sm:$0xff]
    %v893 = vld [vmem:[#allocation8 + $0x340] sm:$0xff]
    %v894 = vld [vmem:[#allocation8 + $0x348] sm:$0xff]
    %v895 = vld [vmem:[#allocation8 + $0x350] sm:$0xff]
    %v896 = vld [vmem:[#allocation8 + $0x358] sm:$0xff]
    %v897 = vld [vmem:[#allocation8 + $0x360] sm:$0xff]
    %v898 = vld [vmem:[#allocation8 + $0x368] sm:$0xff]
    %v899 = vld [vmem:[#allocation8 + $0x370] sm:$0xff]
    %v900 = vld [vmem:[#allocation8 + $0x378] sm:$0xff]
    %v901 = vld [vmem:[#allocation8 + $0x380] sm:$0xff]
    %v902 = vld [vmem:[#allocation8 + $0x388] sm:$0xff]
    %v903 = vld [vmem:[#allocation8 + $0x390] sm:$0xff]
    %v904 = vld [vmem:[#allocation8 + $0x398] sm:$0xff]
    %v905 = vld [vmem:[#allocation8 + $0x3a0] sm:$0xff]
    %v906 = vld [vmem:[#allocation8 + $0x3a8] sm:$0xff]
    %v907 = vld [vmem:[#allocation8 + $0x3b0] sm:$0xff]
    %v908 = vld [vmem:[#allocation8 + $0x3b8] sm:$0xff]
    %v909 = vld [vmem:[#allocation8 + $0x3c0] sm:$0xff]
    %v910 = vld [vmem:[#allocation8 + $0x3c8] sm:$0xff]
    %v911 = vld [vmem:[#allocation8 + $0x3d0] sm:$0xff]
    %v912 = vld [vmem:[#allocation8 + $0x3d8] sm:$0xff]
    %v913 = vld [vmem:[#allocation8 + $0x3e0] sm:$0xff]
    %v914 = vld [vmem:[#allocation8 + $0x3e8] sm:$0xff]
    %v915 = vld [vmem:[#allocation8 + $0x3f0] sm:$0xff]
    %v916 = vld [vmem:[#allocation8 + $0x3f8] sm:$0xff]
    %v917 = vld [vmem:[#allocation8 + $0x400] sm:$0xff]
    %v918 = vld [vmem:[#allocation8 + $0x408] sm:$0xff]
    %v919 = vld [vmem:[#allocation8 + $0x410] sm:$0xff]
    %v920 = vld [vmem:[#allocation8 + $0x418] sm:$0xff]
    %v921 = vld [vmem:[#allocation8 + $0x420] sm:$0xff]
    %v922 = vld [vmem:[#allocation8 + $0x428] sm:$0xff]
    %v923 = vld [vmem:[#allocation8 + $0x430] sm:$0xff]
    %v924 = vld [vmem:[#allocation8 + $0x438] sm:$0xff]
    %v925 = vld [vmem:[#allocation8 + $0x440] sm:$0xff]
    %v926 = vld [vmem:[#allocation8 + $0x448] sm:$0xff]
    %v927 = vld [vmem:[#allocation8 + $0x450] sm:$0xff]
    %v928 = vld [vmem:[#allocation8 + $0x458] sm:$0xff]
    %v929 = vld [vmem:[#allocation8 + $0x460] sm:$0xff]
    %v930 = vld [vmem:[#allocation8 + $0x468] sm:$0xff]
    %v931 = vld [vmem:[#allocation8 + $0x470] sm:$0xff]
    %v932 = vld [vmem:[#allocation8 + $0x478] sm:$0xff]
    %v933 = vld [vmem:[#allocation8 + $0x480] sm:$0xff]
    %v934 = vld [vmem:[#allocation8 + $0x488] sm:$0xff]
    %v935 = vld [vmem:[#allocation8 + $0x490] sm:$0xff]
    %v936 = vld [vmem:[#allocation8 + $0x498] sm:$0xff]
    %v937 = vld [vmem:[#allocation8 + $0x4a0] sm:$0xff]
    %v938 = vld [vmem:[#allocation8 + $0x4a8] sm:$0xff]
    %v939 = vld [vmem:[#allocation8 + $0x4b0] sm:$0xff]
    %v940 = vld [vmem:[#allocation8 + $0x4b8] sm:$0xff]
    %v941 = vld [vmem:[#allocation8 + $0x4c0] sm:$0xff]
    %v942 = vld [vmem:[#allocation8 + $0x4c8] sm:$0xff]
    %v943 = vld [vmem:[#allocation8 + $0x4d0] sm:$0xff]
    %v944 = vld [vmem:[#allocation8 + $0x4d8] sm:$0xff]
    %v945 = vld [vmem:[#allocation8 + $0x4e0] sm:$0xff]
    %v946 = vld [vmem:[#allocation8 + $0x4e8] sm:$0xff]
    %v947 = vld [vmem:[#allocation8 + $0x4f0] sm:$0xff]
    %v948 = vld [vmem:[#allocation8 + $0x4f8] sm:$0xff]
    %v949 = vld [vmem:[#allocation8 + $0x500] sm:$0xff]
    %v950 = vld [vmem:[#allocation8 + $0x508] sm:$0xff]
    %v951 = vld [vmem:[#allocation8 + $0x510] sm:$0xff]
    %v952 = vld [vmem:[#allocation8 + $0x518] sm:$0xff]
    %v953 = vld [vmem:[#allocation8 + $0x520] sm:$0xff]
    %v954 = vld [vmem:[#allocation8 + $0x528] sm:$0xff]
    %v955 = vld [vmem:[#allocation8 + $0x530] sm:$0xff]
    %v956 = vld [vmem:[#allocation8 + $0x538] sm:$0xff]
    %v957 = vld [vmem:[#allocation8 + $0x540] sm:$0xff]
    %v958 = vld [vmem:[#allocation8 + $0x548] sm:$0xff]
    %v959 = vld [vmem:[#allocation8 + $0x550] sm:$0xff]
    %v960 = vld [vmem:[#allocation8 + $0x558] sm:$0xff]
    %v961 = vld [vmem:[#allocation8 + $0x560] sm:$0xff]
    %v962 = vld [vmem:[#allocation8 + $0x568] sm:$0xff]
    %v963 = vld [vmem:[#allocation8 + $0x570] sm:$0xff]
    %v964 = vld [vmem:[#allocation8 + $0x578] sm:$0xff]
    %v965 = vld [vmem:[#allocation8 + $0x580] sm:$0xff]
    %v966 = vld [vmem:[#allocation8 + $0x588] sm:$0xff]
    %v967 = vld [vmem:[#allocation8 + $0x590] sm:$0xff]
    %v968 = vld [vmem:[#allocation8 + $0x598] sm:$0xff]
    %v969 = vld [vmem:[#allocation8 + $0x5a0] sm:$0xff]
    %v970 = vld [vmem:[#allocation8 + $0x5a8] sm:$0xff]
    %v971 = vld [vmem:[#allocation8 + $0x5b0] sm:$0xff]
    %v972 = vld [vmem:[#allocation8 + $0x5b8] sm:$0xff]
    %v973 = vld [vmem:[#allocation8 + $0x5c0] sm:$0xff]
    %v974 = vld [vmem:[#allocation8 + $0x5c8] sm:$0xff]
    %v975 = vld [vmem:[#allocation8 + $0x5d0] sm:$0xff]
    %v976 = vld [vmem:[#allocation8 + $0x5d8] sm:$0xff]
    %v977 = vld [vmem:[#allocation8 + $0x5e0] sm:$0xff]
    %v978 = vld [vmem:[#allocation8 + $0x5e8] sm:$0xff]
    %v979 = vld [vmem:[#allocation8 + $0x5f0] sm:$0xff]
    %v980 = vld [vmem:[#allocation8 + $0x5f8] sm:$0xff]
    %v981 = vld [vmem:[#allocation8 + $0x600] sm:$0xff]
    %v982 = vld [vmem:[#allocation8 + $0x608] sm:$0xff]
    %v983 = vld [vmem:[#allocation8 + $0x610] sm:$0xff]
    %v984 = vld [vmem:[#allocation8 + $0x618] sm:$0xff]
    %v985 = vld [vmem:[#allocation8 + $0x620] sm:$0xff]
    %v986 = vld [vmem:[#allocation8 + $0x628] sm:$0xff]
    %v987 = vld [vmem:[#allocation8 + $0x630] sm:$0xff]
    %v988 = vld [vmem:[#allocation8 + $0x638] sm:$0xff]
    %v989 = vld [vmem:[#allocation8 + $0x640] sm:$0xff]
    %v990 = vld [vmem:[#allocation8 + $0x648] sm:$0xff]
    %v991 = vld [vmem:[#allocation8 + $0x650] sm:$0xff]
    %v992 = vld [vmem:[#allocation8 + $0x658] sm:$0xff]
    %v993 = vld [vmem:[#allocation8 + $0x660] sm:$0xff]
    %v994 = vld [vmem:[#allocation8 + $0x668] sm:$0xff]
    %v995 = vld [vmem:[#allocation8 + $0x670] sm:$0xff]
    %v996 = vld [vmem:[#allocation8 + $0x678] sm:$0xff]
    %v997 = vld [vmem:[#allocation8 + $0x680] sm:$0xff]
    %v998 = vld [vmem:[#allocation8 + $0x688] sm:$0xff]
    %v999 = vld [vmem:[#allocation8 + $0x690] sm:$0xff]
    %v1000 = vld [vmem:[#allocation8 + $0x698] sm:$0xff]
    %v1001 = vld [vmem:[#allocation8 + $0x6a0] sm:$0xff]
    %v1002 = vld [vmem:[#allocation8 + $0x6a8] sm:$0xff]
    %v1003 = vld [vmem:[#allocation8 + $0x6b0] sm:$0xff]
    %v1004 = vld [vmem:[#allocation8 + $0x6b8] sm:$0xff]
    %v1005 = vld [vmem:[#allocation8 + $0x6c0] sm:$0xff]
    %v1006 = vld [vmem:[#allocation8 + $0x6c8] sm:$0xff]
    %v1007 = vld [vmem:[#allocation8 + $0x6d0] sm:$0xff]
    %v1008 = vld [vmem:[#allocation8 + $0x6d8] sm:$0xff]
    %v1009 = vld [vmem:[#allocation8 + $0x6e0] sm:$0xff]
    %v1010 = vld [vmem:[#allocation8 + $0x6e8] sm:$0xff]
    %v1011 = vld [vmem:[#allocation8 + $0x6f0] sm:$0xff]
    %v1012 = vld [vmem:[#allocation8 + $0x6f8] sm:$0xff]
    %v1013 = vld [vmem:[#allocation8 + $0x700] sm:$0xff]
    %v1014 = vld [vmem:[#allocation8 + $0x708] sm:$0xff]
    %v1015 = vld [vmem:[#allocation8 + $0x710] sm:$0xff]
    %v1016 = vld [vmem:[#allocation8 + $0x718] sm:$0xff]
    %v1017 = vld [vmem:[#allocation8 + $0x720] sm:$0xff]
    %v1018 = vld [vmem:[#allocation8 + $0x728] sm:$0xff]
    %v1019 = vld [vmem:[#allocation8 + $0x730] sm:$0xff]
    %v1020 = vld [vmem:[#allocation8 + $0x738] sm:$0xff]
    %v1021 = vld [vmem:[#allocation8 + $0x740] sm:$0xff]
    %v1022 = vld [vmem:[#allocation8 + $0x748] sm:$0xff]
    %v1023 = vld [vmem:[#allocation8 + $0x750] sm:$0xff]
    %v1024 = vld [vmem:[#allocation8 + $0x758] sm:$0xff]
    %v1025 = vld [vmem:[#allocation8 + $0x760] sm:$0xff]
    %v1026 = vld [vmem:[#allocation8 + $0x768] sm:$0xff]
    %v1027 = vld [vmem:[#allocation8 + $0x770] sm:$0xff]
    %v1028 = vld [vmem:[#allocation8 + $0x778] sm:$0xff]
    %v1029 = vld [vmem:[#allocation8 + $0x780] sm:$0xff]
    %v1030 = vld [vmem:[#allocation8 + $0x788] sm:$0xff]
    %v1031 = vld [vmem:[#allocation8 + $0x790] sm:$0xff]
    %v1032 = vld [vmem:[#allocation8 + $0x798] sm:$0xff]
    %v1033 = vld [vmem:[#allocation8 + $0x7a0] sm:$0xff]
    %v1034 = vld [vmem:[#allocation8 + $0x7a8] sm:$0xff]
    %v1035 = vld [vmem:[#allocation8 + $0x7b0] sm:$0xff]
    %v1036 = vld [vmem:[#allocation8 + $0x7b8] sm:$0xff]
    %v1037 = vld [vmem:[#allocation8 + $0x7c0] sm:$0xff]
    %v1038 = vld [vmem:[#allocation8 + $0x7c8] sm:$0xff]
    %v1039 = vld [vmem:[#allocation8 + $0x7d0] sm:$0xff]
    %v1040 = vld [vmem:[#allocation8 + $0x7d8] sm:$0xff]
    %v1041 = vld [vmem:[#allocation8 + $0x7e0] sm:$0xff]
    %v1042 = vld [vmem:[#allocation8 + $0x7e8] sm:$0xff]
    %v1043 = vld [vmem:[#allocation8 + $0x7f0] sm:$0xff]
    %v1044 = vld [vmem:[#allocation8 + $0x7f8] sm:$0xff]
    %1045 = vmatprep.subr.mxu0 %v910
    %1046 = vmatpush1.msra.mxu0 %v909
    %1047 = vmatprep.subr.mxu0 %v902
    %1048 = vmatpush1.msra.mxu0 %v901
    %1049 = vmatprep.subr.mxu0 %v894
    %1050 = vmatpush1.msra.mxu0 %v893
    %1051 = vmatprep.subr.mxu0 %v886
    %1052 = vmatpush1.msra.mxu0 %v885
    %1053 = vmatprep.subr.mxu0 %v878
    %1054 = vmatpush1.msra.mxu0 %v877
    %1055 = vmatprep.subr.mxu0 %v870
    %1056 = vmatpush1.msra.mxu0 %v869
    %1057 = vmatprep.subr.mxu0 %v862
    %1058 = vmatpush1.msra.mxu0 %v861
    %1059 = vmatprep.subr.mxu0 %v854
    %1060 = vmatpush1.msra.mxu0 %v853
    %1061 = vmatprep.subr.mxu0 %v846
    %1062 = vmatpush1.msra.mxu0 %v845
    %1063 = vmatprep.subr.mxu0 %v838
    %1064 = vmatpush1.msra.mxu0 %v837
    %1065 = vmatprep.subr.mxu0 %v830
    %1066 = vmatpush1.msra.mxu0 %v829
    %1067 = vmatprep.subr.mxu0 %v822
    %1068 = vmatpush1.msra.mxu0 %v821
    %1069 = vmatprep.subr.mxu0 %v814
    %1070 = vmatpush1.msra.mxu0 %v813
    %1071 = vmatprep.subr.mxu0 %v806
    %1072 = vmatpush1.msra.mxu0 %v805
    %1073 = vmatprep.subr.mxu0 %v798
    %1074 = vmatpush1.msra.mxu0 %v797
    %1075 = vmatprep.subr.mxu0 %v790
    %1076 = vmatpush1.msra.mxu0 %v789
    %1077 = vmatprep.subr.mxu0 %v1038
    %1078 = vmatpush2.msra.mxu0 %v1037
    %1079 = vmatprep.subr.mxu0 %v1030
    %1080 = vmatpush2.msra.mxu0 %v1029
    %1081 = vmatprep.subr.mxu0 %v1022
    %1082 = vmatpush2.msra.mxu0 %v1021
    %1083 = vmatprep.subr.mxu0 %v1014
    %1084 = vmatpush2.msra.mxu0 %v1013
    %1085 = vmatprep.subr.mxu0 %v1006
    %1086 = vmatpush2.msra.mxu0 %v1005
    %1087 = vmatprep.subr.mxu0 %v998
    %1088 = vmatpush2.msra.mxu0 %v997
    %1089 = vmatprep.subr.mxu0 %v990
    %1090 = vmatpush2.msra.mxu0 %v989
    %1091 = vmatprep.subr.mxu0 %v982
    %1092 = vmatpush2.msra.mxu0 %v981
    %1093 = vmatprep.subr.mxu0 %v974
    %1094 = vmatpush2.msra.mxu0 %v973
    %1095 = vmatprep.subr.mxu0 %v966
    %1096 = vmatpush2.msra.mxu0 %v965
    %1097 = vmatprep.subr.mxu0 %v958
    %1098 = vmatpush2.msra.mxu0 %v957
    %1099 = vmatprep.subr.mxu0 %v950
    %1100 = vmatpush2.msra.mxu0 %v949
    %1101 = vmatprep.subr.mxu0 %v942
    %1102 = vmatpush2.msra.mxu0 %v941
    %1103 = vmatprep.subr.mxu0 %v934
    %1104 = vmatpush2.msra.mxu0 %v933
    %1105 = vmatprep.subr.mxu0 %v926
    %1106 = vmatpush2.msra.mxu0 %v925
    %1107 = vmatprep.subr.mxu0 %v918
    %1108 = vmatpush2.msra.mxu0 %v917
    %1109 = vmatprep.mubr.f32.mxu0 %v786
    %1110 = vmatmul.mubr.f32.gmra.mxu0 %v785
    %v1111 = vpop.f32.mrf.mxu0
    %v1112 = vadd.f32 0.0, %v1111
    %v1113 = vpop.f32.mrf.mxu0
    %v1114 = vadd.f32 0.0, %v1113
    %1115 = vdwg.mxu0
    %1116 = vmatprep.subr.mxu0 %v912
    %1117 = vmatpush1.msra.mxu0 %v911
    %1118 = vmatprep.subr.mxu0 %v904
    %1119 = vmatpush1.msra.mxu0 %v903
    %1120 = vmatprep.subr.mxu0 %v896
    %1121 = vmatpush1.msra.mxu0 %v895
    %1122 = vmatprep.subr.mxu0 %v888
    %1123 = vmatpush1.msra.mxu0 %v887
    %1124 = vmatprep.subr.mxu0 %v880
    %1125 = vmatpush1.msra.mxu0 %v879
    %1126 = vmatprep.subr.mxu0 %v872
    %1127 = vmatpush1.msra.mxu0 %v871
    %1128 = vmatprep.subr.mxu0 %v864
    %1129 = vmatpush1.msra.mxu0 %v863
    %1130 = vmatprep.subr.mxu0 %v856
    %1131 = vmatpush1.msra.mxu0 %v855
    %1132 = vmatprep.subr.mxu0 %v848
    %1133 = vmatpush1.msra.mxu0 %v847
    %1134 = vmatprep.subr.mxu0 %v840
    %1135 = vmatpush1.msra.mxu0 %v839
    %1136 = vmatprep.subr.mxu0 %v832
    %1137 = vmatpush1.msra.mxu0 %v831
    %1138 = vmatprep.subr.mxu0 %v824
    %1139 = vmatpush1.msra.mxu0 %v823
    %1140 = vmatprep.subr.mxu0 %v816
    %1141 = vmatpush1.msra.mxu0 %v815
    %1142 = vmatprep.subr.mxu0 %v808
    %1143 = vmatpush1.msra.mxu0 %v807
    %1144 = vmatprep.subr.mxu0 %v800
    %1145 = vmatpush1.msra.mxu0 %v799
    %1146 = vmatprep.subr.mxu0 %v792
    %1147 = vmatpush1.msra.mxu0 %v791
    %1148 = vmatprep.subr.mxu0 %v1040
    %1149 = vmatpush2.msra.mxu0 %v1039
    %1150 = vmatprep.subr.mxu0 %v1032
    %1151 = vmatpush2.msra.mxu0 %v1031
    %1152 = vmatprep.subr.mxu0 %v1024
    %1153 = vmatpush2.msra.mxu0 %v1023
    %1154 = vmatprep.subr.mxu0 %v1016
    %1155 = vmatpush2.msra.mxu0 %v1015
    %1156 = vmatprep.subr.mxu0 %v1008
    %1157 = vmatpush2.msra.mxu0 %v1007
    %1158 = vmatprep.subr.mxu0 %v1000
    %1159 = vmatpush2.msra.mxu0 %v999
    %1160 = vmatprep.subr.mxu0 %v992
    %1161 = vmatpush2.msra.mxu0 %v991
    %1162 = vmatprep.subr.mxu0 %v984
    %1163 = vmatpush2.msra.mxu0 %v983
    %1164 = vmatprep.subr.mxu0 %v976
    %1165 = vmatpush2.msra.mxu0 %v975
    %1166 = vmatprep.subr.mxu0 %v968
    %1167 = vmatpush2.msra.mxu0 %v967
    %1168 = vmatprep.subr.mxu0 %v960
    %1169 = vmatpush2.msra.mxu0 %v959
    %1170 = vmatprep.subr.mxu0 %v952
    %1171 = vmatpush2.msra.mxu0 %v951
    %1172 = vmatprep.subr.mxu0 %v944
    %1173 = vmatpush2.msra.mxu0 %v943
    %1174 = vmatprep.subr.mxu0 %v936
    %1175 = vmatpush2.msra.mxu0 %v935
    %1176 = vmatprep.subr.mxu0 %v928
    %1177 = vmatpush2.msra.mxu0 %v927
    %1178 = vmatprep.subr.mxu0 %v920
    %1179 = vmatpush2.msra.mxu0 %v919
    %1180 = vmatprep.mubr.f32.mxu0 %v786
    %1181 = vmatmul.mubr.f32.gmra.mxu0 %v785
    %v1182 = vpop.f32.mrf.mxu0
    %v1183 = vadd.f32 0.0, %v1182
    %v1184 = vpop.f32.mrf.mxu0
    %v1185 = vadd.f32 0.0, %v1184
    %1186 = vdwg.mxu0
    %1187 = vmatprep.subr.mxu0 %v914
    %1188 = vmatpush1.msra.mxu0 %v913
    %1189 = vmatprep.subr.mxu0 %v906
    %1190 = vmatpush1.msra.mxu0 %v905
    %1191 = vmatprep.subr.mxu0 %v898
    %1192 = vmatpush1.msra.mxu0 %v897
    %1193 = vmatprep.subr.mxu0 %v890
    %1194 = vmatpush1.msra.mxu0 %v889
    %1195 = vmatprep.subr.mxu0 %v882
    %1196 = vmatpush1.msra.mxu0 %v881
    %1197 = vmatprep.subr.mxu0 %v874
    %1198 = vmatpush1.msra.mxu0 %v873
    %1199 = vmatprep.subr.mxu0 %v866
    %1200 = vmatpush1.msra.mxu0 %v865
    %1201 = vmatprep.subr.mxu0 %v858
    %1202 = vmatpush1.msra.mxu0 %v857
    %1203 = vmatprep.subr.mxu0 %v850
    %1204 = vmatpush1.msra.mxu0 %v849
    %1205 = vmatprep.subr.mxu0 %v842
    %1206 = vmatpush1.msra.mxu0 %v841
    %1207 = vmatprep.subr.mxu0 %v834
    %1208 = vmatpush1.msra.mxu0 %v833
    %1209 = vmatprep.subr.mxu0 %v826
    %1210 = vmatpush1.msra.mxu0 %v825
    %1211 = vmatprep.subr.mxu0 %v818
    %1212 = vmatpush1.msra.mxu0 %v817
    %1213 = vmatprep.subr.mxu0 %v810
    %1214 = vmatpush1.msra.mxu0 %v809
    %1215 = vmatprep.subr.mxu0 %v802
    %1216 = vmatpush1.msra.mxu0 %v801
    %1217 = vmatprep.subr.mxu0 %v794
    %1218 = vmatpush1.msra.mxu0 %v793
    %1219 = vmatprep.subr.mxu0 %v1042
    %1220 = vmatpush2.msra.mxu0 %v1041
    %1221 = vmatprep.subr.mxu0 %v1034
    %1222 = vmatpush2.msra.mxu0 %v1033
    %1223 = vmatprep.subr.mxu0 %v1026
    %1224 = vmatpush2.msra.mxu0 %v1025
    %1225 = vmatprep.subr.mxu0 %v1018
    %1226 = vmatpush2.msra.mxu0 %v1017
    %1227 = vmatprep.subr.mxu0 %v1010
    %1228 = vmatpush2.msra.mxu0 %v1009
    %1229 = vmatprep.subr.mxu0 %v1002
    %1230 = vmatpush2.msra.mxu0 %v1001
    %1231 = vmatprep.subr.mxu0 %v994
    %1232 = vmatpush2.msra.mxu0 %v993
    %1233 = vmatprep.subr.mxu0 %v986
    %1234 = vmatpush2.msra.mxu0 %v985
    %1235 = vmatprep.subr.mxu0 %v978
    %1236 = vmatpush2.msra.mxu0 %v977
    %1237 = vmatprep.subr.mxu0 %v970
    %1238 = vmatpush2.msra.mxu0 %v969
    %1239 = vmatprep.subr.mxu0 %v962
    %1240 = vmatpush2.msra.mxu0 %v961
    %1241 = vmatprep.subr.mxu0 %v954
    %1242 = vmatpush2.msra.mxu0 %v953
    %1243 = vmatprep.subr.mxu0 %v946
    %1244 = vmatpush2.msra.mxu0 %v945
    %1245 = vmatprep.subr.mxu0 %v938
    %1246 = vmatpush2.msra.mxu0 %v937
    %1247 = vmatprep.subr.mxu0 %v930
    %1248 = vmatpush2.msra.mxu0 %v929
    %1249 = vmatprep.subr.mxu0 %v922
    %1250 = vmatpush2.msra.mxu0 %v921
    %1251 = vmatprep.mubr.f32.mxu0 %v786
    %1252 = vmatmul.mubr.f32.gmra.mxu0 %v785
    %v1253 = vpop.f32.mrf.mxu0
    %v1254 = vadd.f32 0.0, %v1253
    %v1255 = vpop.f32.mrf.mxu0
    %v1256 = vadd.f32 0.0, %v1255
    %1257 = vdwg.mxu0
    %1258 = vmatprep.subr.mxu0 %v916
    %1259 = vmatpush1.msra.mxu0 %v915
    %1260 = vmatprep.subr.mxu0 %v908
    %1261 = vmatpush1.msra.mxu0 %v907
    %1262 = vmatprep.subr.mxu0 %v900
    %1263 = vmatpush1.msra.mxu0 %v899
    %1264 = vmatprep.subr.mxu0 %v892
    %1265 = vmatpush1.msra.mxu0 %v891
    %1266 = vmatprep.subr.mxu0 %v884
    %1267 = vmatpush1.msra.mxu0 %v883
    %1268 = vmatprep.subr.mxu0 %v876
    %1269 = vmatpush1.msra.mxu0 %v875
    %1270 = vmatprep.subr.mxu0 %v868
    %1271 = vmatpush1.msra.mxu0 %v867
    %1272 = vmatprep.subr.mxu0 %v860
    %1273 = vmatpush1.msra.mxu0 %v859
    %1274 = vmatprep.subr.mxu0 %v852
    %1275 = vmatpush1.msra.mxu0 %v851
    %1276 = vmatprep.subr.mxu0 %v844
    %1277 = vmatpush1.msra.mxu0 %v843
    %1278 = vmatprep.subr.mxu0 %v836
    %1279 = vmatpush1.msra.mxu0 %v835
    %1280 = vmatprep.subr.mxu0 %v828
    %1281 = vmatpush1.msra.mxu0 %v827
    %1282 = vmatprep.subr.mxu0 %v820
    %1283 = vmatpush1.msra.mxu0 %v819
    %1284 = vmatprep.subr.mxu0 %v812
    %1285 = vmatpush1.msra.mxu0 %v811
    %1286 = vmatprep.subr.mxu0 %v804
    %1287 = vmatpush1.msra.mxu0 %v803
    %1288 = vmatprep.subr.mxu0 %v796
    %1289 = vmatpush1.msra.mxu0 %v795
    %1290 = vmatprep.subr.mxu0 %v1044
    %1291 = vmatpush2.msra.mxu0 %v1043
    %1292 = vmatprep.subr.mxu0 %v1036
    %1293 = vmatpush2.msra.mxu0 %v1035
    %1294 = vmatprep.subr.mxu0 %v1028
    %1295 = vmatpush2.msra.mxu0 %v1027
    %1296 = vmatprep.subr.mxu0 %v1020
    %1297 = vmatpush2.msra.mxu0 %v1019
    %1298 = vmatprep.subr.mxu0 %v1012
    %1299 = vmatpush2.msra.mxu0 %v1011
    %1300 = vmatprep.subr.mxu0 %v1004
    %1301 = vmatpush2.msra.mxu0 %v1003
    %1302 = vmatprep.subr.mxu0 %v996
    %1303 = vmatpush2.msra.mxu0 %v995
    %1304 = vmatprep.subr.mxu0 %v988
    %1305 = vmatpush2.msra.mxu0 %v987
    %1306 = vmatprep.subr.mxu0 %v980
    %1307 = vmatpush2.msra.mxu0 %v979
    %1308 = vmatprep.subr.mxu0 %v972
    %1309 = vmatpush2.msra.mxu0 %v971
    %1310 = vmatprep.subr.mxu0 %v964
    %1311 = vmatpush2.msra.mxu0 %v963
    %1312 = vmatprep.subr.mxu0 %v956
    %1313 = vmatpush2.msra.mxu0 %v955
    %1314 = vmatprep.subr.mxu0 %v948
    %1315 = vmatpush2.msra.mxu0 %v947
    %1316 = vmatprep.subr.mxu0 %v940
    %1317 = vmatpush2.msra.mxu0 %v939
    %1318 = vmatprep.subr.mxu0 %v932
    %1319 = vmatpush2.msra.mxu0 %v931
    %1320 = vmatprep.subr.mxu0 %v924
    %1321 = vmatpush2.msra.mxu0 %v923
    %1322 = vmatprep.mubr.f32.mxu0 %v786
    %1323 = vmatmul.mubr.f32.gmra.mxu0 %v785
    %v1324 = vpop.f32.mrf.mxu0
    %v1325 = vadd.f32 0.0, %v1324
    %v1326 = vpop.f32.mrf.mxu0
    %v1327 = vadd.f32 0.0, %v1326
    %1328 = vdwg.mxu0
    %s1329 = smul.u32 0, 4
    %s1330 = smul.addr %s1329, 8
    %s1331 = scalar_lea.vmem [#allocation4], %s1330
    %v1332 = vld [vmem:[%s1331] sm:$0xff]
    %v1333 = vld [vmem:[%s1331 + $0x8] sm:$0xff]
    %v1334 = vld [vmem:[%s1331 + $0x10] sm:$0xff]
    %v1335 = vld [vmem:[%s1331 + $0x18] sm:$0xff]
    %v1336 = vadd.f32 %v1112, %v1332
    %v1337 = vadd.f32 %v1114, %v1333
    %v1338 = vadd.f32 %v1183, %v1334
    %v1339 = vadd.f32 %v1185, %v1335
    %s1340 = smul.u32 7, 4
    %s1341 = smul.addr %s1340, 8
    %s1342 = scalar_lea.vmem [#allocation5], %s1341
    %v1343 = vld [vmem:[%s1342] sm:$0xff]
    %v1344 = vld [vmem:[%s1342 + $0x8] sm:$0xff]
    %v1345 = vld [vmem:[%s1342 + $0x10] sm:$0xff]
    %v1346 = vld [vmem:[%s1342 + $0x18] sm:$0xff]
    %v1347 = vadd.f32 %v1254, %v1343
    %v1348 = vadd.f32 %v1256, %v1344
    %v1349 = vadd.f32 %v1325, %v1345
    %v1350 = vadd.f32 %v1327, %v1346
    %v1351 = vxor.u32 %v1336, 2147483648
    %v1352 = vmul.f32 %v1351, 1.442695
    %v1353 = vpow.pop %v1352
    %v1354 = vadd.f32 %v1353, 1.0
    %v1355 = vrcp.pop %v1354
    %v1356 = vmul.f32 1.0, %v1355
    %v1357 = vxor.u32 %v1337, 2147483648
    %v1358 = vmul.f32 %v1357, 1.442695
    %v1359 = vpow.pop %v1358
    %v1360 = vadd.f32 %v1359, 1.0
    %v1361 = vrcp.pop %v1360
    %v1362 = vmul.f32 1.0, %v1361
    %v1363 = vtanh.pop %v1338
    %v1364 = vxor.u32 %v1339, 2147483648
    %v1365 = vmul.f32 %v1364, 1.442695
    %v1366 = vpow.pop %v1365
    %v1367 = vadd.f32 %v1366, 1.0
    %v1368 = vrcp.pop %v1367
    %v1369 = vmul.f32 1.0, %v1368
    %v1370 = vmul.f32 %v1362, %v787
    %v1371 = vmul.f32 %v1356, %v1363
    %v1372 = vadd.f32 %v1370, %v1371
    %v1373 = vtanh.pop %v1372
    %v1374 = vmul.f32 %v1369, %v1373
    %v1375 = vxor.u32 %v1347, 2147483648
    %v1376 = vmul.f32 %v1375, 1.442695
    %v1377 = vpow.pop %v1376
    %v1378 = vadd.f32 %v1377, 1.0
    %v1379 = vrcp.pop %v1378
    %v1380 = vmul.f32 1.0, %v1379
    %v1381 = vxor.u32 %v1348, 2147483648
    %v1382 = vmul.f32 %v1381, 1.442695
    %v1383 = vpow.pop %v1382
    %v1384 = vadd.f32 %v1383, 1.0
    %v1385 = vrcp.pop %v1384
    %v1386 = vmul.f32 1.0, %v1385
    %v1387 = vtanh.pop %v1349
    %v1388 = vxor.u32 %v1350, 2147483648
    %v1389 = vmul.f32 %v1388, 1.442695
    %v1390 = vpow.pop %v1389
    %v1391 = vadd.f32 %v1390, 1.0
    %v1392 = vrcp.pop %v1391
    %v1393 = vmul.f32 1.0, %v1392
    %v1394 = vmul.f32 %v1386, %v788
    %v1395 = vmul.f32 %v1380, %v1387
    %v1396 = vadd.f32 %v1394, %v1395
    %v1397 = vtanh.pop %v1396
    %v1398 = vmul.f32 %v1393, %v1397
    %1399 = vmatprep.subr.mxu0 %v910
    %1400 = vmatpush1.msra.mxu0 %v909
    %1401 = vmatprep.subr.mxu0 %v902
    %1402 = vmatpush1.msra.mxu0 %v901
    %1403 = vmatprep.subr.mxu0 %v894
    %1404 = vmatpush1.msra.mxu0 %v893
    %1405 = vmatprep.subr.mxu0 %v886
    %1406 = vmatpush1.msra.mxu0 %v885
    %1407 = vmatprep.subr.mxu0 %v878
    %1408 = vmatpush1.msra.mxu0 %v877
    %1409 = vmatprep.subr.mxu0 %v870
    %1410 = vmatpush1.msra.mxu0 %v869
    %1411 = vmatprep.subr.mxu0 %v862
    %1412 = vmatpush1.msra.mxu0 %v861
    %1413 = vmatprep.subr.mxu0 %v854
    %1414 = vmatpush1.msra.mxu0 %v853
    %1415 = vmatprep.subr.mxu0 %v846
    %1416 = vmatpush1.msra.mxu0 %v845
    %1417 = vmatprep.subr.mxu0 %v838
    %1418 = vmatpush1.msra.mxu0 %v837
    %1419 = vmatprep.subr.mxu0 %v830
    %1420 = vmatpush1.msra.mxu0 %v829
    %1421 = vmatprep.subr.mxu0 %v822
    %1422 = vmatpush1.msra.mxu0 %v821
    %1423 = vmatprep.subr.mxu0 %v814
    %1424 = vmatpush1.msra.mxu0 %v813
    %1425 = vmatprep.subr.mxu0 %v806
    %1426 = vmatpush1.msra.mxu0 %v805
    %1427 = vmatprep.subr.mxu0 %v798
    %1428 = vmatpush1.msra.mxu0 %v797
    %1429 = vmatprep.subr.mxu0 %v790
    %1430 = vmatpush1.msra.mxu0 %v789
    %1431 = vmatprep.subr.mxu0 %v1038
    %1432 = vmatpush2.msra.mxu0 %v1037
    %1433 = vmatprep.subr.mxu0 %v1030
    %1434 = vmatpush2.msra.mxu0 %v1029
    %1435 = vmatprep.subr.mxu0 %v1022
    %1436 = vmatpush2.msra.mxu0 %v1021
    %1437 = vmatprep.subr.mxu0 %v1014
    %1438 = vmatpush2.msra.mxu0 %v1013
    %1439 = vmatprep.subr.mxu0 %v1006
    %1440 = vmatpush2.msra.mxu0 %v1005
    %1441 = vmatprep.subr.mxu0 %v998
    %1442 = vmatpush2.msra.mxu0 %v997
    %1443 = vmatprep.subr.mxu0 %v990
    %1444 = vmatpush2.msra.mxu0 %v989
    %1445 = vmatprep.subr.mxu0 %v982
    %1446 = vmatpush2.msra.mxu0 %v981
    %1447 = vmatprep.subr.mxu0 %v974
    %1448 = vmatpush2.msra.mxu0 %v973
    %1449 = vmatprep.subr.mxu0 %v966
    %1450 = vmatpush2.msra.mxu0 %v965
    %1451 = vmatprep.subr.mxu0 %v958
    %1452 = vmatpush2.msra.mxu0 %v957
    %1453 = vmatprep.subr.mxu0 %v950
    %1454 = vmatpush2.msra.mxu0 %v949
    %1455 = vmatprep.subr.mxu0 %v942
    %1456 = vmatpush2.msra.mxu0 %v941
    %1457 = vmatprep.subr.mxu0 %v934
    %1458 = vmatpush2.msra.mxu0 %v933
    %1459 = vmatprep.subr.mxu0 %v926
    %1460 = vmatpush2.msra.mxu0 %v925
    %1461 = vmatprep.subr.mxu0 %v918
    %1462 = vmatpush2.msra.mxu0 %v917
    %1463 = vmatprep.mubr.f32.mxu0 %v1398
    %1464 = vmatmul.mubr.f32.gmra.mxu0 %v1374
    %v1465 = vpop.f32.mrf.mxu0
    %v1466 = vadd.f32 0.0, %v1465
    %v1467 = vpop.f32.mrf.mxu0
    %v1468 = vadd.f32 0.0, %v1467
    %1469 = vdwg.mxu0
    %1470 = vmatprep.subr.mxu0 %v912
    %1471 = vmatpush1.msra.mxu0 %v911
    %1472 = vmatprep.subr.mxu0 %v904
    %1473 = vmatpush1.msra.mxu0 %v903
    %1474 = vmatprep.subr.mxu0 %v896
    %1475 = vmatpush1.msra.mxu0 %v895
    %1476 = vmatprep.subr.mxu0 %v888
    %1477 = vmatpush1.msra.mxu0 %v887
    %1478 = vmatprep.subr.mxu0 %v880
    %1479 = vmatpush1.msra.mxu0 %v879
    %1480 = vmatprep.subr.mxu0 %v872
    %1481 = vmatpush1.msra.mxu0 %v871
    %1482 = vmatprep.subr.mxu0 %v864
    %1483 = vmatpush1.msra.mxu0 %v863
    %1484 = vmatprep.subr.mxu0 %v856
    %1485 = vmatpush1.msra.mxu0 %v855
    %1486 = vmatprep.subr.mxu0 %v848
    %1487 = vmatpush1.msra.mxu0 %v847
    %1488 = vmatprep.subr.mxu0 %v840
    %1489 = vmatpush1.msra.mxu0 %v839
    %1490 = vmatprep.subr.mxu0 %v832
    %1491 = vmatpush1.msra.mxu0 %v831
    %1492 = vmatprep.subr.mxu0 %v824
    %1493 = vmatpush1.msra.mxu0 %v823
    %1494 = vmatprep.subr.mxu0 %v816
    %1495 = vmatpush1.msra.mxu0 %v815
    %1496 = vmatprep.subr.mxu0 %v808
    %1497 = vmatpush1.msra.mxu0 %v807
    %1498 = vmatprep.subr.mxu0 %v800
    %1499 = vmatpush1.msra.mxu0 %v799
    %1500 = vmatprep.subr.mxu0 %v792
    %1501 = vmatpush1.msra.mxu0 %v791
    %1502 = vmatprep.subr.mxu0 %v1040
    %1503 = vmatpush2.msra.mxu0 %v1039
    %1504 = vmatprep.subr.mxu0 %v1032
    %1505 = vmatpush2.msra.mxu0 %v1031
    %1506 = vmatprep.subr.mxu0 %v1024
    %1507 = vmatpush2.msra.mxu0 %v1023
    %1508 = vmatprep.subr.mxu0 %v1016
    %1509 = vmatpush2.msra.mxu0 %v1015
    %1510 = vmatprep.subr.mxu0 %v1008
    %1511 = vmatpush2.msra.mxu0 %v1007
    %1512 = vmatprep.subr.mxu0 %v1000
    %1513 = vmatpush2.msra.mxu0 %v999
    %1514 = vmatprep.subr.mxu0 %v992
    %1515 = vmatpush2.msra.mxu0 %v991
    %1516 = vmatprep.subr.mxu0 %v984
    %1517 = vmatpush2.msra.mxu0 %v983
    %1518 = vmatprep.subr.mxu0 %v976
    %1519 = vmatpush2.msra.mxu0 %v975
    %1520 = vmatprep.subr.mxu0 %v968
    %1521 = vmatpush2.msra.mxu0 %v967
    %1522 = vmatprep.subr.mxu0 %v960
    %1523 = vmatpush2.msra.mxu0 %v959
    %1524 = vmatprep.subr.mxu0 %v952
    %1525 = vmatpush2.msra.mxu0 %v951
    %1526 = vmatprep.subr.mxu0 %v944
    %1527 = vmatpush2.msra.mxu0 %v943
    %1528 = vmatprep.subr.mxu0 %v936
    %1529 = vmatpush2.msra.mxu0 %v935
    %1530 = vmatprep.subr.mxu0 %v928
    %1531 = vmatpush2.msra.mxu0 %v927
    %1532 = vmatprep.subr.mxu0 %v920
    %1533 = vmatpush2.msra.mxu0 %v919
    %1534 = vmatprep.mubr.f32.mxu0 %v1398
    %1535 = vmatmul.mubr.f32.gmra.mxu0 %v1374
    %v1536 = vpop.f32.mrf.mxu0
    %v1537 = vadd.f32 0.0, %v1536
    %v1538 = vpop.f32.mrf.mxu0
    %v1539 = vadd.f32 0.0, %v1538
    %1540 = vdwg.mxu0
    %1541 = vmatprep.subr.mxu0 %v914
    %1542 = vmatpush1.msra.mxu0 %v913
    %1543 = vmatprep.subr.mxu0 %v906
    %1544 = vmatpush1.msra.mxu0 %v905
    %1545 = vmatprep.subr.mxu0 %v898
    %1546 = vmatpush1.msra.mxu0 %v897
    %1547 = vmatprep.subr.mxu0 %v890
    %1548 = vmatpush1.msra.mxu0 %v889
    %1549 = vmatprep.subr.mxu0 %v882
    %1550 = vmatpush1.msra.mxu0 %v881
    %1551 = vmatprep.subr.mxu0 %v874
    %1552 = vmatpush1.msra.mxu0 %v873
    %1553 = vmatprep.subr.mxu0 %v866
    %1554 = vmatpush1.msra.mxu0 %v865
    %1555 = vmatprep.subr.mxu0 %v858
    %1556 = vmatpush1.msra.mxu0 %v857
    %1557 = vmatprep.subr.mxu0 %v850
    %1558 = vmatpush1.msra.mxu0 %v849
    %1559 = vmatprep.subr.mxu0 %v842
    %1560 = vmatpush1.msra.mxu0 %v841
    %1561 = vmatprep.subr.mxu0 %v834
    %1562 = vmatpush1.msra.mxu0 %v833
    %1563 = vmatprep.subr.mxu0 %v826
    %1564 = vmatpush1.msra.mxu0 %v825
    %1565 = vmatprep.subr.mxu0 %v818
    %1566 = vmatpush1.msra.mxu0 %v817
    %1567 = vmatprep.subr.mxu0 %v810
    %1568 = vmatpush1.msra.mxu0 %v809
    %1569 = vmatprep.subr.mxu0 %v802
    %1570 = vmatpush1.msra.mxu0 %v801
    %1571 = vmatprep.subr.mxu0 %v794
    %1572 = vmatpush1.msra.mxu0 %v793
    %1573 = vmatprep.subr.mxu0 %v1042
    %1574 = vmatpush2.msra.mxu0 %v1041
    %1575 = vmatprep.subr.mxu0 %v1034
    %1576 = vmatpush2.msra.mxu0 %v1033
    %1577 = vmatprep.subr.mxu0 %v1026
    %1578 = vmatpush2.msra.mxu0 %v1025
    %1579 = vmatprep.subr.mxu0 %v1018
    %1580 = vmatpush2.msra.mxu0 %v1017
    %1581 = vmatprep.subr.mxu0 %v1010
    %1582 = vmatpush2.msra.mxu0 %v1009
    %1583 = vmatprep.subr.mxu0 %v1002
    %1584 = vmatpush2.msra.mxu0 %v1001
    %1585 = vmatprep.subr.mxu0 %v994
    %1586 = vmatpush2.msra.mxu0 %v993
    %1587 = vmatprep.subr.mxu0 %v986
    %1588 = vmatpush2.msra.mxu0 %v985
    %1589 = vmatprep.subr.mxu0 %v978
    %1590 = vmatpush2.msra.mxu0 %v977
    %1591 = vmatprep.subr.mxu0 %v970
    %1592 = vmatpush2.msra.mxu0 %v969
    %1593 = vmatprep.subr.mxu0 %v962
    %1594 = vmatpush2.msra.mxu0 %v961
    %1595 = vmatprep.subr.mxu0 %v954
    %1596 = vmatpush2.msra.mxu0 %v953
    %1597 = vmatprep.subr.mxu0 %v946
    %1598 = vmatpush2.msra.mxu0 %v945
    %1599 = vmatprep.subr.mxu0 %v938
    %1600 = vmatpush2.msra.mxu0 %v937
    %1601 = vmatprep.subr.mxu0 %v930
    %1602 = vmatpush2.msra.mxu0 %v929
    %1603 = vmatprep.subr.mxu0 %v922
    %1604 = vmatpush2.msra.mxu0 %v921
    %1605 = vmatprep.mubr.f32.mxu0 %v1398
    %1606 = vmatmul.mubr.f32.gmra.mxu0 %v1374
    %v1607 = vpop.f32.mrf.mxu0
    %v1608 = vadd.f32 0.0, %v1607
    %v1609 = vpop.f32.mrf.mxu0
    %v1610 = vadd.f32 0.0, %v1609
    %1611 = vdwg.mxu0
    %1612 = vmatprep.subr.mxu0 %v916
    %1613 = vmatpush1.msra.mxu0 %v915
    %1614 = vmatprep.subr.mxu0 %v908
    %1615 = vmatpush1.msra.mxu0 %v907
    %1616 = vmatprep.subr.mxu0 %v900
    %1617 = vmatpush1.msra.mxu0 %v899
    %1618 = vmatprep.subr.mxu0 %v892
    %1619 = vmatpush1.msra.mxu0 %v891
    %1620 = vmatprep.subr.mxu0 %v884
    %1621 = vmatpush1.msra.mxu0 %v883
    %1622 = vmatprep.subr.mxu0 %v876
    %1623 = vmatpush1.msra.mxu0 %v875
    %1624 = vmatprep.subr.mxu0 %v868
    %1625 = vmatpush1.msra.mxu0 %v867
    %1626 = vmatprep.subr.mxu0 %v860
    %1627 = vmatpush1.msra.mxu0 %v859
    %1628 = vmatprep.subr.mxu0 %v852
    %1629 = vmatpush1.msra.mxu0 %v851
    %1630 = vmatprep.subr.mxu0 %v844
    %1631 = vmatpush1.msra.mxu0 %v843
    %1632 = vmatprep.subr.mxu0 %v836
    %1633 = vmatpush1.msra.mxu0 %v835
    %1634 = vmatprep.subr.mxu0 %v828
    %1635 = vmatpush1.msra.mxu0 %v827
    %1636 = vmatprep.subr.mxu0 %v820
    %1637 = vmatpush1.msra.mxu0 %v819
    %1638 = vmatprep.subr.mxu0 %v812
    %1639 = vmatpush1.msra.mxu0 %v811
    %1640 = vmatprep.subr.mxu0 %v804
    %1641 = vmatpush1.msra.mxu0 %v803
    %1642 = vmatprep.subr.mxu0 %v796
    %1643 = vmatpush1.msra.mxu0 %v795
    %1644 = vmatprep.subr.mxu0 %v1044
    %1645 = vmatpush2.msra.mxu0 %v1043
    %1646 = vmatprep.subr.mxu0 %v1036
    %1647 = vmatpush2.msra.mxu0 %v1035
    %1648 = vmatprep.subr.mxu0 %v1028
    %1649 = vmatpush2.msra.mxu0 %v1027
    %1650 = vmatprep.subr.mxu0 %v1020
    %1651 = vmatpush2.msra.mxu0 %v1019
    %1652 = vmatprep.subr.mxu0 %v1012
    %1653 = vmatpush2.msra.mxu0 %v1011
    %1654 = vmatprep.subr.mxu0 %v1004
    %1655 = vmatpush2.msra.mxu0 %v1003
    %1656 = vmatprep.subr.mxu0 %v996
    %1657 = vmatpush2.msra.mxu0 %v995
    %1658 = vmatprep.subr.mxu0 %v988
    %1659 = vmatpush2.msra.mxu0 %v987
    %1660 = vmatprep.subr.mxu0 %v980
    %1661 = vmatpush2.msra.mxu0 %v979
    %1662 = vmatprep.subr.mxu0 %v972
    %1663 = vmatpush2.msra.mxu0 %v971
    %1664 = vmatprep.subr.mxu0 %v964
    %1665 = vmatpush2.msra.mxu0 %v963
    %1666 = vmatprep.subr.mxu0 %v956
    %1667 = vmatpush2.msra.mxu0 %v955
    %1668 = vmatprep.subr.mxu0 %v948
    %1669 = vmatpush2.msra.mxu0 %v947
    %1670 = vmatprep.subr.mxu0 %v940
    %1671 = vmatpush2.msra.mxu0 %v939
    %1672 = vmatprep.subr.mxu0 %v932
    %1673 = vmatpush2.msra.mxu0 %v931
    %1674 = vmatprep.subr.mxu0 %v924
    %1675 = vmatpush2.msra.mxu0 %v923
    %1676 = vmatprep.mubr.f32.mxu0 %v1398
    %1677 = vmatmul.mubr.f32.gmra.mxu0 %v1374
    %v1678 = vpop.f32.mrf.mxu0
    %v1679 = vadd.f32 0.0, %v1678
    %v1680 = vpop.f32.mrf.mxu0
    %v1681 = vadd.f32 0.0, %v1680
    %1682 = vdwg.mxu0
    %s1683 = smul.u32 1, 4
    %s1684 = smul.addr %s1683, 8
    %s1685 = scalar_lea.vmem [#allocation4], %s1684
    %v1686 = vld [vmem:[%s1685] sm:$0xff]
    %v1687 = vld [vmem:[%s1685 + $0x8] sm:$0xff]
    %v1688 = vld [vmem:[%s1685 + $0x10] sm:$0xff]
    %v1689 = vld [vmem:[%s1685 + $0x18] sm:$0xff]
    %v1690 = vadd.f32 %v1466, %v1686
    %v1691 = vadd.f32 %v1468, %v1687
    %v1692 = vadd.f32 %v1537, %v1688
    %v1693 = vadd.f32 %v1539, %v1689
    %s1694 = smul.u32 6, 4
    %s1695 = smul.addr %s1694, 8
    %s1696 = scalar_lea.vmem [#allocation5], %s1695
    %v1697 = vld [vmem:[%s1696] sm:$0xff]
    %v1698 = vld [vmem:[%s1696 + $0x8] sm:$0xff]
    %v1699 = vld [vmem:[%s1696 + $0x10] sm:$0xff]
    %v1700 = vld [vmem:[%s1696 + $0x18] sm:$0xff]
    %v1701 = vadd.f32 %v1608, %v1697
    %v1702 = vadd.f32 %v1610, %v1698
    %v1703 = vadd.f32 %v1679, %v1699
    %v1704 = vadd.f32 %v1681, %v1700
    %v1705 = vxor.u32 %v1690, 2147483648
    %v1706 = vmul.f32 %v1705, 1.442695
    %v1707 = vpow.pop %v1706
    %v1708 = vadd.f32 %v1707, 1.0
    %v1709 = vrcp.pop %v1708
    %v1710 = vmul.f32 1.0, %v1709
    %v1711 = vxor.u32 %v1691, 2147483648
    %v1712 = vmul.f32 %v1711, 1.442695
    %v1713 = vpow.pop %v1712
    %v1714 = vadd.f32 %v1713, 1.0
    %v1715 = vrcp.pop %v1714
    %v1716 = vmul.f32 1.0, %v1715
    %v1717 = vtanh.pop %v1692
    %v1718 = vxor.u32 %v1693, 2147483648
    %v1719 = vmul.f32 %v1718, 1.442695
    %v1720 = vpow.pop %v1719
    %v1721 = vadd.f32 %v1720, 1.0
    %v1722 = vrcp.pop %v1721
    %v1723 = vmul.f32 1.0, %v1722
    %v1724 = vmul.f32 %v1716, %v1372
    %v1725 = vmul.f32 %v1710, %v1717
    %v1726 = vadd.f32 %v1724, %v1725
    %v1727 = vtanh.pop %v1726
    %v1728 = vmul.f32 %v1723, %v1727
    %v1729 = vxor.u32 %v1701, 2147483648
    %v1730 = vmul.f32 %v1729, 1.442695
    %v1731 = vpow.pop %v1730
    %v1732 = vadd.f32 %v1731, 1.0
    %v1733 = vrcp.pop %v1732
    %v1734 = vmul.f32 1.0, %v1733
    %v1735 = vxor.u32 %v1702, 2147483648
    %v1736 = vmul.f32 %v1735, 1.442695
    %v1737 = vpow.pop %v1736
    %v1738 = vadd.f32 %v1737, 1.0
    %v1739 = vrcp.pop %v1738
    %v1740 = vmul.f32 1.0, %v1739
    %v1741 = vtanh.pop %v1703
    %v1742 = vxor.u32 %v1704, 2147483648
    %v1743 = vmul.f32 %v1742, 1.442695
    %v1744 = vpow.pop %v1743
    %v1745 = vadd.f32 %v1744, 1.0
    %v1746 = vrcp.pop %v1745
    %v1747 = vmul.f32 1.0, %v1746
    %v1748 = vmul.f32 %v1740, %v1396
    %v1749 = vmul.f32 %v1734, %v1741
    %v1750 = vadd.f32 %v1748, %v1749
    %v1751 = vtanh.pop %v1750
    %v1752 = vmul.f32 %v1747, %v1751
    %1753 = vmatprep.subr.mxu0 %v910
    %1754 = vmatpush1.msra.mxu0 %v909
    %1755 = vmatprep.subr.mxu0 %v902
    %1756 = vmatpush1.msra.mxu0 %v901
    %1757 = vmatprep.subr.mxu0 %v894
    %1758 = vmatpush1.msra.mxu0 %v893
    %1759 = vmatprep.subr.mxu0 %v886
    %1760 = vmatpush1.msra.mxu0 %v885
    %1761 = vmatprep.subr.mxu0 %v878
    %1762 = vmatpush1.msra.mxu0 %v877
    %1763 = vmatprep.subr.mxu0 %v870
    %1764 = vmatpush1.msra.mxu0 %v869
    %1765 = vmatprep.subr.mxu0 %v862
    %1766 = vmatpush1.msra.mxu0 %v861
    %1767 = vmatprep.subr.mxu0 %v854
    %1768 = vmatpush1.msra.mxu0 %v853
    %1769 = vmatprep.subr.mxu0 %v846
    %1770 = vmatpush1.msra.mxu0 %v845
    %1771 = vmatprep.subr.mxu0 %v838
    %1772 = vmatpush1.msra.mxu0 %v837
    %1773 = vmatprep.subr.mxu0 %v830
    %1774 = vmatpush1.msra.mxu0 %v829
    %1775 = vmatprep.subr.mxu0 %v822
    %1776 = vmatpush1.msra.mxu0 %v821
    %1777 = vmatprep.subr.mxu0 %v814
    %1778 = vmatpush1.msra.mxu0 %v813
    %1779 = vmatprep.subr.mxu0 %v806
    %1780 = vmatpush1.msra.mxu0 %v805
    %1781 = vmatprep.subr.mxu0 %v798
    %1782 = vmatpush1.msra.mxu0 %v797
    %1783 = vmatprep.subr.mxu0 %v790
    %1784 = vmatpush1.msra.mxu0 %v789
    %1785 = vmatprep.subr.mxu0 %v1038
    %1786 = vmatpush2.msra.mxu0 %v1037
    %1787 = vmatprep.subr.mxu0 %v1030
    %1788 = vmatpush2.msra.mxu0 %v1029
    %1789 = vmatprep.subr.mxu0 %v1022
    %1790 = vmatpush2.msra.mxu0 %v1021
    %1791 = vmatprep.subr.mxu0 %v1014
    %1792 = vmatpush2.msra.mxu0 %v1013
    %1793 = vmatprep.subr.mxu0 %v1006
    %1794 = vmatpush2.msra.mxu0 %v1005
    %1795 = vmatprep.subr.mxu0 %v998
    %1796 = vmatpush2.msra.mxu0 %v997
    %1797 = vmatprep.subr.mxu0 %v990
    %1798 = vmatpush2.msra.mxu0 %v989
    %1799 = vmatprep.subr.mxu0 %v982
    %1800 = vmatpush2.msra.mxu0 %v981
    %1801 = vmatprep.subr.mxu0 %v974
    %1802 = vmatpush2.msra.mxu0 %v973
    %1803 = vmatprep.subr.mxu0 %v966
    %1804 = vmatpush2.msra.mxu0 %v965
    %1805 = vmatprep.subr.mxu0 %v958
    %1806 = vmatpush2.msra.mxu0 %v957
    %1807 = vmatprep.subr.mxu0 %v950
    %1808 = vmatpush2.msra.mxu0 %v949
    %1809 = vmatprep.subr.mxu0 %v942
    %1810 = vmatpush2.msra.mxu0 %v941
    %1811 = vmatprep.subr.mxu0 %v934
    %1812 = vmatpush2.msra.mxu0 %v933
    %1813 = vmatprep.subr.mxu0 %v926
    %1814 = vmatpush2.msra.mxu0 %v925
    %1815 = vmatprep.subr.mxu0 %v918
    %1816 = vmatpush2.msra.mxu0 %v917
    %1817 = vmatprep.mubr.f32.mxu0 %v1752
    %1818 = vmatmul.mubr.f32.gmra.mxu0 %v1728
    %v1819 = vpop.f32.mrf.mxu0
    %v1820 = vadd.f32 0.0, %v1819
    %v1821 = vpop.f32.mrf.mxu0
    %v1822 = vadd.f32 0.0, %v1821
    %1823 = vdwg.mxu0
    %1824 = vmatprep.subr.mxu0 %v912
    %1825 = vmatpush1.msra.mxu0 %v911
    %1826 = vmatprep.subr.mxu0 %v904
    %1827 = vmatpush1.msra.mxu0 %v903
    %1828 = vmatprep.subr.mxu0 %v896
    %1829 = vmatpush1.msra.mxu0 %v895
    %1830 = vmatprep.subr.mxu0 %v888
    %1831 = vmatpush1.msra.mxu0 %v887
    %1832 = vmatprep.subr.mxu0 %v880
    %1833 = vmatpush1.msra.mxu0 %v879
    %1834 = vmatprep.subr.mxu0 %v872
    %1835 = vmatpush1.msra.mxu0 %v871
    %1836 = vmatprep.subr.mxu0 %v864
    %1837 = vmatpush1.msra.mxu0 %v863
    %1838 = vmatprep.subr.mxu0 %v856
    %1839 = vmatpush1.msra.mxu0 %v855
    %1840 = vmatprep.subr.mxu0 %v848
    %1841 = vmatpush1.msra.mxu0 %v847
    %1842 = vmatprep.subr.mxu0 %v840
    %1843 = vmatpush1.msra.mxu0 %v839
    %1844 = vmatprep.subr.mxu0 %v832
    %1845 = vmatpush1.msra.mxu0 %v831
    %1846 = vmatprep.subr.mxu0 %v824
    %1847 = vmatpush1.msra.mxu0 %v823
    %1848 = vmatprep.subr.mxu0 %v816
    %1849 = vmatpush1.msra.mxu0 %v815
    %1850 = vmatprep.subr.mxu0 %v808
    %1851 = vmatpush1.msra.mxu0 %v807
    %1852 = vmatprep.subr.mxu0 %v800
    %1853 = vmatpush1.msra.mxu0 %v799
    %1854 = vmatprep.subr.mxu0 %v792
    %1855 = vmatpush1.msra.mxu0 %v791
    %1856 = vmatprep.subr.mxu0 %v1040
    %1857 = vmatpush2.msra.mxu0 %v1039
    %1858 = vmatprep.subr.mxu0 %v1032
    %1859 = vmatpush2.msra.mxu0 %v1031
    %1860 = vmatprep.subr.mxu0 %v1024
    %1861 = vmatpush2.msra.mxu0 %v1023
    %1862 = vmatprep.subr.mxu0 %v1016
    %1863 = vmatpush2.msra.mxu0 %v1015
    %1864 = vmatprep.subr.mxu0 %v1008
    %1865 = vmatpush2.msra.mxu0 %v1007
    %1866 = vmatprep.subr.mxu0 %v1000
    %1867 = vmatpush2.msra.mxu0 %v999
    %1868 = vmatprep.subr.mxu0 %v992
    %1869 = vmatpush2.msra.mxu0 %v991
    %1870 = vmatprep.subr.mxu0 %v984
    %1871 = vmatpush2.msra.mxu0 %v983
    %1872 = vmatprep.subr.mxu0 %v976
    %1873 = vmatpush2.msra.mxu0 %v975
    %1874 = vmatprep.subr.mxu0 %v968
    %1875 = vmatpush2.msra.mxu0 %v967
    %1876 = vmatprep.subr.mxu0 %v960
    %1877 = vmatpush2.msra.mxu0 %v959
    %1878 = vmatprep.subr.mxu0 %v952
    %1879 = vmatpush2.msra.mxu0 %v951
    %1880 = vmatprep.subr.mxu0 %v944
    %1881 = vmatpush2.msra.mxu0 %v943
    %1882 = vmatprep.subr.mxu0 %v936
    %1883 = vmatpush2.msra.mxu0 %v935
    %1884 = vmatprep.subr.mxu0 %v928
    %1885 = vmatpush2.msra.mxu0 %v927
    %1886 = vmatprep.subr.mxu0 %v920
    %1887 = vmatpush2.msra.mxu0 %v919
    %1888 = vmatprep.mubr.f32.mxu0 %v1752
    %1889 = vmatmul.mubr.f32.gmra.mxu0 %v1728
    %v1890 = vpop.f32.mrf.mxu0
    %v1891 = vadd.f32 0.0, %v1890
    %v1892 = vpop.f32.mrf.mxu0
    %v1893 = vadd.f32 0.0, %v1892
    %1894 = vdwg.mxu0
    %1895 = vmatprep.subr.mxu0 %v914
    %1896 = vmatpush1.msra.mxu0 %v913
    %1897 = vmatprep.subr.mxu0 %v906
    %1898 = vmatpush1.msra.mxu0 %v905
    %1899 = vmatprep.subr.mxu0 %v898
    %1900 = vmatpush1.msra.mxu0 %v897
    %1901 = vmatprep.subr.mxu0 %v890
    %1902 = vmatpush1.msra.mxu0 %v889
    %1903 = vmatprep.subr.mxu0 %v882
    %1904 = vmatpush1.msra.mxu0 %v881
    %1905 = vmatprep.subr.mxu0 %v874
    %1906 = vmatpush1.msra.mxu0 %v873
    %1907 = vmatprep.subr.mxu0 %v866
    %1908 = vmatpush1.msra.mxu0 %v865
    %1909 = vmatprep.subr.mxu0 %v858
    %1910 = vmatpush1.msra.mxu0 %v857
    %1911 = vmatprep.subr.mxu0 %v850
    %1912 = vmatpush1.msra.mxu0 %v849
    %1913 = vmatprep.subr.mxu0 %v842
    %1914 = vmatpush1.msra.mxu0 %v841
    %1915 = vmatprep.subr.mxu0 %v834
    %1916 = vmatpush1.msra.mxu0 %v833
    %1917 = vmatprep.subr.mxu0 %v826
    %1918 = vmatpush1.msra.mxu0 %v825
    %1919 = vmatprep.subr.mxu0 %v818
    %1920 = vmatpush1.msra.mxu0 %v817
    %1921 = vmatprep.subr.mxu0 %v810
    %1922 = vmatpush1.msra.mxu0 %v809
    %1923 = vmatprep.subr.mxu0 %v802
    %1924 = vmatpush1.msra.mxu0 %v801
    %1925 = vmatprep.subr.mxu0 %v794
    %1926 = vmatpush1.msra.mxu0 %v793
    %1927 = vmatprep.subr.mxu0 %v1042
    %1928 = vmatpush2.msra.mxu0 %v1041
    %1929 = vmatprep.subr.mxu0 %v1034
    %1930 = vmatpush2.msra.mxu0 %v1033
    %1931 = vmatprep.subr.mxu0 %v1026
    %1932 = vmatpush2.msra.mxu0 %v1025
    %1933 = vmatprep.subr.mxu0 %v1018
    %1934 = vmatpush2.msra.mxu0 %v1017
    %1935 = vmatprep.subr.mxu0 %v1010
    %1936 = vmatpush2.msra.mxu0 %v1009
    %1937 = vmatprep.subr.mxu0 %v1002
    %1938 = vmatpush2.msra.mxu0 %v1001
    %1939 = vmatprep.subr.mxu0 %v994
    %1940 = vmatpush2.msra.mxu0 %v993
    %1941 = vmatprep.subr.mxu0 %v986
    %1942 = vmatpush2.msra.mxu0 %v985
    %1943 = vmatprep.subr.mxu0 %v978
    %1944 = vmatpush2.msra.mxu0 %v977
    %1945 = vmatprep.subr.mxu0 %v970
    %1946 = vmatpush2.msra.mxu0 %v969
    %1947 = vmatprep.subr.mxu0 %v962
    %1948 = vmatpush2.msra.mxu0 %v961
    %1949 = vmatprep.subr.mxu0 %v954
    %1950 = vmatpush2.msra.mxu0 %v953
    %1951 = vmatprep.subr.mxu0 %v946
    %1952 = vmatpush2.msra.mxu0 %v945
    %1953 = vmatprep.subr.mxu0 %v938
    %1954 = vmatpush2.msra.mxu0 %v937
    %1955 = vmatprep.subr.mxu0 %v930
    %1956 = vmatpush2.msra.mxu0 %v929
    %1957 = vmatprep.subr.mxu0 %v922
    %1958 = vmatpush2.msra.mxu0 %v921
    %1959 = vmatprep.mubr.f32.mxu0 %v1752
    %1960 = vmatmul.mubr.f32.gmra.mxu0 %v1728
    %v1961 = vpop.f32.mrf.mxu0
    %v1962 = vadd.f32 0.0, %v1961
    %v1963 = vpop.f32.mrf.mxu0
    %v1964 = vadd.f32 0.0, %v1963
    %1965 = vdwg.mxu0
    %1966 = vmatprep.subr.mxu0 %v916
    %1967 = vmatpush1.msra.mxu0 %v915
    %1968 = vmatprep.subr.mxu0 %v908
    %1969 = vmatpush1.msra.mxu0 %v907
    %1970 = vmatprep.subr.mxu0 %v900
    %1971 = vmatpush1.msra.mxu0 %v899
    %1972 = vmatprep.subr.mxu0 %v892
    %1973 = vmatpush1.msra.mxu0 %v891
    %1974 = vmatprep.subr.mxu0 %v884
    %1975 = vmatpush1.msra.mxu0 %v883
    %1976 = vmatprep.subr.mxu0 %v876
    %1977 = vmatpush1.msra.mxu0 %v875
    %1978 = vmatprep.subr.mxu0 %v868
    %1979 = vmatpush1.msra.mxu0 %v867
    %1980 = vmatprep.subr.mxu0 %v860
    %1981 = vmatpush1.msra.mxu0 %v859
    %1982 = vmatprep.subr.mxu0 %v852
    %1983 = vmatpush1.msra.mxu0 %v851
    %1984 = vmatprep.subr.mxu0 %v844
    %1985 = vmatpush1.msra.mxu0 %v843
    %1986 = vmatprep.subr.mxu0 %v836
    %1987 = vmatpush1.msra.mxu0 %v835
    %1988 = vmatprep.subr.mxu0 %v828
    %1989 = vmatpush1.msra.mxu0 %v827
    %1990 = vmatprep.subr.mxu0 %v820
    %1991 = vmatpush1.msra.mxu0 %v819
    %1992 = vmatprep.subr.mxu0 %v812
    %1993 = vmatpush1.msra.mxu0 %v811
    %1994 = vmatprep.subr.mxu0 %v804
    %1995 = vmatpush1.msra.mxu0 %v803
    %1996 = vmatprep.subr.mxu0 %v796
    %1997 = vmatpush1.msra.mxu0 %v795
    %1998 = vmatprep.subr.mxu0 %v1044
    %1999 = vmatpush2.msra.mxu0 %v1043
    %2000 = vmatprep.subr.mxu0 %v1036
    %2001 = vmatpush2.msra.mxu0 %v1035
    %2002 = vmatprep.subr.mxu0 %v1028
    %2003 = vmatpush2.msra.mxu0 %v1027
    %2004 = vmatprep.subr.mxu0 %v1020
    %2005 = vmatpush2.msra.mxu0 %v1019
    %2006 = vmatprep.subr.mxu0 %v1012
    %2007 = vmatpush2.msra.mxu0 %v1011
    %2008 = vmatprep.subr.mxu0 %v1004
    %2009 = vmatpush2.msra.mxu0 %v1003
    %2010 = vmatprep.subr.mxu0 %v996
    %2011 = vmatpush2.msra.mxu0 %v995
    %2012 = vmatprep.subr.mxu0 %v988
    %2013 = vmatpush2.msra.mxu0 %v987
    %2014 = vmatprep.subr.mxu0 %v980
    %2015 = vmatpush2.msra.mxu0 %v979
    %2016 = vmatprep.subr.mxu0 %v972
    %2017 = vmatpush2.msra.mxu0 %v971
    %2018 = vmatprep.subr.mxu0 %v964
    %2019 = vmatpush2.msra.mxu0 %v963
    %2020 = vmatprep.subr.mxu0 %v956
    %2021 = vmatpush2.msra.mxu0 %v955
    %2022 = vmatprep.subr.mxu0 %v948
    %2023 = vmatpush2.msra.mxu0 %v947
    %2024 = vmatprep.subr.mxu0 %v940
    %2025 = vmatpush2.msra.mxu0 %v939
    %2026 = vmatprep.subr.mxu0 %v932
    %2027 = vmatpush2.msra.mxu0 %v931
    %2028 = vmatprep.subr.mxu0 %v924
    %2029 = vmatpush2.msra.mxu0 %v923
    %2030 = vmatprep.mubr.f32.mxu0 %v1752
    %2031 = vmatmul.mubr.f32.gmra.mxu0 %v1728
    %v2032 = vpop.f32.mrf.mxu0
    %v2033 = vadd.f32 0.0, %v2032
    %v2034 = vpop.f32.mrf.mxu0
    %v2035 = vadd.f32 0.0, %v2034
    %2036 = vdwg.mxu0
    %s2037 = smul.u32 2, 4
    %s2038 = smul.addr %s2037, 8
    %s2039 = scalar_lea.vmem [#allocation4], %s2038
    %v2040 = vld [vmem:[%s2039] sm:$0xff]
    %v2041 = vld [vmem:[%s2039 + $0x8] sm:$0xff]
    %v2042 = vld [vmem:[%s2039 + $0x10] sm:$0xff]
    %v2043 = vld [vmem:[%s2039 + $0x18] sm:$0xff]
    %v2044 = vadd.f32 %v1820, %v2040
    %v2045 = vadd.f32 %v1822, %v2041
    %v2046 = vadd.f32 %v1891, %v2042
    %v2047 = vadd.f32 %v1893, %v2043
    %s2048 = smul.u32 5, 4
    %s2049 = smul.addr %s2048, 8
    %s2050 = scalar_lea.vmem [#allocation5], %s2049
    %v2051 = vld [vmem:[%s2050] sm:$0xff]
    %v2052 = vld [vmem:[%s2050 + $0x8] sm:$0xff]
    %v2053 = vld [vmem:[%s2050 + $0x10] sm:$0xff]
    %v2054 = vld [vmem:[%s2050 + $0x18] sm:$0xff]
    %v2055 = vadd.f32 %v1962, %v2051
    %v2056 = vadd.f32 %v1964, %v2052
    %v2057 = vadd.f32 %v2033, %v2053
    %v2058 = vadd.f32 %v2035, %v2054
    %v2059 = vxor.u32 %v2044, 2147483648
    %v2060 = vmul.f32 %v2059, 1.442695
    %v2061 = vpow.pop %v2060
    %v2062 = vadd.f32 %v2061, 1.0
    %v2063 = vrcp.pop %v2062
    %v2064 = vmul.f32 1.0, %v2063
    %v2065 = vxor.u32 %v2045, 2147483648
    %v2066 = vmul.f32 %v2065, 1.442695
    %v2067 = vpow.pop %v2066
    %v2068 = vadd.f32 %v2067, 1.0
    %v2069 = vrcp.pop %v2068
    %v2070 = vmul.f32 1.0, %v2069
    %v2071 = vtanh.pop %v2046
    %v2072 = vxor.u32 %v2047, 2147483648
    %v2073 = vmul.f32 %v2072, 1.442695
    %v2074 = vpow.pop %v2073
    %v2075 = vadd.f32 %v2074, 1.0
    %v2076 = vrcp.pop %v2075
    %v2077 = vmul.f32 1.0, %v2076
    %v2078 = vmul.f32 %v2070, %v1726
    %v2079 = vmul.f32 %v2064, %v2071
    %v2080 = vadd.f32 %v2078, %v2079
    %v2081 = vtanh.pop %v2080
    %v2082 = vmul.f32 %v2077, %v2081
    %v2083 = vxor.u32 %v2055, 2147483648
    %v2084 = vmul.f32 %v2083, 1.442695
    %v2085 = vpow.pop %v2084
    %v2086 = vadd.f32 %v2085, 1.0
    %v2087 = vrcp.pop %v2086
    %v2088 = vmul.f32 1.0, %v2087
    %v2089 = vxor.u32 %v2056, 2147483648
    %v2090 = vmul.f32 %v2089, 1.442695
    %v2091 = vpow.pop %v2090
    %v2092 = vadd.f32 %v2091, 1.0
    %v2093 = vrcp.pop %v2092
    %v2094 = vmul.f32 1.0, %v2093
    %v2095 = vtanh.pop %v2057
    %v2096 = vxor.u32 %v2058, 2147483648
    %v2097 = vmul.f32 %v2096, 1.442695
    %v2098 = vpow.pop %v2097
    %v2099 = vadd.f32 %v2098, 1.0
    %v2100 = vrcp.pop %v2099
    %v2101 = vmul.f32 1.0, %v2100
    %v2102 = vmul.f32 %v2094, %v1750
    %v2103 = vmul.f32 %v2088, %v2095
    %v2104 = vadd.f32 %v2102, %v2103
    %v2105 = vtanh.pop %v2104
    %v2106 = vmul.f32 %v2101, %v2105
    %2107 = vmatprep.subr.mxu0 %v910
    %2108 = vmatpush1.msra.mxu0 %v909
    %2109 = vmatprep.subr.mxu0 %v902
    %2110 = vmatpush1.msra.mxu0 %v901
    %2111 = vmatprep.subr.mxu0 %v894
    %2112 = vmatpush1.msra.mxu0 %v893
    %2113 = vmatprep.subr.mxu0 %v886
    %2114 = vmatpush1.msra.mxu0 %v885
    %2115 = vmatprep.subr.mxu0 %v878
    %2116 = vmatpush1.msra.mxu0 %v877
    %2117 = vmatprep.subr.mxu0 %v870
    %2118 = vmatpush1.msra.mxu0 %v869
    %2119 = vmatprep.subr.mxu0 %v862
    %2120 = vmatpush1.msra.mxu0 %v861
    %2121 = vmatprep.subr.mxu0 %v854
    %2122 = vmatpush1.msra.mxu0 %v853
    %2123 = vmatprep.subr.mxu0 %v846
    %2124 = vmatpush1.msra.mxu0 %v845
    %2125 = vmatprep.subr.mxu0 %v838
    %2126 = vmatpush1.msra.mxu0 %v837
    %2127 = vmatprep.subr.mxu0 %v830
    %2128 = vmatpush1.msra.mxu0 %v829
    %2129 = vmatprep.subr.mxu0 %v822
    %2130 = vmatpush1.msra.mxu0 %v821
    %2131 = vmatprep.subr.mxu0 %v814
    %2132 = vmatpush1.msra.mxu0 %v813
    %2133 = vmatprep.subr.mxu0 %v806
    %2134 = vmatpush1.msra.mxu0 %v805
    %2135 = vmatprep.subr.mxu0 %v798
    %2136 = vmatpush1.msra.mxu0 %v797
    %2137 = vmatprep.subr.mxu0 %v790
    %2138 = vmatpush1.msra.mxu0 %v789
    %2139 = vmatprep.subr.mxu0 %v1038
    %2140 = vmatpush2.msra.mxu0 %v1037
    %2141 = vmatprep.subr.mxu0 %v1030
    %2142 = vmatpush2.msra.mxu0 %v1029
    %2143 = vmatprep.subr.mxu0 %v1022
    %2144 = vmatpush2.msra.mxu0 %v1021
    %2145 = vmatprep.subr.mxu0 %v1014
    %2146 = vmatpush2.msra.mxu0 %v1013
    %2147 = vmatprep.subr.mxu0 %v1006
    %2148 = vmatpush2.msra.mxu0 %v1005
    %2149 = vmatprep.subr.mxu0 %v998
    %2150 = vmatpush2.msra.mxu0 %v997
    %2151 = vmatprep.subr.mxu0 %v990
    %2152 = vmatpush2.msra.mxu0 %v989
    %2153 = vmatprep.subr.mxu0 %v982
    %2154 = vmatpush2.msra.mxu0 %v981
    %2155 = vmatprep.subr.mxu0 %v974
    %2156 = vmatpush2.msra.mxu0 %v973
    %2157 = vmatprep.subr.mxu0 %v966
    %2158 = vmatpush2.msra.mxu0 %v965
    %2159 = vmatprep.subr.mxu0 %v958
    %2160 = vmatpush2.msra.mxu0 %v957
    %2161 = vmatprep.subr.mxu0 %v950
    %2162 = vmatpush2.msra.mxu0 %v949
    %2163 = vmatprep.subr.mxu0 %v942
    %2164 = vmatpush2.msra.mxu0 %v941
    %2165 = vmatprep.subr.mxu0 %v934
    %2166 = vmatpush2.msra.mxu0 %v933
    %2167 = vmatprep.subr.mxu0 %v926
    %2168 = vmatpush2.msra.mxu0 %v925
    %2169 = vmatprep.subr.mxu0 %v918
    %2170 = vmatpush2.msra.mxu0 %v917
    %2171 = vmatprep.mubr.f32.mxu0 %v2106
    %2172 = vmatmul.mubr.f32.gmra.mxu0 %v2082
    %v2173 = vpop.f32.mrf.mxu0
    %v2174 = vadd.f32 0.0, %v2173
    %v2175 = vpop.f32.mrf.mxu0
    %v2176 = vadd.f32 0.0, %v2175
    %2177 = vdwg.mxu0
    %2178 = vmatprep.subr.mxu0 %v912
    %2179 = vmatpush1.msra.mxu0 %v911
    %2180 = vmatprep.subr.mxu0 %v904
    %2181 = vmatpush1.msra.mxu0 %v903
    %2182 = vmatprep.subr.mxu0 %v896
    %2183 = vmatpush1.msra.mxu0 %v895
    %2184 = vmatprep.subr.mxu0 %v888
    %2185 = vmatpush1.msra.mxu0 %v887
    %2186 = vmatprep.subr.mxu0 %v880
    %2187 = vmatpush1.msra.mxu0 %v879
    %2188 = vmatprep.subr.mxu0 %v872
    %2189 = vmatpush1.msra.mxu0 %v871
    %2190 = vmatprep.subr.mxu0 %v864
    %2191 = vmatpush1.msra.mxu0 %v863
    %2192 = vmatprep.subr.mxu0 %v856
    %2193 = vmatpush1.msra.mxu0 %v855
    %2194 = vmatprep.subr.mxu0 %v848
    %2195 = vmatpush1.msra.mxu0 %v847
    %2196 = vmatprep.subr.mxu0 %v840
    %2197 = vmatpush1.msra.mxu0 %v839
    %2198 = vmatprep.subr.mxu0 %v832
    %2199 = vmatpush1.msra.mxu0 %v831
    %2200 = vmatprep.subr.mxu0 %v824
    %2201 = vmatpush1.msra.mxu0 %v823
    %2202 = vmatprep.subr.mxu0 %v816
    %2203 = vmatpush1.msra.mxu0 %v815
    %2204 = vmatprep.subr.mxu0 %v808
    %2205 = vmatpush1.msra.mxu0 %v807
    %2206 = vmatprep.subr.mxu0 %v800
    %2207 = vmatpush1.msra.mxu0 %v799
    %2208 = vmatprep.subr.mxu0 %v792
    %2209 = vmatpush1.msra.mxu0 %v791
    %2210 = vmatprep.subr.mxu0 %v1040
    %2211 = vmatpush2.msra.mxu0 %v1039
    %2212 = vmatprep.subr.mxu0 %v1032
    %2213 = vmatpush2.msra.mxu0 %v1031
    %2214 = vmatprep.subr.mxu0 %v1024
    %2215 = vmatpush2.msra.mxu0 %v1023
    %2216 = vmatprep.subr.mxu0 %v1016
    %2217 = vmatpush2.msra.mxu0 %v1015
    %2218 = vmatprep.subr.mxu0 %v1008
    %2219 = vmatpush2.msra.mxu0 %v1007
    %2220 = vmatprep.subr.mxu0 %v1000
    %2221 = vmatpush2.msra.mxu0 %v999
    %2222 = vmatprep.subr.mxu0 %v992
    %2223 = vmatpush2.msra.mxu0 %v991
    %2224 = vmatprep.subr.mxu0 %v984
    %2225 = vmatpush2.msra.mxu0 %v983
    %2226 = vmatprep.subr.mxu0 %v976
    %2227 = vmatpush2.msra.mxu0 %v975
    %2228 = vmatprep.subr.mxu0 %v968
    %2229 = vmatpush2.msra.mxu0 %v967
    %2230 = vmatprep.subr.mxu0 %v960
    %2231 = vmatpush2.msra.mxu0 %v959
    %2232 = vmatprep.subr.mxu0 %v952
    %2233 = vmatpush2.msra.mxu0 %v951
    %2234 = vmatprep.subr.mxu0 %v944
    %2235 = vmatpush2.msra.mxu0 %v943
    %2236 = vmatprep.subr.mxu0 %v936
    %2237 = vmatpush2.msra.mxu0 %v935
    %2238 = vmatprep.subr.mxu0 %v928
    %2239 = vmatpush2.msra.mxu0 %v927
    %2240 = vmatprep.subr.mxu0 %v920
    %2241 = vmatpush2.msra.mxu0 %v919
    %2242 = vmatprep.mubr.f32.mxu0 %v2106
    %2243 = vmatmul.mubr.f32.gmra.mxu0 %v2082
    %v2244 = vpop.f32.mrf.mxu0
    %v2245 = vadd.f32 0.0, %v2244
    %v2246 = vpop.f32.mrf.mxu0
    %v2247 = vadd.f32 0.0, %v2246
    %2248 = vdwg.mxu0
    %2249 = vmatprep.subr.mxu0 %v914
    %2250 = vmatpush1.msra.mxu0 %v913
    %2251 = vmatprep.subr.mxu0 %v906
    %2252 = vmatpush1.msra.mxu0 %v905
    %2253 = vmatprep.subr.mxu0 %v898
    %2254 = vmatpush1.msra.mxu0 %v897
    %2255 = vmatprep.subr.mxu0 %v890
    %2256 = vmatpush1.msra.mxu0 %v889
    %2257 = vmatprep.subr.mxu0 %v882
    %2258 = vmatpush1.msra.mxu0 %v881
    %2259 = vmatprep.subr.mxu0 %v874
    %2260 = vmatpush1.msra.mxu0 %v873
    %2261 = vmatprep.subr.mxu0 %v866
    %2262 = vmatpush1.msra.mxu0 %v865
    %2263 = vmatprep.subr.mxu0 %v858
    %2264 = vmatpush1.msra.mxu0 %v857
    %2265 = vmatprep.subr.mxu0 %v850
    %2266 = vmatpush1.msra.mxu0 %v849
    %2267 = vmatprep.subr.mxu0 %v842
    %2268 = vmatpush1.msra.mxu0 %v841
    %2269 = vmatprep.subr.mxu0 %v834
    %2270 = vmatpush1.msra.mxu0 %v833
    %2271 = vmatprep.subr.mxu0 %v826
    %2272 = vmatpush1.msra.mxu0 %v825
    %2273 = vmatprep.subr.mxu0 %v818
    %2274 = vmatpush1.msra.mxu0 %v817
    %2275 = vmatprep.subr.mxu0 %v810
    %2276 = vmatpush1.msra.mxu0 %v809
    %2277 = vmatprep.subr.mxu0 %v802
    %2278 = vmatpush1.msra.mxu0 %v801
    %2279 = vmatprep.subr.mxu0 %v794
    %2280 = vmatpush1.msra.mxu0 %v793
    %2281 = vmatprep.subr.mxu0 %v1042
    %2282 = vmatpush2.msra.mxu0 %v1041
    %2283 = vmatprep.subr.mxu0 %v1034
    %2284 = vmatpush2.msra.mxu0 %v1033
    %2285 = vmatprep.subr.mxu0 %v1026
    %2286 = vmatpush2.msra.mxu0 %v1025
    %2287 = vmatprep.subr.mxu0 %v1018
    %2288 = vmatpush2.msra.mxu0 %v1017
    %2289 = vmatprep.subr.mxu0 %v1010
    %2290 = vmatpush2.msra.mxu0 %v1009
    %2291 = vmatprep.subr.mxu0 %v1002
    %2292 = vmatpush2.msra.mxu0 %v1001
    %2293 = vmatprep.subr.mxu0 %v994
    %2294 = vmatpush2.msra.mxu0 %v993
    %2295 = vmatprep.subr.mxu0 %v986
    %2296 = vmatpush2.msra.mxu0 %v985
    %2297 = vmatprep.subr.mxu0 %v978
    %2298 = vmatpush2.msra.mxu0 %v977
    %2299 = vmatprep.subr.mxu0 %v970
    %2300 = vmatpush2.msra.mxu0 %v969
    %2301 = vmatprep.subr.mxu0 %v962
    %2302 = vmatpush2.msra.mxu0 %v961
    %2303 = vmatprep.subr.mxu0 %v954
    %2304 = vmatpush2.msra.mxu0 %v953
    %2305 = vmatprep.subr.mxu0 %v946
    %2306 = vmatpush2.msra.mxu0 %v945
    %2307 = vmatprep.subr.mxu0 %v938
    %2308 = vmatpush2.msra.mxu0 %v937
    %2309 = vmatprep.subr.mxu0 %v930
    %2310 = vmatpush2.msra.mxu0 %v929
    %2311 = vmatprep.subr.mxu0 %v922
    %2312 = vmatpush2.msra.mxu0 %v921
    %2313 = vmatprep.mubr.f32.mxu0 %v2106
    %2314 = vmatmul.mubr.f32.gmra.mxu0 %v2082
    %v2315 = vpop.f32.mrf.mxu0
    %v2316 = vadd.f32 0.0, %v2315
    %v2317 = vpop.f32.mrf.mxu0
    %v2318 = vadd.f32 0.0, %v2317
    %2319 = vdwg.mxu0
    %2320 = vmatprep.subr.mxu0 %v916
    %2321 = vmatpush1.msra.mxu0 %v915
    %2322 = vmatprep.subr.mxu0 %v908
    %2323 = vmatpush1.msra.mxu0 %v907
    %2324 = vmatprep.subr.mxu0 %v900
    %2325 = vmatpush1.msra.mxu0 %v899
    %2326 = vmatprep.subr.mxu0 %v892
    %2327 = vmatpush1.msra.mxu0 %v891
    %2328 = vmatprep.subr.mxu0 %v884
    %2329 = vmatpush1.msra.mxu0 %v883
    %2330 = vmatprep.subr.mxu0 %v876
    %2331 = vmatpush1.msra.mxu0 %v875
    %2332 = vmatprep.subr.mxu0 %v868
    %2333 = vmatpush1.msra.mxu0 %v867
    %2334 = vmatprep.subr.mxu0 %v860
    %2335 = vmatpush1.msra.mxu0 %v859
    %2336 = vmatprep.subr.mxu0 %v852
    %2337 = vmatpush1.msra.mxu0 %v851
    %2338 = vmatprep.subr.mxu0 %v844
    %2339 = vmatpush1.msra.mxu0 %v843
    %2340 = vmatprep.subr.mxu0 %v836
    %2341 = vmatpush1.msra.mxu0 %v835
    %2342 = vmatprep.subr.mxu0 %v828
    %2343 = vmatpush1.msra.mxu0 %v827
    %2344 = vmatprep.subr.mxu0 %v820
    %2345 = vmatpush1.msra.mxu0 %v819
    %2346 = vmatprep.subr.mxu0 %v812
    %2347 = vmatpush1.msra.mxu0 %v811
    %2348 = vmatprep.subr.mxu0 %v804
    %2349 = vmatpush1.msra.mxu0 %v803
    %2350 = vmatprep.subr.mxu0 %v796
    %2351 = vmatpush1.msra.mxu0 %v795
    %2352 = vmatprep.subr.mxu0 %v1044
    %2353 = vmatpush2.msra.mxu0 %v1043
    %2354 = vmatprep.subr.mxu0 %v1036
    %2355 = vmatpush2.msra.mxu0 %v1035
    %2356 = vmatprep.subr.mxu0 %v1028
    %2357 = vmatpush2.msra.mxu0 %v1027
    %2358 = vmatprep.subr.mxu0 %v1020
    %2359 = vmatpush2.msra.mxu0 %v1019
    %2360 = vmatprep.subr.mxu0 %v1012
    %2361 = vmatpush2.msra.mxu0 %v1011
    %2362 = vmatprep.subr.mxu0 %v1004
    %2363 = vmatpush2.msra.mxu0 %v1003
    %2364 = vmatprep.subr.mxu0 %v996
    %2365 = vmatpush2.msra.mxu0 %v995
    %2366 = vmatprep.subr.mxu0 %v988
    %2367 = vmatpush2.msra.mxu0 %v987
    %2368 = vmatprep.subr.mxu0 %v980
    %2369 = vmatpush2.msra.mxu0 %v979
    %2370 = vmatprep.subr.mxu0 %v972
    %2371 = vmatpush2.msra.mxu0 %v971
    %2372 = vmatprep.subr.mxu0 %v964
    %2373 = vmatpush2.msra.mxu0 %v963
    %2374 = vmatprep.subr.mxu0 %v956
    %2375 = vmatpush2.msra.mxu0 %v955
    %2376 = vmatprep.subr.mxu0 %v948
    %2377 = vmatpush2.msra.mxu0 %v947
    %2378 = vmatprep.subr.mxu0 %v940
    %2379 = vmatpush2.msra.mxu0 %v939
    %2380 = vmatprep.subr.mxu0 %v932
    %2381 = vmatpush2.msra.mxu0 %v931
    %2382 = vmatprep.subr.mxu0 %v924
    %2383 = vmatpush2.msra.mxu0 %v923
    %2384 = vmatprep.mubr.f32.mxu0 %v2106
    %2385 = vmatmul.mubr.f32.gmra.mxu0 %v2082
    %v2386 = vpop.f32.mrf.mxu0
    %v2387 = vadd.f32 0.0, %v2386
    %v2388 = vpop.f32.mrf.mxu0
    %v2389 = vadd.f32 0.0, %v2388
    %2390 = vdwg.mxu0
    %s2391 = smul.u32 3, 4
    %s2392 = smul.addr %s2391, 8
    %s2393 = scalar_lea.vmem [#allocation4], %s2392
    %v2394 = vld [vmem:[%s2393] sm:$0xff]
    %v2395 = vld [vmem:[%s2393 + $0x8] sm:$0xff]
    %v2396 = vld [vmem:[%s2393 + $0x10] sm:$0xff]
    %v2397 = vld [vmem:[%s2393 + $0x18] sm:$0xff]
    %v2398 = vadd.f32 %v2174, %v2394
    %v2399 = vadd.f32 %v2176, %v2395
    %v2400 = vadd.f32 %v2245, %v2396
    %v2401 = vadd.f32 %v2247, %v2397
    %s2402 = smul.u32 4, 4
    %s2403 = smul.addr %s2402, 8
    %s2404 = scalar_lea.vmem [#allocation5], %s2403
    %v2405 = vld [vmem:[%s2404] sm:$0xff]
    %v2406 = vld [vmem:[%s2404 + $0x8] sm:$0xff]
    %v2407 = vld [vmem:[%s2404 + $0x10] sm:$0xff]
    %v2408 = vld [vmem:[%s2404 + $0x18] sm:$0xff]
    %v2409 = vadd.f32 %v2316, %v2405
    %v2410 = vadd.f32 %v2318, %v2406
    %v2411 = vadd.f32 %v2387, %v2407
    %v2412 = vadd.f32 %v2389, %v2408
    %v2413 = vxor.u32 %v2398, 2147483648
    %v2414 = vmul.f32 %v2413, 1.442695
    %v2415 = vpow.pop %v2414
    %v2416 = vadd.f32 %v2415, 1.0
    %v2417 = vrcp.pop %v2416
    %v2418 = vmul.f32 1.0, %v2417
    %v2419 = vxor.u32 %v2399, 2147483648
    %v2420 = vmul.f32 %v2419, 1.442695
    %v2421 = vpow.pop %v2420
    %v2422 = vadd.f32 %v2421, 1.0
    %v2423 = vrcp.pop %v2422
    %v2424 = vmul.f32 1.0, %v2423
    %v2425 = vtanh.pop %v2400
    %v2426 = vxor.u32 %v2401, 2147483648
    %v2427 = vmul.f32 %v2426, 1.442695
    %v2428 = vpow.pop %v2427
    %v2429 = vadd.f32 %v2428, 1.0
    %v2430 = vrcp.pop %v2429
    %v2431 = vmul.f32 1.0, %v2430
    %v2432 = vmul.f32 %v2424, %v2080
    %v2433 = vmul.f32 %v2418, %v2425
    %v2434 = vadd.f32 %v2432, %v2433
    %v2435 = vtanh.pop %v2434
    %v2436 = vmul.f32 %v2431, %v2435
    %v2437 = vxor.u32 %v2409, 2147483648
    %v2438 = vmul.f32 %v2437, 1.442695
    %v2439 = vpow.pop %v2438
    %v2440 = vadd.f32 %v2439, 1.0
    %v2441 = vrcp.pop %v2440
    %v2442 = vmul.f32 1.0, %v2441
    %v2443 = vxor.u32 %v2410, 2147483648
    %v2444 = vmul.f32 %v2443, 1.442695
    %v2445 = vpow.pop %v2444
    %v2446 = vadd.f32 %v2445, 1.0
    %v2447 = vrcp.pop %v2446
    %v2448 = vmul.f32 1.0, %v2447
    %v2449 = vtanh.pop %v2411
    %v2450 = vxor.u32 %v2412, 2147483648
    %v2451 = vmul.f32 %v2450, 1.442695
    %v2452 = vpow.pop %v2451
    %v2453 = vadd.f32 %v2452, 1.0
    %v2454 = vrcp.pop %v2453
    %v2455 = vmul.f32 1.0, %v2454
    %v2456 = vmul.f32 %v2448, %v2104
    %v2457 = vmul.f32 %v2442, %v2449
    %v2458 = vadd.f32 %v2456, %v2457
    %v2459 = vtanh.pop %v2458
    %v2460 = vmul.f32 %v2455, %v2459
    %2461 = vmatprep.subr.mxu0 %v910
    %2462 = vmatpush1.msra.mxu0 %v909
    %2463 = vmatprep.subr.mxu0 %v902
    %2464 = vmatpush1.msra.mxu0 %v901
    %2465 = vmatprep.subr.mxu0 %v894
    %2466 = vmatpush1.msra.mxu0 %v893
    %2467 = vmatprep.subr.mxu0 %v886
    %2468 = vmatpush1.msra.mxu0 %v885
    %2469 = vmatprep.subr.mxu0 %v878
    %2470 = vmatpush1.msra.mxu0 %v877
    %2471 = vmatprep.subr.mxu0 %v870
    %2472 = vmatpush1.msra.mxu0 %v869
    %2473 = vmatprep.subr.mxu0 %v862
    %2474 = vmatpush1.msra.mxu0 %v861
    %2475 = vmatprep.subr.mxu0 %v854
    %2476 = vmatpush1.msra.mxu0 %v853
    %2477 = vmatprep.subr.mxu0 %v846
    %2478 = vmatpush1.msra.mxu0 %v845
    %2479 = vmatprep.subr.mxu0 %v838
    %2480 = vmatpush1.msra.mxu0 %v837
    %2481 = vmatprep.subr.mxu0 %v830
    %2482 = vmatpush1.msra.mxu0 %v829
    %2483 = vmatprep.subr.mxu0 %v822
    %2484 = vmatpush1.msra.mxu0 %v821
    %2485 = vmatprep.subr.mxu0 %v814
    %2486 = vmatpush1.msra.mxu0 %v813
    %2487 = vmatprep.subr.mxu0 %v806
    %2488 = vmatpush1.msra.mxu0 %v805
    %2489 = vmatprep.subr.mxu0 %v798
    %2490 = vmatpush1.msra.mxu0 %v797
    %2491 = vmatprep.subr.mxu0 %v790
    %2492 = vmatpush1.msra.mxu0 %v789
    %2493 = vmatprep.subr.mxu0 %v1038
    %2494 = vmatpush2.msra.mxu0 %v1037
    %2495 = vmatprep.subr.mxu0 %v1030
    %2496 = vmatpush2.msra.mxu0 %v1029
    %2497 = vmatprep.subr.mxu0 %v1022
    %2498 = vmatpush2.msra.mxu0 %v1021
    %2499 = vmatprep.subr.mxu0 %v1014
    %2500 = vmatpush2.msra.mxu0 %v1013
    %2501 = vmatprep.subr.mxu0 %v1006
    %2502 = vmatpush2.msra.mxu0 %v1005
    %2503 = vmatprep.subr.mxu0 %v998
    %2504 = vmatpush2.msra.mxu0 %v997
    %2505 = vmatprep.subr.mxu0 %v990
    %2506 = vmatpush2.msra.mxu0 %v989
    %2507 = vmatprep.subr.mxu0 %v982
    %2508 = vmatpush2.msra.mxu0 %v981
    %2509 = vmatprep.subr.mxu0 %v974
    %2510 = vmatpush2.msra.mxu0 %v973
    %2511 = vmatprep.subr.mxu0 %v966
    %2512 = vmatpush2.msra.mxu0 %v965
    %2513 = vmatprep.subr.mxu0 %v958
    %2514 = vmatpush2.msra.mxu0 %v957
    %2515 = vmatprep.subr.mxu0 %v950
    %2516 = vmatpush2.msra.mxu0 %v949
    %2517 = vmatprep.subr.mxu0 %v942
    %2518 = vmatpush2.msra.mxu0 %v941
    %2519 = vmatprep.subr.mxu0 %v934
    %2520 = vmatpush2.msra.mxu0 %v933
    %2521 = vmatprep.subr.mxu0 %v926
    %2522 = vmatpush2.msra.mxu0 %v925
    %2523 = vmatprep.subr.mxu0 %v918
    %2524 = vmatpush2.msra.mxu0 %v917
    %2525 = vmatprep.mubr.f32.mxu0 %v2460
    %2526 = vmatmul.mubr.f32.gmra.mxu0 %v2436
    %v2527 = vpop.f32.mrf.mxu0
    %v2528 = vadd.f32 0.0, %v2527
    %v2529 = vpop.f32.mrf.mxu0
    %v2530 = vadd.f32 0.0, %v2529
    %2531 = vdwg.mxu0
    %2532 = vmatprep.subr.mxu0 %v912
    %2533 = vmatpush1.msra.mxu0 %v911
    %2534 = vmatprep.subr.mxu0 %v904
    %2535 = vmatpush1.msra.mxu0 %v903
    %2536 = vmatprep.subr.mxu0 %v896
    %2537 = vmatpush1.msra.mxu0 %v895
    %2538 = vmatprep.subr.mxu0 %v888
    %2539 = vmatpush1.msra.mxu0 %v887
    %2540 = vmatprep.subr.mxu0 %v880
    %2541 = vmatpush1.msra.mxu0 %v879
    %2542 = vmatprep.subr.mxu0 %v872
    %2543 = vmatpush1.msra.mxu0 %v871
    %2544 = vmatprep.subr.mxu0 %v864
    %2545 = vmatpush1.msra.mxu0 %v863
    %2546 = vmatprep.subr.mxu0 %v856
    %2547 = vmatpush1.msra.mxu0 %v855
    %2548 = vmatprep.subr.mxu0 %v848
    %2549 = vmatpush1.msra.mxu0 %v847
    %2550 = vmatprep.subr.mxu0 %v840
    %2551 = vmatpush1.msra.mxu0 %v839
    %2552 = vmatprep.subr.mxu0 %v832
    %2553 = vmatpush1.msra.mxu0 %v831
    %2554 = vmatprep.subr.mxu0 %v824
    %2555 = vmatpush1.msra.mxu0 %v823
    %2556 = vmatprep.subr.mxu0 %v816
    %2557 = vmatpush1.msra.mxu0 %v815
    %2558 = vmatprep.subr.mxu0 %v808
    %2559 = vmatpush1.msra.mxu0 %v807
    %2560 = vmatprep.subr.mxu0 %v800
    %2561 = vmatpush1.msra.mxu0 %v799
    %2562 = vmatprep.subr.mxu0 %v792
    %2563 = vmatpush1.msra.mxu0 %v791
    %2564 = vmatprep.subr.mxu0 %v1040
    %2565 = vmatpush2.msra.mxu0 %v1039
    %2566 = vmatprep.subr.mxu0 %v1032
    %2567 = vmatpush2.msra.mxu0 %v1031
    %2568 = vmatprep.subr.mxu0 %v1024
    %2569 = vmatpush2.msra.mxu0 %v1023
    %2570 = vmatprep.subr.mxu0 %v1016
    %2571 = vmatpush2.msra.mxu0 %v1015
    %2572 = vmatprep.subr.mxu0 %v1008
    %2573 = vmatpush2.msra.mxu0 %v1007
    %2574 = vmatprep.subr.mxu0 %v1000
    %2575 = vmatpush2.msra.mxu0 %v999
    %2576 = vmatprep.subr.mxu0 %v992
    %2577 = vmatpush2.msra.mxu0 %v991
    %2578 = vmatprep.subr.mxu0 %v984
    %2579 = vmatpush2.msra.mxu0 %v983
    %2580 = vmatprep.subr.mxu0 %v976
    %2581 = vmatpush2.msra.mxu0 %v975
    %2582 = vmatprep.subr.mxu0 %v968
    %2583 = vmatpush2.msra.mxu0 %v967
    %2584 = vmatprep.subr.mxu0 %v960
    %2585 = vmatpush2.msra.mxu0 %v959
    %2586 = vmatprep.subr.mxu0 %v952
    %2587 = vmatpush2.msra.mxu0 %v951
    %2588 = vmatprep.subr.mxu0 %v944
    %2589 = vmatpush2.msra.mxu0 %v943
    %2590 = vmatprep.subr.mxu0 %v936
    %2591 = vmatpush2.msra.mxu0 %v935
    %2592 = vmatprep.subr.mxu0 %v928
    %2593 = vmatpush2.msra.mxu0 %v927
    %2594 = vmatprep.subr.mxu0 %v920
    %2595 = vmatpush2.msra.mxu0 %v919
    %2596 = vmatprep.mubr.f32.mxu0 %v2460
    %2597 = vmatmul.mubr.f32.gmra.mxu0 %v2436
    %v2598 = vpop.f32.mrf.mxu0
    %v2599 = vadd.f32 0.0, %v2598
    %v2600 = vpop.f32.mrf.mxu0
    %v2601 = vadd.f32 0.0, %v2600
    %2602 = vdwg.mxu0
    %2603 = vmatprep.subr.mxu0 %v914
    %2604 = vmatpush1.msra.mxu0 %v913
    %2605 = vmatprep.subr.mxu0 %v906
    %2606 = vmatpush1.msra.mxu0 %v905
    %2607 = vmatprep.subr.mxu0 %v898
    %2608 = vmatpush1.msra.mxu0 %v897
    %2609 = vmatprep.subr.mxu0 %v890
    %2610 = vmatpush1.msra.mxu0 %v889
    %2611 = vmatprep.subr.mxu0 %v882
    %2612 = vmatpush1.msra.mxu0 %v881
    %2613 = vmatprep.subr.mxu0 %v874
    %2614 = vmatpush1.msra.mxu0 %v873
    %2615 = vmatprep.subr.mxu0 %v866
    %2616 = vmatpush1.msra.mxu0 %v865
    %2617 = vmatprep.subr.mxu0 %v858
    %2618 = vmatpush1.msra.mxu0 %v857
    %2619 = vmatprep.subr.mxu0 %v850
    %2620 = vmatpush1.msra.mxu0 %v849
    %2621 = vmatprep.subr.mxu0 %v842
    %2622 = vmatpush1.msra.mxu0 %v841
    %2623 = vmatprep.subr.mxu0 %v834
    %2624 = vmatpush1.msra.mxu0 %v833
    %2625 = vmatprep.subr.mxu0 %v826
    %2626 = vmatpush1.msra.mxu0 %v825
    %2627 = vmatprep.subr.mxu0 %v818
    %2628 = vmatpush1.msra.mxu0 %v817
    %2629 = vmatprep.subr.mxu0 %v810
    %2630 = vmatpush1.msra.mxu0 %v809
    %2631 = vmatprep.subr.mxu0 %v802
    %2632 = vmatpush1.msra.mxu0 %v801
    %2633 = vmatprep.subr.mxu0 %v794
    %2634 = vmatpush1.msra.mxu0 %v793
    %2635 = vmatprep.subr.mxu0 %v1042
    %2636 = vmatpush2.msra.mxu0 %v1041
    %2637 = vmatprep.subr.mxu0 %v1034
    %2638 = vmatpush2.msra.mxu0 %v1033
    %2639 = vmatprep.subr.mxu0 %v1026
    %2640 = vmatpush2.msra.mxu0 %v1025
    %2641 = vmatprep.subr.mxu0 %v1018
    %2642 = vmatpush2.msra.mxu0 %v1017
    %2643 = vmatprep.subr.mxu0 %v1010
    %2644 = vmatpush2.msra.mxu0 %v1009
    %2645 = vmatprep.subr.mxu0 %v1002
    %2646 = vmatpush2.msra.mxu0 %v1001
    %2647 = vmatprep.subr.mxu0 %v994
    %2648 = vmatpush2.msra.mxu0 %v993
    %2649 = vmatprep.subr.mxu0 %v986
    %2650 = vmatpush2.msra.mxu0 %v985
    %2651 = vmatprep.subr.mxu0 %v978
    %2652 = vmatpush2.msra.mxu0 %v977
    %2653 = vmatprep.subr.mxu0 %v970
    %2654 = vmatpush2.msra.mxu0 %v969
    %2655 = vmatprep.subr.mxu0 %v962
    %2656 = vmatpush2.msra.mxu0 %v961
    %2657 = vmatprep.subr.mxu0 %v954
    %2658 = vmatpush2.msra.mxu0 %v953
    %2659 = vmatprep.subr.mxu0 %v946
    %2660 = vmatpush2.msra.mxu0 %v945
    %2661 = vmatprep.subr.mxu0 %v938
    %2662 = vmatpush2.msra.mxu0 %v937
    %2663 = vmatprep.subr.mxu0 %v930
    %2664 = vmatpush2.msra.mxu0 %v929
    %2665 = vmatprep.subr.mxu0 %v922
    %2666 = vmatpush2.msra.mxu0 %v921
    %2667 = vmatprep.mubr.f32.mxu0 %v2460
    %2668 = vmatmul.mubr.f32.gmra.mxu0 %v2436
    %v2669 = vpop.f32.mrf.mxu0
    %v2670 = vadd.f32 0.0, %v2669
    %v2671 = vpop.f32.mrf.mxu0
    %v2672 = vadd.f32 0.0, %v2671
    %2673 = vdwg.mxu0
    %2674 = vmatprep.subr.mxu0 %v916
    %2675 = vmatpush1.msra.mxu0 %v915
    %2676 = vmatprep.subr.mxu0 %v908
    %2677 = vmatpush1.msra.mxu0 %v907
    %2678 = vmatprep.subr.mxu0 %v900
    %2679 = vmatpush1.msra.mxu0 %v899
    %2680 = vmatprep.subr.mxu0 %v892
    %2681 = vmatpush1.msra.mxu0 %v891
    %2682 = vmatprep.subr.mxu0 %v884
    %2683 = vmatpush1.msra.mxu0 %v883
    %2684 = vmatprep.subr.mxu0 %v876
    %2685 = vmatpush1.msra.mxu0 %v875
    %2686 = vmatprep.subr.mxu0 %v868
    %2687 = vmatpush1.msra.mxu0 %v867
    %2688 = vmatprep.subr.mxu0 %v860
    %2689 = vmatpush1.msra.mxu0 %v859
    %2690 = vmatprep.subr.mxu0 %v852
    %2691 = vmatpush1.msra.mxu0 %v851
    %2692 = vmatprep.subr.mxu0 %v844
    %2693 = vmatpush1.msra.mxu0 %v843
    %2694 = vmatprep.subr.mxu0 %v836
    %2695 = vmatpush1.msra.mxu0 %v835
    %2696 = vmatprep.subr.mxu0 %v828
    %2697 = vmatpush1.msra.mxu0 %v827
    %2698 = vmatprep.subr.mxu0 %v820
    %2699 = vmatpush1.msra.mxu0 %v819
    %2700 = vmatprep.subr.mxu0 %v812
    %2701 = vmatpush1.msra.mxu0 %v811
    %2702 = vmatprep.subr.mxu0 %v804
    %2703 = vmatpush1.msra.mxu0 %v803
    %2704 = vmatprep.subr.mxu0 %v796
    %2705 = vmatpush1.msra.mxu0 %v795
    %2706 = vmatprep.subr.mxu0 %v1044
    %2707 = vmatpush2.msra.mxu0 %v1043
    %2708 = vmatprep.subr.mxu0 %v1036
    %2709 = vmatpush2.msra.mxu0 %v1035
    %2710 = vmatprep.subr.mxu0 %v1028
    %2711 = vmatpush2.msra.mxu0 %v1027
    %2712 = vmatprep.subr.mxu0 %v1020
    %2713 = vmatpush2.msra.mxu0 %v1019
    %2714 = vmatprep.subr.mxu0 %v1012
    %2715 = vmatpush2.msra.mxu0 %v1011
    %2716 = vmatprep.subr.mxu0 %v1004
    %2717 = vmatpush2.msra.mxu0 %v1003
    %2718 = vmatprep.subr.mxu0 %v996
    %2719 = vmatpush2.msra.mxu0 %v995
    %2720 = vmatprep.subr.mxu0 %v988
    %2721 = vmatpush2.msra.mxu0 %v987
    %2722 = vmatprep.subr.mxu0 %v980
    %2723 = vmatpush2.msra.mxu0 %v979
    %2724 = vmatprep.subr.mxu0 %v972
    %2725 = vmatpush2.msra.mxu0 %v971
    %2726 = vmatprep.subr.mxu0 %v964
    %2727 = vmatpush2.msra.mxu0 %v963
    %2728 = vmatprep.subr.mxu0 %v956
    %2729 = vmatpush2.msra.mxu0 %v955
    %2730 = vmatprep.subr.mxu0 %v948
    %2731 = vmatpush2.msra.mxu0 %v947
    %2732 = vmatprep.subr.mxu0 %v940
    %2733 = vmatpush2.msra.mxu0 %v939
    %2734 = vmatprep.subr.mxu0 %v932
    %2735 = vmatpush2.msra.mxu0 %v931
    %2736 = vmatprep.subr.mxu0 %v924
    %2737 = vmatpush2.msra.mxu0 %v923
    %2738 = vmatprep.mubr.f32.mxu0 %v2460
    %2739 = vmatmul.mubr.f32.gmra.mxu0 %v2436
    %v2740 = vpop.f32.mrf.mxu0
    %v2741 = vadd.f32 0.0, %v2740
    %v2742 = vpop.f32.mrf.mxu0
    %v2743 = vadd.f32 0.0, %v2742
    %2744 = vdwg.mxu0
    %s2745 = smul.addr %s2402, 8
    %s2746 = scalar_lea.vmem [#allocation4], %s2745
    %v2747 = vld [vmem:[%s2746] sm:$0xff]
    %v2748 = vld [vmem:[%s2746 + $0x8] sm:$0xff]
    %v2749 = vld [vmem:[%s2746 + $0x10] sm:$0xff]
    %v2750 = vld [vmem:[%s2746 + $0x18] sm:$0xff]
    %v2751 = vadd.f32 %v2528, %v2747
    %v2752 = vadd.f32 %v2530, %v2748
    %v2753 = vadd.f32 %v2599, %v2749
    %v2754 = vadd.f32 %v2601, %v2750
    %s2755 = smul.addr %s2391, 8
    %s2756 = scalar_lea.vmem [#allocation5], %s2755
    %v2757 = vld [vmem:[%s2756] sm:$0xff]
    %v2758 = vld [vmem:[%s2756 + $0x8] sm:$0xff]
    %v2759 = vld [vmem:[%s2756 + $0x10] sm:$0xff]
    %v2760 = vld [vmem:[%s2756 + $0x18] sm:$0xff]
    %v2761 = vadd.f32 %v2670, %v2757
    %v2762 = vadd.f32 %v2672, %v2758
    %v2763 = vadd.f32 %v2741, %v2759
    %v2764 = vadd.f32 %v2743, %v2760
    %v2765 = vxor.u32 %v2751, 2147483648
    %v2766 = vmul.f32 %v2765, 1.442695
    %v2767 = vpow.pop %v2766
    %v2768 = vadd.f32 %v2767, 1.0
    %v2769 = vrcp.pop %v2768
    %v2770 = vmul.f32 1.0, %v2769
    %v2771 = vxor.u32 %v2752, 2147483648
    %v2772 = vmul.f32 %v2771, 1.442695
    %v2773 = vpow.pop %v2772
    %v2774 = vadd.f32 %v2773, 1.0
    %v2775 = vrcp.pop %v2774
    %v2776 = vmul.f32 1.0, %v2775
    %v2777 = vtanh.pop %v2753
    %v2778 = vxor.u32 %v2754, 2147483648
    %v2779 = vmul.f32 %v2778, 1.442695
    %v2780 = vpow.pop %v2779
    %v2781 = vadd.f32 %v2780, 1.0
    %v2782 = vrcp.pop %v2781
    %v2783 = vmul.f32 1.0, %v2782
    %v2784 = vmul.f32 %v2776, %v2434
    %v2785 = vmul.f32 %v2770, %v2777
    %v2786 = vadd.f32 %v2784, %v2785
    %v2787 = vtanh.pop %v2786
    %v2788 = vmul.f32 %v2783, %v2787
    %v2789 = vxor.u32 %v2761, 2147483648
    %v2790 = vmul.f32 %v2789, 1.442695
    %v2791 = vpow.pop %v2790
    %v2792 = vadd.f32 %v2791, 1.0
    %v2793 = vrcp.pop %v2792
    %v2794 = vmul.f32 1.0, %v2793
    %v2795 = vxor.u32 %v2762, 2147483648
    %v2796 = vmul.f32 %v2795, 1.442695
    %v2797 = vpow.pop %v2796
    %v2798 = vadd.f32 %v2797, 1.0
    %v2799 = vrcp.pop %v2798
    %v2800 = vmul.f32 1.0, %v2799
    %v2801 = vtanh.pop %v2763
    %v2802 = vxor.u32 %v2764, 2147483648
    %v2803 = vmul.f32 %v2802, 1.442695
    %v2804 = vpow.pop %v2803
    %v2805 = vadd.f32 %v2804, 1.0
    %v2806 = vrcp.pop %v2805
    %v2807 = vmul.f32 1.0, %v2806
    %v2808 = vmul.f32 %v2800, %v2458
    %v2809 = vmul.f32 %v2794, %v2801
    %v2810 = vadd.f32 %v2808, %v2809
    %v2811 = vtanh.pop %v2810
    %v2812 = vmul.f32 %v2807, %v2811
    %2813 = vmatprep.subr.mxu0 %v910
    %2814 = vmatpush1.msra.mxu0 %v909
    %2815 = vmatprep.subr.mxu0 %v902
    %2816 = vmatpush1.msra.mxu0 %v901
    %2817 = vmatprep.subr.mxu0 %v894
    %2818 = vmatpush1.msra.mxu0 %v893
    %2819 = vmatprep.subr.mxu0 %v886
    %2820 = vmatpush1.msra.mxu0 %v885
    %2821 = vmatprep.subr.mxu0 %v878
    %2822 = vmatpush1.msra.mxu0 %v877
    %2823 = vmatprep.subr.mxu0 %v870
    %2824 = vmatpush1.msra.mxu0 %v869
    %2825 = vmatprep.subr.mxu0 %v862
    %2826 = vmatpush1.msra.mxu0 %v861
    %2827 = vmatprep.subr.mxu0 %v854
    %2828 = vmatpush1.msra.mxu0 %v853
    %2829 = vmatprep.subr.mxu0 %v846
    %2830 = vmatpush1.msra.mxu0 %v845
    %2831 = vmatprep.subr.mxu0 %v838
    %2832 = vmatpush1.msra.mxu0 %v837
    %2833 = vmatprep.subr.mxu0 %v830
    %2834 = vmatpush1.msra.mxu0 %v829
    %2835 = vmatprep.subr.mxu0 %v822
    %2836 = vmatpush1.msra.mxu0 %v821
    %2837 = vmatprep.subr.mxu0 %v814
    %2838 = vmatpush1.msra.mxu0 %v813
    %2839 = vmatprep.subr.mxu0 %v806
    %2840 = vmatpush1.msra.mxu0 %v805
    %2841 = vmatprep.subr.mxu0 %v798
    %2842 = vmatpush1.msra.mxu0 %v797
    %2843 = vmatprep.subr.mxu0 %v790
    %2844 = vmatpush1.msra.mxu0 %v789
    %2845 = vmatprep.subr.mxu0 %v1038
    %2846 = vmatpush2.msra.mxu0 %v1037
    %2847 = vmatprep.subr.mxu0 %v1030
    %2848 = vmatpush2.msra.mxu0 %v1029
    %2849 = vmatprep.subr.mxu0 %v1022
    %2850 = vmatpush2.msra.mxu0 %v1021
    %2851 = vmatprep.subr.mxu0 %v1014
    %2852 = vmatpush2.msra.mxu0 %v1013
    %2853 = vmatprep.subr.mxu0 %v1006
    %2854 = vmatpush2.msra.mxu0 %v1005
    %2855 = vmatprep.subr.mxu0 %v998
    %2856 = vmatpush2.msra.mxu0 %v997
    %2857 = vmatprep.subr.mxu0 %v990
    %2858 = vmatpush2.msra.mxu0 %v989
    %2859 = vmatprep.subr.mxu0 %v982
    %2860 = vmatpush2.msra.mxu0 %v981
    %2861 = vmatprep.subr.mxu0 %v974
    %2862 = vmatpush2.msra.mxu0 %v973
    %2863 = vmatprep.subr.mxu0 %v966
    %2864 = vmatpush2.msra.mxu0 %v965
    %2865 = vmatprep.subr.mxu0 %v958
    %2866 = vmatpush2.msra.mxu0 %v957
    %2867 = vmatprep.subr.mxu0 %v950
    %2868 = vmatpush2.msra.mxu0 %v949
    %2869 = vmatprep.subr.mxu0 %v942
    %2870 = vmatpush2.msra.mxu0 %v941
    %2871 = vmatprep.subr.mxu0 %v934
    %2872 = vmatpush2.msra.mxu0 %v933
    %2873 = vmatprep.subr.mxu0 %v926
    %2874 = vmatpush2.msra.mxu0 %v925
    %2875 = vmatprep.subr.mxu0 %v918
    %2876 = vmatpush2.msra.mxu0 %v917
    %2877 = vmatprep.mubr.f32.mxu0 %v2812
    %2878 = vmatmul.mubr.f32.gmra.mxu0 %v2788
    %v2879 = vpop.f32.mrf.mxu0
    %v2880 = vadd.f32 0.0, %v2879
    %v2881 = vpop.f32.mrf.mxu0
    %v2882 = vadd.f32 0.0, %v2881
    %2883 = vdwg.mxu0
    %2884 = vmatprep.subr.mxu0 %v912
    %2885 = vmatpush1.msra.mxu0 %v911
    %2886 = vmatprep.subr.mxu0 %v904
    %2887 = vmatpush1.msra.mxu0 %v903
    %2888 = vmatprep.subr.mxu0 %v896
    %2889 = vmatpush1.msra.mxu0 %v895
    %2890 = vmatprep.subr.mxu0 %v888
    %2891 = vmatpush1.msra.mxu0 %v887
    %2892 = vmatprep.subr.mxu0 %v880
    %2893 = vmatpush1.msra.mxu0 %v879
    %2894 = vmatprep.subr.mxu0 %v872
    %2895 = vmatpush1.msra.mxu0 %v871
    %2896 = vmatprep.subr.mxu0 %v864
    %2897 = vmatpush1.msra.mxu0 %v863
    %2898 = vmatprep.subr.mxu0 %v856
    %2899 = vmatpush1.msra.mxu0 %v855
    %2900 = vmatprep.subr.mxu0 %v848
    %2901 = vmatpush1.msra.mxu0 %v847
    %2902 = vmatprep.subr.mxu0 %v840
    %2903 = vmatpush1.msra.mxu0 %v839
    %2904 = vmatprep.subr.mxu0 %v832
    %2905 = vmatpush1.msra.mxu0 %v831
    %2906 = vmatprep.subr.mxu0 %v824
    %2907 = vmatpush1.msra.mxu0 %v823
    %2908 = vmatprep.subr.mxu0 %v816
    %2909 = vmatpush1.msra.mxu0 %v815
    %2910 = vmatprep.subr.mxu0 %v808
    %2911 = vmatpush1.msra.mxu0 %v807
    %2912 = vmatprep.subr.mxu0 %v800
    %2913 = vmatpush1.msra.mxu0 %v799
    %2914 = vmatprep.subr.mxu0 %v792
    %2915 = vmatpush1.msra.mxu0 %v791
    %2916 = vmatprep.subr.mxu0 %v1040
    %2917 = vmatpush2.msra.mxu0 %v1039
    %2918 = vmatprep.subr.mxu0 %v1032
    %2919 = vmatpush2.msra.mxu0 %v1031
    %2920 = vmatprep.subr.mxu0 %v1024
    %2921 = vmatpush2.msra.mxu0 %v1023
    %2922 = vmatprep.subr.mxu0 %v1016
    %2923 = vmatpush2.msra.mxu0 %v1015
    %2924 = vmatprep.subr.mxu0 %v1008
    %2925 = vmatpush2.msra.mxu0 %v1007
    %2926 = vmatprep.subr.mxu0 %v1000
    %2927 = vmatpush2.msra.mxu0 %v999
    %2928 = vmatprep.subr.mxu0 %v992
    %2929 = vmatpush2.msra.mxu0 %v991
    %2930 = vmatprep.subr.mxu0 %v984
    %2931 = vmatpush2.msra.mxu0 %v983
    %2932 = vmatprep.subr.mxu0 %v976
    %2933 = vmatpush2.msra.mxu0 %v975
    %2934 = vmatprep.subr.mxu0 %v968
    %2935 = vmatpush2.msra.mxu0 %v967
    %2936 = vmatprep.subr.mxu0 %v960
    %2937 = vmatpush2.msra.mxu0 %v959
    %2938 = vmatprep.subr.mxu0 %v952
    %2939 = vmatpush2.msra.mxu0 %v951
    %2940 = vmatprep.subr.mxu0 %v944
    %2941 = vmatpush2.msra.mxu0 %v943
    %2942 = vmatprep.subr.mxu0 %v936
    %2943 = vmatpush2.msra.mxu0 %v935
    %2944 = vmatprep.subr.mxu0 %v928
    %2945 = vmatpush2.msra.mxu0 %v927
    %2946 = vmatprep.subr.mxu0 %v920
    %2947 = vmatpush2.msra.mxu0 %v919
    %2948 = vmatprep.mubr.f32.mxu0 %v2812
    %2949 = vmatmul.mubr.f32.gmra.mxu0 %v2788
    %v2950 = vpop.f32.mrf.mxu0
    %v2951 = vadd.f32 0.0, %v2950
    %v2952 = vpop.f32.mrf.mxu0
    %v2953 = vadd.f32 0.0, %v2952
    %2954 = vdwg.mxu0
    %2955 = vmatprep.subr.mxu0 %v914
    %2956 = vmatpush1.msra.mxu0 %v913
    %2957 = vmatprep.subr.mxu0 %v906
    %2958 = vmatpush1.msra.mxu0 %v905
    %2959 = vmatprep.subr.mxu0 %v898
    %2960 = vmatpush1.msra.mxu0 %v897
    %2961 = vmatprep.subr.mxu0 %v890
    %2962 = vmatpush1.msra.mxu0 %v889
    %2963 = vmatprep.subr.mxu0 %v882
    %2964 = vmatpush1.msra.mxu0 %v881
    %2965 = vmatprep.subr.mxu0 %v874
    %2966 = vmatpush1.msra.mxu0 %v873
    %2967 = vmatprep.subr.mxu0 %v866
    %2968 = vmatpush1.msra.mxu0 %v865
    %2969 = vmatprep.subr.mxu0 %v858
    %2970 = vmatpush1.msra.mxu0 %v857
    %2971 = vmatprep.subr.mxu0 %v850
    %2972 = vmatpush1.msra.mxu0 %v849
    %2973 = vmatprep.subr.mxu0 %v842
    %2974 = vmatpush1.msra.mxu0 %v841
    %2975 = vmatprep.subr.mxu0 %v834
    %2976 = vmatpush1.msra.mxu0 %v833
    %2977 = vmatprep.subr.mxu0 %v826
    %2978 = vmatpush1.msra.mxu0 %v825
    %2979 = vmatprep.subr.mxu0 %v818
    %2980 = vmatpush1.msra.mxu0 %v817
    %2981 = vmatprep.subr.mxu0 %v810
    %2982 = vmatpush1.msra.mxu0 %v809
    %2983 = vmatprep.subr.mxu0 %v802
    %2984 = vmatpush1.msra.mxu0 %v801
    %2985 = vmatprep.subr.mxu0 %v794
    %2986 = vmatpush1.msra.mxu0 %v793
    %2987 = vmatprep.subr.mxu0 %v1042
    %2988 = vmatpush2.msra.mxu0 %v1041
    %2989 = vmatprep.subr.mxu0 %v1034
    %2990 = vmatpush2.msra.mxu0 %v1033
    %2991 = vmatprep.subr.mxu0 %v1026
    %2992 = vmatpush2.msra.mxu0 %v1025
    %2993 = vmatprep.subr.mxu0 %v1018
    %2994 = vmatpush2.msra.mxu0 %v1017
    %2995 = vmatprep.subr.mxu0 %v1010
    %2996 = vmatpush2.msra.mxu0 %v1009
    %2997 = vmatprep.subr.mxu0 %v1002
    %2998 = vmatpush2.msra.mxu0 %v1001
    %2999 = vmatprep.subr.mxu0 %v994
    %3000 = vmatpush2.msra.mxu0 %v993
    %3001 = vmatprep.subr.mxu0 %v986
    %3002 = vmatpush2.msra.mxu0 %v985
    %3003 = vmatprep.subr.mxu0 %v978
    %3004 = vmatpush2.msra.mxu0 %v977
    %3005 = vmatprep.subr.mxu0 %v970
    %3006 = vmatpush2.msra.mxu0 %v969
    %3007 = vmatprep.subr.mxu0 %v962
    %3008 = vmatpush2.msra.mxu0 %v961
    %3009 = vmatprep.subr.mxu0 %v954
    %3010 = vmatpush2.msra.mxu0 %v953
    %3011 = vmatprep.subr.mxu0 %v946
    %3012 = vmatpush2.msra.mxu0 %v945
    %3013 = vmatprep.subr.mxu0 %v938
    %3014 = vmatpush2.msra.mxu0 %v937
    %3015 = vmatprep.subr.mxu0 %v930
    %3016 = vmatpush2.msra.mxu0 %v929
    %3017 = vmatprep.subr.mxu0 %v922
    %3018 = vmatpush2.msra.mxu0 %v921
    %3019 = vmatprep.mubr.f32.mxu0 %v2812
    %3020 = vmatmul.mubr.f32.gmra.mxu0 %v2788
    %v3021 = vpop.f32.mrf.mxu0
    %v3022 = vadd.f32 0.0, %v3021
    %v3023 = vpop.f32.mrf.mxu0
    %v3024 = vadd.f32 0.0, %v3023
    %3025 = vdwg.mxu0
    %3026 = vmatprep.subr.mxu0 %v916
    %3027 = vmatpush1.msra.mxu0 %v915
    %3028 = vmatprep.subr.mxu0 %v908
    %3029 = vmatpush1.msra.mxu0 %v907
    %3030 = vmatprep.subr.mxu0 %v900
    %3031 = vmatpush1.msra.mxu0 %v899
    %3032 = vmatprep.subr.mxu0 %v892
    %3033 = vmatpush1.msra.mxu0 %v891
    %3034 = vmatprep.subr.mxu0 %v884
    %3035 = vmatpush1.msra.mxu0 %v883
    %3036 = vmatprep.subr.mxu0 %v876
    %3037 = vmatpush1.msra.mxu0 %v875
    %3038 = vmatprep.subr.mxu0 %v868
    %3039 = vmatpush1.msra.mxu0 %v867
    %3040 = vmatprep.subr.mxu0 %v860
    %3041 = vmatpush1.msra.mxu0 %v859
    %3042 = vmatprep.subr.mxu0 %v852
    %3043 = vmatpush1.msra.mxu0 %v851
    %3044 = vmatprep.subr.mxu0 %v844
    %3045 = vmatpush1.msra.mxu0 %v843
    %3046 = vmatprep.subr.mxu0 %v836
    %3047 = vmatpush1.msra.mxu0 %v835
    %3048 = vmatprep.subr.mxu0 %v828
    %3049 = vmatpush1.msra.mxu0 %v827
    %3050 = vmatprep.subr.mxu0 %v820
    %3051 = vmatpush1.msra.mxu0 %v819
    %3052 = vmatprep.subr.mxu0 %v812
    %3053 = vmatpush1.msra.mxu0 %v811
    %3054 = vmatprep.subr.mxu0 %v804
    %3055 = vmatpush1.msra.mxu0 %v803
    %3056 = vmatprep.subr.mxu0 %v796
    %3057 = vmatpush1.msra.mxu0 %v795
    %3058 = vmatprep.subr.mxu0 %v1044
    %3059 = vmatpush2.msra.mxu0 %v1043
    %3060 = vmatprep.subr.mxu0 %v1036
    %3061 = vmatpush2.msra.mxu0 %v1035
    %3062 = vmatprep.subr.mxu0 %v1028
    %3063 = vmatpush2.msra.mxu0 %v1027
    %3064 = vmatprep.subr.mxu0 %v1020
    %3065 = vmatpush2.msra.mxu0 %v1019
    %3066 = vmatprep.subr.mxu0 %v1012
    %3067 = vmatpush2.msra.mxu0 %v1011
    %3068 = vmatprep.subr.mxu0 %v1004
    %3069 = vmatpush2.msra.mxu0 %v1003
    %3070 = vmatprep.subr.mxu0 %v996
    %3071 = vmatpush2.msra.mxu0 %v995
    %3072 = vmatprep.subr.mxu0 %v988
    %3073 = vmatpush2.msra.mxu0 %v987
    %3074 = vmatprep.subr.mxu0 %v980
    %3075 = vmatpush2.msra.mxu0 %v979
    %3076 = vmatprep.subr.mxu0 %v972
    %3077 = vmatpush2.msra.mxu0 %v971
    %3078 = vmatprep.subr.mxu0 %v964
    %3079 = vmatpush2.msra.mxu0 %v963
    %3080 = vmatprep.subr.mxu0 %v956
    %3081 = vmatpush2.msra.mxu0 %v955
    %3082 = vmatprep.subr.mxu0 %v948
    %3083 = vmatpush2.msra.mxu0 %v947
    %3084 = vmatprep.subr.mxu0 %v940
    %3085 = vmatpush2.msra.mxu0 %v939
    %3086 = vmatprep.subr.mxu0 %v932
    %3087 = vmatpush2.msra.mxu0 %v931
    %3088 = vmatprep.subr.mxu0 %v924
    %3089 = vmatpush2.msra.mxu0 %v923
    %3090 = vmatprep.mubr.f32.mxu0 %v2812
    %3091 = vmatmul.mubr.f32.gmra.mxu0 %v2788
    %v3092 = vpop.f32.mrf.mxu0
    %v3093 = vadd.f32 0.0, %v3092
    %v3094 = vpop.f32.mrf.mxu0
    %v3095 = vadd.f32 0.0, %v3094
    %3096 = vdwg.mxu0
    %s3097 = smul.addr %s2048, 8
    %s3098 = scalar_lea.vmem [#allocation4], %s3097
    %v3099 = vld [vmem:[%s3098] sm:$0xff]
    %v3100 = vld [vmem:[%s3098 + $0x8] sm:$0xff]
    %v3101 = vld [vmem:[%s3098 + $0x10] sm:$0xff]
    %v3102 = vld [vmem:[%s3098 + $0x18] sm:$0xff]
    %v3103 = vadd.f32 %v2880, %v3099
    %v3104 = vadd.f32 %v2882, %v3100
    %v3105 = vadd.f32 %v2951, %v3101
    %v3106 = vadd.f32 %v2953, %v3102
    %s3107 = smul.addr %s2037, 8
    %s3108 = scalar_lea.vmem [#allocation5], %s3107
    %v3109 = vld [vmem:[%s3108] sm:$0xff]
    %v3110 = vld [vmem:[%s3108 + $0x8] sm:$0xff]
    %v3111 = vld [vmem:[%s3108 + $0x10] sm:$0xff]
    %v3112 = vld [vmem:[%s3108 + $0x18] sm:$0xff]
    %v3113 = vadd.f32 %v3022, %v3109
    %v3114 = vadd.f32 %v3024, %v3110
    %v3115 = vadd.f32 %v3093, %v3111
    %v3116 = vadd.f32 %v3095, %v3112
    %v3117 = vxor.u32 %v3103, 2147483648
    %v3118 = vmul.f32 %v3117, 1.442695
    %v3119 = vpow.pop %v3118
    %v3120 = vadd.f32 %v3119, 1.0
    %v3121 = vrcp.pop %v3120
    %v3122 = vmul.f32 1.0, %v3121
    %v3123 = vxor.u32 %v3104, 2147483648
    %v3124 = vmul.f32 %v3123, 1.442695
    %v3125 = vpow.pop %v3124
    %v3126 = vadd.f32 %v3125, 1.0
    %v3127 = vrcp.pop %v3126
    %v3128 = vmul.f32 1.0, %v3127
    %v3129 = vtanh.pop %v3105
    %v3130 = vxor.u32 %v3106, 2147483648
    %v3131 = vmul.f32 %v3130, 1.442695
    %v3132 = vpow.pop %v3131
    %v3133 = vadd.f32 %v3132, 1.0
    %v3134 = vrcp.pop %v3133
    %v3135 = vmul.f32 1.0, %v3134
    %v3136 = vmul.f32 %v3128, %v2786
    %v3137 = vmul.f32 %v3122, %v3129
    %v3138 = vadd.f32 %v3136, %v3137
    %v3139 = vtanh.pop %v3138
    %v3140 = vmul.f32 %v3135, %v3139
    %v3141 = vxor.u32 %v3113, 2147483648
    %v3142 = vmul.f32 %v3141, 1.442695
    %v3143 = vpow.pop %v3142
    %v3144 = vadd.f32 %v3143, 1.0
    %v3145 = vrcp.pop %v3144
    %v3146 = vmul.f32 1.0, %v3145
    %v3147 = vxor.u32 %v3114, 2147483648
    %v3148 = vmul.f32 %v3147, 1.442695
    %v3149 = vpow.pop %v3148
    %v3150 = vadd.f32 %v3149, 1.0
    %v3151 = vrcp.pop %v3150
    %v3152 = vmul.f32 1.0, %v3151
    %v3153 = vtanh.pop %v3115
    %v3154 = vxor.u32 %v3116, 2147483648
    %v3155 = vmul.f32 %v3154, 1.442695
    %v3156 = vpow.pop %v3155
    %v3157 = vadd.f32 %v3156, 1.0
    %v3158 = vrcp.pop %v3157
    %v3159 = vmul.f32 1.0, %v3158
    %v3160 = vmul.f32 %v3152, %v2810
    %v3161 = vmul.f32 %v3146, %v3153
    %v3162 = vadd.f32 %v3160, %v3161
    %v3163 = vtanh.pop %v3162
    %v3164 = vmul.f32 %v3159, %v3163
    %3165 = vmatprep.subr.mxu0 %v910
    %3166 = vmatpush1.msra.mxu0 %v909
    %3167 = vmatprep.subr.mxu0 %v902
    %3168 = vmatpush1.msra.mxu0 %v901
    %3169 = vmatprep.subr.mxu0 %v894
    %3170 = vmatpush1.msra.mxu0 %v893
    %3171 = vmatprep.subr.mxu0 %v886
    %3172 = vmatpush1.msra.mxu0 %v885
    %3173 = vmatprep.subr.mxu0 %v878
    %3174 = vmatpush1.msra.mxu0 %v877
    %3175 = vmatprep.subr.mxu0 %v870
    %3176 = vmatpush1.msra.mxu0 %v869
    %3177 = vmatprep.subr.mxu0 %v862
    %3178 = vmatpush1.msra.mxu0 %v861
    %3179 = vmatprep.subr.mxu0 %v854
    %3180 = vmatpush1.msra.mxu0 %v853
    %3181 = vmatprep.subr.mxu0 %v846
    %3182 = vmatpush1.msra.mxu0 %v845
    %3183 = vmatprep.subr.mxu0 %v838
    %3184 = vmatpush1.msra.mxu0 %v837
    %3185 = vmatprep.subr.mxu0 %v830
    %3186 = vmatpush1.msra.mxu0 %v829
    %3187 = vmatprep.subr.mxu0 %v822
    %3188 = vmatpush1.msra.mxu0 %v821
    %3189 = vmatprep.subr.mxu0 %v814
    %3190 = vmatpush1.msra.mxu0 %v813
    %3191 = vmatprep.subr.mxu0 %v806
    %3192 = vmatpush1.msra.mxu0 %v805
    %3193 = vmatprep.subr.mxu0 %v798
    %3194 = vmatpush1.msra.mxu0 %v797
    %3195 = vmatprep.subr.mxu0 %v790
    %3196 = vmatpush1.msra.mxu0 %v789
    %3197 = vmatprep.subr.mxu0 %v1038
    %3198 = vmatpush2.msra.mxu0 %v1037
    %3199 = vmatprep.subr.mxu0 %v1030
    %3200 = vmatpush2.msra.mxu0 %v1029
    %3201 = vmatprep.subr.mxu0 %v1022
    %3202 = vmatpush2.msra.mxu0 %v1021
    %3203 = vmatprep.subr.mxu0 %v1014
    %3204 = vmatpush2.msra.mxu0 %v1013
    %3205 = vmatprep.subr.mxu0 %v1006
    %3206 = vmatpush2.msra.mxu0 %v1005
    %3207 = vmatprep.subr.mxu0 %v998
    %3208 = vmatpush2.msra.mxu0 %v997
    %3209 = vmatprep.subr.mxu0 %v990
    %3210 = vmatpush2.msra.mxu0 %v989
    %3211 = vmatprep.subr.mxu0 %v982
    %3212 = vmatpush2.msra.mxu0 %v981
    %3213 = vmatprep.subr.mxu0 %v974
    %3214 = vmatpush2.msra.mxu0 %v973
    %3215 = vmatprep.subr.mxu0 %v966
    %3216 = vmatpush2.msra.mxu0 %v965
    %3217 = vmatprep.subr.mxu0 %v958
    %3218 = vmatpush2.msra.mxu0 %v957
    %3219 = vmatprep.subr.mxu0 %v950
    %3220 = vmatpush2.msra.mxu0 %v949
    %3221 = vmatprep.subr.mxu0 %v942
    %3222 = vmatpush2.msra.mxu0 %v941
    %3223 = vmatprep.subr.mxu0 %v934
    %3224 = vmatpush2.msra.mxu0 %v933
    %3225 = vmatprep.subr.mxu0 %v926
    %3226 = vmatpush2.msra.mxu0 %v925
    %3227 = vmatprep.subr.mxu0 %v918
    %3228 = vmatpush2.msra.mxu0 %v917
    %3229 = vmatprep.mubr.f32.mxu0 %v3164
    %3230 = vmatmul.mubr.f32.gmra.mxu0 %v3140
    %v3231 = vpop.f32.mrf.mxu0
    %v3232 = vadd.f32 0.0, %v3231
    %v3233 = vpop.f32.mrf.mxu0
    %v3234 = vadd.f32 0.0, %v3233
    %3235 = vdwg.mxu0
    %3236 = vmatprep.subr.mxu0 %v912
    %3237 = vmatpush1.msra.mxu0 %v911
    %3238 = vmatprep.subr.mxu0 %v904
    %3239 = vmatpush1.msra.mxu0 %v903
    %3240 = vmatprep.subr.mxu0 %v896
    %3241 = vmatpush1.msra.mxu0 %v895
    %3242 = vmatprep.subr.mxu0 %v888
    %3243 = vmatpush1.msra.mxu0 %v887
    %3244 = vmatprep.subr.mxu0 %v880
    %3245 = vmatpush1.msra.mxu0 %v879
    %3246 = vmatprep.subr.mxu0 %v872
    %3247 = vmatpush1.msra.mxu0 %v871
    %3248 = vmatprep.subr.mxu0 %v864
    %3249 = vmatpush1.msra.mxu0 %v863
    %3250 = vmatprep.subr.mxu0 %v856
    %3251 = vmatpush1.msra.mxu0 %v855
    %3252 = vmatprep.subr.mxu0 %v848
    %3253 = vmatpush1.msra.mxu0 %v847
    %3254 = vmatprep.subr.mxu0 %v840
    %3255 = vmatpush1.msra.mxu0 %v839
    %3256 = vmatprep.subr.mxu0 %v832
    %3257 = vmatpush1.msra.mxu0 %v831
    %3258 = vmatprep.subr.mxu0 %v824
    %3259 = vmatpush1.msra.mxu0 %v823
    %3260 = vmatprep.subr.mxu0 %v816
    %3261 = vmatpush1.msra.mxu0 %v815
    %3262 = vmatprep.subr.mxu0 %v808
    %3263 = vmatpush1.msra.mxu0 %v807
    %3264 = vmatprep.subr.mxu0 %v800
    %3265 = vmatpush1.msra.mxu0 %v799
    %3266 = vmatprep.subr.mxu0 %v792
    %3267 = vmatpush1.msra.mxu0 %v791
    %3268 = vmatprep.subr.mxu0 %v1040
    %3269 = vmatpush2.msra.mxu0 %v1039
    %3270 = vmatprep.subr.mxu0 %v1032
    %3271 = vmatpush2.msra.mxu0 %v1031
    %3272 = vmatprep.subr.mxu0 %v1024
    %3273 = vmatpush2.msra.mxu0 %v1023
    %3274 = vmatprep.subr.mxu0 %v1016
    %3275 = vmatpush2.msra.mxu0 %v1015
    %3276 = vmatprep.subr.mxu0 %v1008
    %3277 = vmatpush2.msra.mxu0 %v1007
    %3278 = vmatprep.subr.mxu0 %v1000
    %3279 = vmatpush2.msra.mxu0 %v999
    %3280 = vmatprep.subr.mxu0 %v992
    %3281 = vmatpush2.msra.mxu0 %v991
    %3282 = vmatprep.subr.mxu0 %v984
    %3283 = vmatpush2.msra.mxu0 %v983
    %3284 = vmatprep.subr.mxu0 %v976
    %3285 = vmatpush2.msra.mxu0 %v975
    %3286 = vmatprep.subr.mxu0 %v968
    %3287 = vmatpush2.msra.mxu0 %v967
    %3288 = vmatprep.subr.mxu0 %v960
    %3289 = vmatpush2.msra.mxu0 %v959
    %3290 = vmatprep.subr.mxu0 %v952
    %3291 = vmatpush2.msra.mxu0 %v951
    %3292 = vmatprep.subr.mxu0 %v944
    %3293 = vmatpush2.msra.mxu0 %v943
    %3294 = vmatprep.subr.mxu0 %v936
    %3295 = vmatpush2.msra.mxu0 %v935
    %3296 = vmatprep.subr.mxu0 %v928
    %3297 = vmatpush2.msra.mxu0 %v927
    %3298 = vmatprep.subr.mxu0 %v920
    %3299 = vmatpush2.msra.mxu0 %v919
    %3300 = vmatprep.mubr.f32.mxu0 %v3164
    %3301 = vmatmul.mubr.f32.gmra.mxu0 %v3140
    %v3302 = vpop.f32.mrf.mxu0
    %v3303 = vadd.f32 0.0, %v3302
    %v3304 = vpop.f32.mrf.mxu0
    %v3305 = vadd.f32 0.0, %v3304
    %3306 = vdwg.mxu0
    %3307 = vmatprep.subr.mxu0 %v914
    %3308 = vmatpush1.msra.mxu0 %v913
    %3309 = vmatprep.subr.mxu0 %v906
    %3310 = vmatpush1.msra.mxu0 %v905
    %3311 = vmatprep.subr.mxu0 %v898
    %3312 = vmatpush1.msra.mxu0 %v897
    %3313 = vmatprep.subr.mxu0 %v890
    %3314 = vmatpush1.msra.mxu0 %v889
    %3315 = vmatprep.subr.mxu0 %v882
    %3316 = vmatpush1.msra.mxu0 %v881
    %3317 = vmatprep.subr.mxu0 %v874
    %3318 = vmatpush1.msra.mxu0 %v873
    %3319 = vmatprep.subr.mxu0 %v866
    %3320 = vmatpush1.msra.mxu0 %v865
    %3321 = vmatprep.subr.mxu0 %v858
    %3322 = vmatpush1.msra.mxu0 %v857
    %3323 = vmatprep.subr.mxu0 %v850
    %3324 = vmatpush1.msra.mxu0 %v849
    %3325 = vmatprep.subr.mxu0 %v842
    %3326 = vmatpush1.msra.mxu0 %v841
    %3327 = vmatprep.subr.mxu0 %v834
    %3328 = vmatpush1.msra.mxu0 %v833
    %3329 = vmatprep.subr.mxu0 %v826
    %3330 = vmatpush1.msra.mxu0 %v825
    %3331 = vmatprep.subr.mxu0 %v818
    %3332 = vmatpush1.msra.mxu0 %v817
    %3333 = vmatprep.subr.mxu0 %v810
    %3334 = vmatpush1.msra.mxu0 %v809
    %3335 = vmatprep.subr.mxu0 %v802
    %3336 = vmatpush1.msra.mxu0 %v801
    %3337 = vmatprep.subr.mxu0 %v794
    %3338 = vmatpush1.msra.mxu0 %v793
    %3339 = vmatprep.subr.mxu0 %v1042
    %3340 = vmatpush2.msra.mxu0 %v1041
    %3341 = vmatprep.subr.mxu0 %v1034
    %3342 = vmatpush2.msra.mxu0 %v1033
    %3343 = vmatprep.subr.mxu0 %v1026
    %3344 = vmatpush2.msra.mxu0 %v1025
    %3345 = vmatprep.subr.mxu0 %v1018
    %3346 = vmatpush2.msra.mxu0 %v1017
    %3347 = vmatprep.subr.mxu0 %v1010
    %3348 = vmatpush2.msra.mxu0 %v1009
    %3349 = vmatprep.subr.mxu0 %v1002
    %3350 = vmatpush2.msra.mxu0 %v1001
    %3351 = vmatprep.subr.mxu0 %v994
    %3352 = vmatpush2.msra.mxu0 %v993
    %3353 = vmatprep.subr.mxu0 %v986
    %3354 = vmatpush2.msra.mxu0 %v985
    %3355 = vmatprep.subr.mxu0 %v978
    %3356 = vmatpush2.msra.mxu0 %v977
    %3357 = vmatprep.subr.mxu0 %v970
    %3358 = vmatpush2.msra.mxu0 %v969
    %3359 = vmatprep.subr.mxu0 %v962
    %3360 = vmatpush2.msra.mxu0 %v961
    %3361 = vmatprep.subr.mxu0 %v954
    %3362 = vmatpush2.msra.mxu0 %v953
    %3363 = vmatprep.subr.mxu0 %v946
    %3364 = vmatpush2.msra.mxu0 %v945
    %3365 = vmatprep.subr.mxu0 %v938
    %3366 = vmatpush2.msra.mxu0 %v937
    %3367 = vmatprep.subr.mxu0 %v930
    %3368 = vmatpush2.msra.mxu0 %v929
    %3369 = vmatprep.subr.mxu0 %v922
    %3370 = vmatpush2.msra.mxu0 %v921
    %3371 = vmatprep.mubr.f32.mxu0 %v3164
    %3372 = vmatmul.mubr.f32.gmra.mxu0 %v3140
    %v3373 = vpop.f32.mrf.mxu0
    %v3374 = vadd.f32 0.0, %v3373
    %v3375 = vpop.f32.mrf.mxu0
    %v3376 = vadd.f32 0.0, %v3375
    %3377 = vdwg.mxu0
    %3378 = vmatprep.subr.mxu0 %v916
    %3379 = vmatpush1.msra.mxu0 %v915
    %3380 = vmatprep.subr.mxu0 %v908
    %3381 = vmatpush1.msra.mxu0 %v907
    %3382 = vmatprep.subr.mxu0 %v900
    %3383 = vmatpush1.msra.mxu0 %v899
    %3384 = vmatprep.subr.mxu0 %v892
    %3385 = vmatpush1.msra.mxu0 %v891
    %3386 = vmatprep.subr.mxu0 %v884
    %3387 = vmatpush1.msra.mxu0 %v883
    %3388 = vmatprep.subr.mxu0 %v876
    %3389 = vmatpush1.msra.mxu0 %v875
    %3390 = vmatprep.subr.mxu0 %v868
    %3391 = vmatpush1.msra.mxu0 %v867
    %3392 = vmatprep.subr.mxu0 %v860
    %3393 = vmatpush1.msra.mxu0 %v859
    %3394 = vmatprep.subr.mxu0 %v852
    %3395 = vmatpush1.msra.mxu0 %v851
    %3396 = vmatprep.subr.mxu0 %v844
    %3397 = vmatpush1.msra.mxu0 %v843
    %3398 = vmatprep.subr.mxu0 %v836
    %3399 = vmatpush1.msra.mxu0 %v835
    %3400 = vmatprep.subr.mxu0 %v828
    %3401 = vmatpush1.msra.mxu0 %v827
    %3402 = vmatprep.subr.mxu0 %v820
    %3403 = vmatpush1.msra.mxu0 %v819
    %3404 = vmatprep.subr.mxu0 %v812
    %3405 = vmatpush1.msra.mxu0 %v811
    %3406 = vmatprep.subr.mxu0 %v804
    %3407 = vmatpush1.msra.mxu0 %v803
    %3408 = vmatprep.subr.mxu0 %v796
    %3409 = vmatpush1.msra.mxu0 %v795
    %3410 = vmatprep.subr.mxu0 %v1044
    %3411 = vmatpush2.msra.mxu0 %v1043
    %3412 = vmatprep.subr.mxu0 %v1036
    %3413 = vmatpush2.msra.mxu0 %v1035
    %3414 = vmatprep.subr.mxu0 %v1028
    %3415 = vmatpush2.msra.mxu0 %v1027
    %3416 = vmatprep.subr.mxu0 %v1020
    %3417 = vmatpush2.msra.mxu0 %v1019
    %3418 = vmatprep.subr.mxu0 %v1012
    %3419 = vmatpush2.msra.mxu0 %v1011
    %3420 = vmatprep.subr.mxu0 %v1004
    %3421 = vmatpush2.msra.mxu0 %v1003
    %3422 = vmatprep.subr.mxu0 %v996
    %3423 = vmatpush2.msra.mxu0 %v995
    %3424 = vmatprep.subr.mxu0 %v988
    %3425 = vmatpush2.msra.mxu0 %v987
    %3426 = vmatprep.subr.mxu0 %v980
    %3427 = vmatpush2.msra.mxu0 %v979
    %3428 = vmatprep.subr.mxu0 %v972
    %3429 = vmatpush2.msra.mxu0 %v971
    %3430 = vmatprep.subr.mxu0 %v964
    %3431 = vmatpush2.msra.mxu0 %v963
    %3432 = vmatprep.subr.mxu0 %v956
    %3433 = vmatpush2.msra.mxu0 %v955
    %3434 = vmatprep.subr.mxu0 %v948
    %3435 = vmatpush2.msra.mxu0 %v947
    %3436 = vmatprep.subr.mxu0 %v940
    %3437 = vmatpush2.msra.mxu0 %v939
    %3438 = vmatprep.subr.mxu0 %v932
    %3439 = vmatpush2.msra.mxu0 %v931
    %3440 = vmatprep.subr.mxu0 %v924
    %3441 = vmatpush2.msra.mxu0 %v923
    %3442 = vmatprep.mubr.f32.mxu0 %v3164
    %3443 = vmatmul.mubr.f32.gmra.mxu0 %v3140
    %v3444 = vpop.f32.mrf.mxu0
    %v3445 = vadd.f32 0.0, %v3444
    %v3446 = vpop.f32.mrf.mxu0
    %v3447 = vadd.f32 0.0, %v3446
    %3448 = vdwg.mxu0
    %s3449 = smul.addr %s1694, 8
    %s3450 = scalar_lea.vmem [#allocation4], %s3449
    %v3451 = vld [vmem:[%s3450] sm:$0xff]
    %v3452 = vld [vmem:[%s3450 + $0x8] sm:$0xff]
    %v3453 = vld [vmem:[%s3450 + $0x10] sm:$0xff]
    %v3454 = vld [vmem:[%s3450 + $0x18] sm:$0xff]
    %v3455 = vadd.f32 %v3232, %v3451
    %v3456 = vadd.f32 %v3234, %v3452
    %v3457 = vadd.f32 %v3303, %v3453
    %v3458 = vadd.f32 %v3305, %v3454
    %s3459 = smul.addr %s1683, 8
    %s3460 = scalar_lea.vmem [#allocation5], %s3459
    %v3461 = vld [vmem:[%s3460] sm:$0xff]
    %v3462 = vld [vmem:[%s3460 + $0x8] sm:$0xff]
    %v3463 = vld [vmem:[%s3460 + $0x10] sm:$0xff]
    %v3464 = vld [vmem:[%s3460 + $0x18] sm:$0xff]
    %v3465 = vadd.f32 %v3374, %v3461
    %v3466 = vadd.f32 %v3376, %v3462
    %v3467 = vadd.f32 %v3445, %v3463
    %v3468 = vadd.f32 %v3447, %v3464
    %v3469 = vxor.u32 %v3455, 2147483648
    %v3470 = vmul.f32 %v3469, 1.442695
    %v3471 = vpow.pop %v3470
    %v3472 = vadd.f32 %v3471, 1.0
    %v3473 = vrcp.pop %v3472
    %v3474 = vmul.f32 1.0, %v3473
    %v3475 = vxor.u32 %v3456, 2147483648
    %v3476 = vmul.f32 %v3475, 1.442695
    %v3477 = vpow.pop %v3476
    %v3478 = vadd.f32 %v3477, 1.0
    %v3479 = vrcp.pop %v3478
    %v3480 = vmul.f32 1.0, %v3479
    %v3481 = vtanh.pop %v3457
    %v3482 = vxor.u32 %v3458, 2147483648
    %v3483 = vmul.f32 %v3482, 1.442695
    %v3484 = vpow.pop %v3483
    %v3485 = vadd.f32 %v3484, 1.0
    %v3486 = vrcp.pop %v3485
    %v3487 = vmul.f32 1.0, %v3486
    %v3488 = vmul.f32 %v3480, %v3138
    %v3489 = vmul.f32 %v3474, %v3481
    %v3490 = vadd.f32 %v3488, %v3489
    %v3491 = vtanh.pop %v3490
    %v3492 = vmul.f32 %v3487, %v3491
    %v3493 = vxor.u32 %v3465, 2147483648
    %v3494 = vmul.f32 %v3493, 1.442695
    %v3495 = vpow.pop %v3494
    %v3496 = vadd.f32 %v3495, 1.0
    %v3497 = vrcp.pop %v3496
    %v3498 = vmul.f32 1.0, %v3497
    %v3499 = vxor.u32 %v3466, 2147483648
    %v3500 = vmul.f32 %v3499, 1.442695
    %v3501 = vpow.pop %v3500
    %v3502 = vadd.f32 %v3501, 1.0
    %v3503 = vrcp.pop %v3502
    %v3504 = vmul.f32 1.0, %v3503
    %v3505 = vtanh.pop %v3467
    %v3506 = vxor.u32 %v3468, 2147483648
    %v3507 = vmul.f32 %v3506, 1.442695
    %v3508 = vpow.pop %v3507
    %v3509 = vadd.f32 %v3508, 1.0
    %v3510 = vrcp.pop %v3509
    %v3511 = vmul.f32 1.0, %v3510
    %v3512 = vmul.f32 %v3504, %v3162
    %v3513 = vmul.f32 %v3498, %v3505
    %v3514 = vadd.f32 %v3512, %v3513
    %v3515 = vtanh.pop %v3514
    %v3516 = vmul.f32 %v3511, %v3515
    %3517 = vmatprep.subr.mxu0 %v910
    %3518 = vmatpush1.msra.mxu0 %v909
    %3519 = vmatprep.subr.mxu0 %v902
    %3520 = vmatpush1.msra.mxu0 %v901
    %3521 = vmatprep.subr.mxu0 %v894
    %3522 = vmatpush1.msra.mxu0 %v893
    %3523 = vmatprep.subr.mxu0 %v886
    %3524 = vmatpush1.msra.mxu0 %v885
    %3525 = vmatprep.subr.mxu0 %v878
    %3526 = vmatpush1.msra.mxu0 %v877
    %3527 = vmatprep.subr.mxu0 %v870
    %3528 = vmatpush1.msra.mxu0 %v869
    %3529 = vmatprep.subr.mxu0 %v862
    %3530 = vmatpush1.msra.mxu0 %v861
    %3531 = vmatprep.subr.mxu0 %v854
    %3532 = vmatpush1.msra.mxu0 %v853
    %3533 = vmatprep.subr.mxu0 %v846
    %3534 = vmatpush1.msra.mxu0 %v845
    %3535 = vmatprep.subr.mxu0 %v838
    %3536 = vmatpush1.msra.mxu0 %v837
    %3537 = vmatprep.subr.mxu0 %v830
    %3538 = vmatpush1.msra.mxu0 %v829
    %3539 = vmatprep.subr.mxu0 %v822
    %3540 = vmatpush1.msra.mxu0 %v821
    %3541 = vmatprep.subr.mxu0 %v814
    %3542 = vmatpush1.msra.mxu0 %v813
    %3543 = vmatprep.subr.mxu0 %v806
    %3544 = vmatpush1.msra.mxu0 %v805
    %3545 = vmatprep.subr.mxu0 %v798
    %3546 = vmatpush1.msra.mxu0 %v797
    %3547 = vmatprep.subr.mxu0 %v790
    %3548 = vmatpush1.msra.mxu0 %v789
    %3549 = vmatprep.subr.mxu0 %v1038
    %3550 = vmatpush2.msra.mxu0 %v1037
    %3551 = vmatprep.subr.mxu0 %v1030
    %3552 = vmatpush2.msra.mxu0 %v1029
    %3553 = vmatprep.subr.mxu0 %v1022
    %3554 = vmatpush2.msra.mxu0 %v1021
    %3555 = vmatprep.subr.mxu0 %v1014
    %3556 = vmatpush2.msra.mxu0 %v1013
    %3557 = vmatprep.subr.mxu0 %v1006
    %3558 = vmatpush2.msra.mxu0 %v1005
    %3559 = vmatprep.subr.mxu0 %v998
    %3560 = vmatpush2.msra.mxu0 %v997
    %3561 = vmatprep.subr.mxu0 %v990
    %3562 = vmatpush2.msra.mxu0 %v989
    %3563 = vmatprep.subr.mxu0 %v982
    %3564 = vmatpush2.msra.mxu0 %v981
    %3565 = vmatprep.subr.mxu0 %v974
    %3566 = vmatpush2.msra.mxu0 %v973
    %3567 = vmatprep.subr.mxu0 %v966
    %3568 = vmatpush2.msra.mxu0 %v965
    %3569 = vmatprep.subr.mxu0 %v958
    %3570 = vmatpush2.msra.mxu0 %v957
    %3571 = vmatprep.subr.mxu0 %v950
    %3572 = vmatpush2.msra.mxu0 %v949
    %3573 = vmatprep.subr.mxu0 %v942
    %3574 = vmatpush2.msra.mxu0 %v941
    %3575 = vmatprep.subr.mxu0 %v934
    %3576 = vmatpush2.msra.mxu0 %v933
    %3577 = vmatprep.subr.mxu0 %v926
    %3578 = vmatpush2.msra.mxu0 %v925
    %3579 = vmatprep.subr.mxu0 %v918
    %3580 = vmatpush2.msra.mxu0 %v917
    %3581 = vmatprep.mubr.f32.mxu0 %v3516
    %3582 = vmatmul.mubr.f32.gmra.mxu0 %v3492
    %v3583 = vpop.f32.mrf.mxu0
    %v3584 = vadd.f32 0.0, %v3583
    %v3585 = vpop.f32.mrf.mxu0
    %v3586 = vadd.f32 0.0, %v3585
    %3587 = vdwg.mxu0
    %3588 = vmatprep.subr.mxu0 %v912
    %3589 = vmatpush1.msra.mxu0 %v911
    %3590 = vmatprep.subr.mxu0 %v904
    %3591 = vmatpush1.msra.mxu0 %v903
    %3592 = vmatprep.subr.mxu0 %v896
    %3593 = vmatpush1.msra.mxu0 %v895
    %3594 = vmatprep.subr.mxu0 %v888
    %3595 = vmatpush1.msra.mxu0 %v887
    %3596 = vmatprep.subr.mxu0 %v880
    %3597 = vmatpush1.msra.mxu0 %v879
    %3598 = vmatprep.subr.mxu0 %v872
    %3599 = vmatpush1.msra.mxu0 %v871
    %3600 = vmatprep.subr.mxu0 %v864
    %3601 = vmatpush1.msra.mxu0 %v863
    %3602 = vmatprep.subr.mxu0 %v856
    %3603 = vmatpush1.msra.mxu0 %v855
    %3604 = vmatprep.subr.mxu0 %v848
    %3605 = vmatpush1.msra.mxu0 %v847
    %3606 = vmatprep.subr.mxu0 %v840
    %3607 = vmatpush1.msra.mxu0 %v839
    %3608 = vmatprep.subr.mxu0 %v832
    %3609 = vmatpush1.msra.mxu0 %v831
    %3610 = vmatprep.subr.mxu0 %v824
    %3611 = vmatpush1.msra.mxu0 %v823
    %3612 = vmatprep.subr.mxu0 %v816
    %3613 = vmatpush1.msra.mxu0 %v815
    %3614 = vmatprep.subr.mxu0 %v808
    %3615 = vmatpush1.msra.mxu0 %v807
    %3616 = vmatprep.subr.mxu0 %v800
    %3617 = vmatpush1.msra.mxu0 %v799
    %3618 = vmatprep.subr.mxu0 %v792
    %3619 = vmatpush1.msra.mxu0 %v791
    %3620 = vmatprep.subr.mxu0 %v1040
    %3621 = vmatpush2.msra.mxu0 %v1039
    %3622 = vmatprep.subr.mxu0 %v1032
    %3623 = vmatpush2.msra.mxu0 %v1031
    %3624 = vmatprep.subr.mxu0 %v1024
    %3625 = vmatpush2.msra.mxu0 %v1023
    %3626 = vmatprep.subr.mxu0 %v1016
    %3627 = vmatpush2.msra.mxu0 %v1015
    %3628 = vmatprep.subr.mxu0 %v1008
    %3629 = vmatpush2.msra.mxu0 %v1007
    %3630 = vmatprep.subr.mxu0 %v1000
    %3631 = vmatpush2.msra.mxu0 %v999
    %3632 = vmatprep.subr.mxu0 %v992
    %3633 = vmatpush2.msra.mxu0 %v991
    %3634 = vmatprep.subr.mxu0 %v984
    %3635 = vmatpush2.msra.mxu0 %v983
    %3636 = vmatprep.subr.mxu0 %v976
    %3637 = vmatpush2.msra.mxu0 %v975
    %3638 = vmatprep.subr.mxu0 %v968
    %3639 = vmatpush2.msra.mxu0 %v967
    %3640 = vmatprep.subr.mxu0 %v960
    %3641 = vmatpush2.msra.mxu0 %v959
    %3642 = vmatprep.subr.mxu0 %v952
    %3643 = vmatpush2.msra.mxu0 %v951
    %3644 = vmatprep.subr.mxu0 %v944
    %3645 = vmatpush2.msra.mxu0 %v943
    %3646 = vmatprep.subr.mxu0 %v936
    %3647 = vmatpush2.msra.mxu0 %v935
    %3648 = vmatprep.subr.mxu0 %v928
    %3649 = vmatpush2.msra.mxu0 %v927
    %3650 = vmatprep.subr.mxu0 %v920
    %3651 = vmatpush2.msra.mxu0 %v919
    %3652 = vmatprep.mubr.f32.mxu0 %v3516
    %3653 = vmatmul.mubr.f32.gmra.mxu0 %v3492
    %v3654 = vpop.f32.mrf.mxu0
    %v3655 = vadd.f32 0.0, %v3654
    %v3656 = vpop.f32.mrf.mxu0
    %v3657 = vadd.f32 0.0, %v3656
    %3658 = vdwg.mxu0
    %3659 = vmatprep.subr.mxu0 %v914
    %3660 = vmatpush1.msra.mxu0 %v913
    %3661 = vmatprep.subr.mxu0 %v906
    %3662 = vmatpush1.msra.mxu0 %v905
    %3663 = vmatprep.subr.mxu0 %v898
    %3664 = vmatpush1.msra.mxu0 %v897
    %3665 = vmatprep.subr.mxu0 %v890
    %3666 = vmatpush1.msra.mxu0 %v889
    %3667 = vmatprep.subr.mxu0 %v882
    %3668 = vmatpush1.msra.mxu0 %v881
    %3669 = vmatprep.subr.mxu0 %v874
    %3670 = vmatpush1.msra.mxu0 %v873
    %3671 = vmatprep.subr.mxu0 %v866
    %3672 = vmatpush1.msra.mxu0 %v865
    %3673 = vmatprep.subr.mxu0 %v858
    %3674 = vmatpush1.msra.mxu0 %v857
    %3675 = vmatprep.subr.mxu0 %v850
    %3676 = vmatpush1.msra.mxu0 %v849
    %3677 = vmatprep.subr.mxu0 %v842
    %3678 = vmatpush1.msra.mxu0 %v841
    %3679 = vmatprep.subr.mxu0 %v834
    %3680 = vmatpush1.msra.mxu0 %v833
    %3681 = vmatprep.subr.mxu0 %v826
    %3682 = vmatpush1.msra.mxu0 %v825
    %3683 = vmatprep.subr.mxu0 %v818
    %3684 = vmatpush1.msra.mxu0 %v817
    %3685 = vmatprep.subr.mxu0 %v810
    %3686 = vmatpush1.msra.mxu0 %v809
    %3687 = vmatprep.subr.mxu0 %v802
    %3688 = vmatpush1.msra.mxu0 %v801
    %3689 = vmatprep.subr.mxu0 %v794
    %3690 = vmatpush1.msra.mxu0 %v793
    %3691 = vmatprep.subr.mxu0 %v1042
    %3692 = vmatpush2.msra.mxu0 %v1041
    %3693 = vmatprep.subr.mxu0 %v1034
    %3694 = vmatpush2.msra.mxu0 %v1033
    %3695 = vmatprep.subr.mxu0 %v1026
    %3696 = vmatpush2.msra.mxu0 %v1025
    %3697 = vmatprep.subr.mxu0 %v1018
    %3698 = vmatpush2.msra.mxu0 %v1017
    %3699 = vmatprep.subr.mxu0 %v1010
    %3700 = vmatpush2.msra.mxu0 %v1009
    %3701 = vmatprep.subr.mxu0 %v1002
    %3702 = vmatpush2.msra.mxu0 %v1001
    %3703 = vmatprep.subr.mxu0 %v994
    %3704 = vmatpush2.msra.mxu0 %v993
    %3705 = vmatprep.subr.mxu0 %v986
    %3706 = vmatpush2.msra.mxu0 %v985
    %3707 = vmatprep.subr.mxu0 %v978
    %3708 = vmatpush2.msra.mxu0 %v977
    %3709 = vmatprep.subr.mxu0 %v970
    %3710 = vmatpush2.msra.mxu0 %v969
    %3711 = vmatprep.subr.mxu0 %v962
    %3712 = vmatpush2.msra.mxu0 %v961
    %3713 = vmatprep.subr.mxu0 %v954
    %3714 = vmatpush2.msra.mxu0 %v953
    %3715 = vmatprep.subr.mxu0 %v946
    %3716 = vmatpush2.msra.mxu0 %v945
    %3717 = vmatprep.subr.mxu0 %v938
    %3718 = vmatpush2.msra.mxu0 %v937
    %3719 = vmatprep.subr.mxu0 %v930
    %3720 = vmatpush2.msra.mxu0 %v929
    %3721 = vmatprep.subr.mxu0 %v922
    %3722 = vmatpush2.msra.mxu0 %v921
    %3723 = vmatprep.mubr.f32.mxu0 %v3516
    %3724 = vmatmul.mubr.f32.gmra.mxu0 %v3492
    %v3725 = vpop.f32.mrf.mxu0
    %v3726 = vadd.f32 0.0, %v3725
    %v3727 = vpop.f32.mrf.mxu0
    %v3728 = vadd.f32 0.0, %v3727
    %3729 = vdwg.mxu0
    %3730 = vmatprep.subr.mxu0 %v916
    %3731 = vmatpush1.msra.mxu0 %v915
    %3732 = vmatprep.subr.mxu0 %v908
    %3733 = vmatpush1.msra.mxu0 %v907
    %3734 = vmatprep.subr.mxu0 %v900
    %3735 = vmatpush1.msra.mxu0 %v899
    %3736 = vmatprep.subr.mxu0 %v892
    %3737 = vmatpush1.msra.mxu0 %v891
    %3738 = vmatprep.subr.mxu0 %v884
    %3739 = vmatpush1.msra.mxu0 %v883
    %3740 = vmatprep.subr.mxu0 %v876
    %3741 = vmatpush1.msra.mxu0 %v875
    %3742 = vmatprep.subr.mxu0 %v868
    %3743 = vmatpush1.msra.mxu0 %v867
    %3744 = vmatprep.subr.mxu0 %v860
    %3745 = vmatpush1.msra.mxu0 %v859
    %3746 = vmatprep.subr.mxu0 %v852
    %3747 = vmatpush1.msra.mxu0 %v851
    %3748 = vmatprep.subr.mxu0 %v844
    %3749 = vmatpush1.msra.mxu0 %v843
    %3750 = vmatprep.subr.mxu0 %v836
    %3751 = vmatpush1.msra.mxu0 %v835
    %3752 = vmatprep.subr.mxu0 %v828
    %3753 = vmatpush1.msra.mxu0 %v827
    %3754 = vmatprep.subr.mxu0 %v820
    %3755 = vmatpush1.msra.mxu0 %v819
    %3756 = vmatprep.subr.mxu0 %v812
    %3757 = vmatpush1.msra.mxu0 %v811
    %3758 = vmatprep.subr.mxu0 %v804
    %3759 = vmatpush1.msra.mxu0 %v803
    %3760 = vmatprep.subr.mxu0 %v796
    %3761 = vmatpush1.msra.mxu0 %v795
    %3762 = vmatprep.subr.mxu0 %v1044
    %3763 = vmatpush2.msra.mxu0 %v1043
    %3764 = vmatprep.subr.mxu0 %v1036
    %3765 = vmatpush2.msra.mxu0 %v1035
    %3766 = vmatprep.subr.mxu0 %v1028
    %3767 = vmatpush2.msra.mxu0 %v1027
    %3768 = vmatprep.subr.mxu0 %v1020
    %3769 = vmatpush2.msra.mxu0 %v1019
    %3770 = vmatprep.subr.mxu0 %v1012
    %3771 = vmatpush2.msra.mxu0 %v1011
    %3772 = vmatprep.subr.mxu0 %v1004
    %3773 = vmatpush2.msra.mxu0 %v1003
    %3774 = vmatprep.subr.mxu0 %v996
    %3775 = vmatpush2.msra.mxu0 %v995
    %3776 = vmatprep.subr.mxu0 %v988
    %3777 = vmatpush2.msra.mxu0 %v987
    %3778 = vmatprep.subr.mxu0 %v980
    %3779 = vmatpush2.msra.mxu0 %v979
    %3780 = vmatprep.subr.mxu0 %v972
    %3781 = vmatpush2.msra.mxu0 %v971
    %3782 = vmatprep.subr.mxu0 %v964
    %3783 = vmatpush2.msra.mxu0 %v963
    %3784 = vmatprep.subr.mxu0 %v956
    %3785 = vmatpush2.msra.mxu0 %v955
    %3786 = vmatprep.subr.mxu0 %v948
    %3787 = vmatpush2.msra.mxu0 %v947
    %3788 = vmatprep.subr.mxu0 %v940
    %3789 = vmatpush2.msra.mxu0 %v939
    %3790 = vmatprep.subr.mxu0 %v932
    %3791 = vmatpush2.msra.mxu0 %v931
    %3792 = vmatprep.subr.mxu0 %v924
    %3793 = vmatpush2.msra.mxu0 %v923
    %3794 = vmatprep.mubr.f32.mxu0 %v3516
    %3795 = vmatmul.mubr.f32.gmra.mxu0 %v3492
    %v3796 = vpop.f32.mrf.mxu0
    %v3797 = vadd.f32 0.0, %v3796
    %v3798 = vpop.f32.mrf.mxu0
    %v3799 = vadd.f32 0.0, %v3798
    %3800 = vdwg.mxu0
    %s3801 = smul.addr %s1340, 8
    %s3802 = scalar_lea.vmem [#allocation4], %s3801
    %v3803 = vld [vmem:[%s3802] sm:$0xff]
    %v3804 = vld [vmem:[%s3802 + $0x8] sm:$0xff]
    %v3805 = vld [vmem:[%s3802 + $0x10] sm:$0xff]
    %v3806 = vld [vmem:[%s3802 + $0x18] sm:$0xff]
    %v3807 = vadd.f32 %v3584, %v3803
    %v3808 = vadd.f32 %v3586, %v3804
    %v3809 = vadd.f32 %v3655, %v3805
    %v3810 = vadd.f32 %v3657, %v3806
    %s3811 = smul.addr %s1329, 8
    %s3812 = scalar_lea.vmem [#allocation5], %s3811
    %v3813 = vld [vmem:[%s3812] sm:$0xff]
    %v3814 = vld [vmem:[%s3812 + $0x8] sm:$0xff]
    %v3815 = vld [vmem:[%s3812 + $0x10] sm:$0xff]
    %v3816 = vld [vmem:[%s3812 + $0x18] sm:$0xff]
    %v3817 = vadd.f32 %v3726, %v3813
    %v3818 = vadd.f32 %v3728, %v3814
    %v3819 = vadd.f32 %v3797, %v3815
    %v3820 = vadd.f32 %v3799, %v3816
    %v3821 = vxor.u32 %v3807, 2147483648
    %v3822 = vmul.f32 %v3821, 1.442695
    %v3823 = vpow.pop %v3822
    %v3824 = vadd.f32 %v3823, 1.0
    %v3825 = vrcp.pop %v3824
    %v3826 = vmul.f32 1.0, %v3825
    %v3827 = vxor.u32 %v3808, 2147483648
    %v3828 = vmul.f32 %v3827, 1.442695
    %v3829 = vpow.pop %v3828
    %v3830 = vadd.f32 %v3829, 1.0
    %v3831 = vrcp.pop %v3830
    %v3832 = vmul.f32 1.0, %v3831
    %v3833 = vtanh.pop %v3809
    %v3834 = vxor.u32 %v3810, 2147483648
    %v3835 = vmul.f32 %v3834, 1.442695
    %v3836 = vpow.pop %v3835
    %v3837 = vadd.f32 %v3836, 1.0
    %v3838 = vrcp.pop %v3837
    %v3839 = vmul.f32 1.0, %v3838
    %v3840 = vmul.f32 %v3832, %v3490
    %v3841 = vmul.f32 %v3826, %v3833
    %v3842 = vadd.f32 %v3840, %v3841
    %v3843 = vtanh.pop %v3842
    %v3844 = vmul.f32 %v3839, %v3843
    %v3845 = vxor.u32 %v3817, 2147483648
    %v3846 = vmul.f32 %v3845, 1.442695
    %v3847 = vpow.pop %v3846
    %v3848 = vadd.f32 %v3847, 1.0
    %v3849 = vrcp.pop %v3848
    %v3850 = vmul.f32 1.0, %v3849
    %v3851 = vxor.u32 %v3818, 2147483648
    %v3852 = vmul.f32 %v3851, 1.442695
    %v3853 = vpow.pop %v3852
    %v3854 = vadd.f32 %v3853, 1.0
    %v3855 = vrcp.pop %v3854
    %v3856 = vmul.f32 1.0, %v3855
    %v3857 = vtanh.pop %v3819
    %v3858 = vxor.u32 %v3820, 2147483648
    %v3859 = vmul.f32 %v3858, 1.442695
    %v3860 = vpow.pop %v3859
    %v3861 = vadd.f32 %v3860, 1.0
    %v3862 = vrcp.pop %v3861
    %v3863 = vmul.f32 1.0, %v3862
    %v3864 = vmul.f32 %v3856, %v3514
    %v3865 = vmul.f32 %v3850, %v3857
    %v3866 = vadd.f32 %v3864, %v3865
    %v3867 = vtanh.pop %v3866
    %v3868 = vmul.f32 %v3863, %v3867
    %3869 = vst [vmem:[#allocation2] sm:$0xff] %v3844
    %3870 = vst [vmem:[#allocation2 + $0x8] sm:$0xff] %v3868
    %3871 = vst [vmem:[#allocation3] sm:$0xff] %v3842
    %3872 = vst [vmem:[#allocation3 + $0x8] sm:$0xff] %v3866
    // Predicated region
    $region38: #{lstm_model_forward.2} parent=1 // pred_check
      %p3873 = pneg %p73
    $region39: #{lstm_model_forward.2} parent=1 // pred_check_branch
      %3875 = sbr.rel (%p3873) target = $region41
    $region40: #{lstm_model_forward.2} parent=1 // pred_region
      %3876 = vst [vmem:[%s6] sm:$0xff] %v3844
      %3877 = vst [vmem:[%s6 + $0x8] sm:$0xff] %v3868
    $region41: #{lstm_model_forward.2} parent=1 // pred_fallthru
      _
    // Predicated region
    $region42: #{lstm_model_forward.2} parent=1 // pred_check
      _
    $region43: #{lstm_model_forward.2} parent=1 // pred_check_branch
      %3879 = sbr.rel (0) target = $region45
    $region44: #{lstm_model_forward.2} parent=1 // pred_region
      _
    $region45: #{lstm_model_forward.2} parent=1 // pred_fallthru
      _
    // Predicated region
    $region46: #{lstm_model_forward.2} parent=1 // pred_check
      _
    $region47: #{lstm_model_forward.2} parent=1 // pred_check_branch
      %3881 = sbr.rel (0) target = $region49
    $region48: #{lstm_model_forward.2} parent=1 // pred_region
      _
    $region49: #{lstm_model_forward.2} parent=1 // pred_fallthru
      _
    %3882 = vsyncpa [#allocation7], 1
    %3883 = vsyncpa [#allocation9], 1

</llo_original>
